<compile_context>
chip_gen: v7x
topology: tpu7x:2x2x1
jax: 0.10.0
libtpu: 0.0.40
codegen_flags: <defaults>
</compile_context>

<pallas_src>
import jax
import jax.numpy as jnp
from jax.experimental import pallas as pl
from jax.experimental.pallas import tpu as pltpu

_DROPOUT_P = 0.2
_KEEP_SCALE = 1.0 / (1.0 - _DROPOUT_P)
_BN_EPS = 1e-5


# ------------------------------ fused kernel ------------------------------- #

def _classifier_kernel(eps_ref, adj_ref, x_ref, mask_ref,
                       w1_ref, w2_ref, bn_ref, o_ref):
    num_layers = w1_ref.shape[0]          # static (7)
    n = adj_ref.shape[1]                  # nodes per graph
    f_pad = x_ref.shape[2]                # padded feature width

    adj = adj_ref[0]                      # (N, N) f32, resident across layers
    h = x_ref[0]                          # (N, F_pad) f32 activation
    masks = mask_ref[0]                   # (L, N, F_pad) dropout multipliers

    # identity built once: lets us fold (1+eps) into the aggregation matmul
    row = jax.lax.broadcasted_iota(jnp.int32, (n, n), 0)
    col = jax.lax.broadcasted_iota(jnp.int32, (n, n), 1)
    eye = (row == col).astype(jnp.float32)

    for i in range(num_layers):           # static Python unroll (7 iterations)
        bn_i = bn_ref[i]                  # (4, hidden): rows [g1, b1, g2, b2]

        # --- GINConv: h = (adj + (1+eps)*I) @ h   (one MXU op, f32 accumulate)
        a = (adj + (eps_ref[i] + 1.0) * eye).astype(jnp.bfloat16)
        h = jnp.dot(a, h.astype(jnp.bfloat16),
                    preferred_element_type=jnp.float32)

        # --- Linear(in, hidden, bias=False)
        h = jnp.dot(h.astype(jnp.bfloat16), w1_ref[i],
                    preferred_element_type=jnp.float32)

        # --- BatchNorm1d(hidden), training batch stats, single pass + folded
        #     affine, then ReLU
        m = jnp.mean(h, axis=0, keepdims=True)
        ms = jnp.mean(h * h, axis=0, keepdims=True)
        v = jnp.maximum(ms - m * m, 0.0)
        scale = bn_i[0:1, :] * jax.lax.rsqrt(v + _BN_EPS)
        shift = bn_i[1:2, :] - m * scale
        h = jnp.maximum(h * scale + shift, 0.0)

        # --- Linear(hidden, out, bias=False)
        h = jnp.dot(h.astype(jnp.bfloat16), w2_ref[i],
                    preferred_element_type=jnp.float32)

        # --- trailing BatchNorm1d (absent on the last GIN layer's MLP)
        if i < num_layers - 1:
            m = jnp.mean(h, axis=0, keepdims=True)
            ms = jnp.mean(h * h, axis=0, keepdims=True)
            v = jnp.maximum(ms - m * m, 0.0)
            scale = bn_i[2:3, :f_pad] * jax.lax.rsqrt(v + _BN_EPS)
            shift = bn_i[3:4, :f_pad] - m * scale
            h = h * scale + shift

        # --- F.dropout(p=0.2, training=True) fused with gnn_non_linear (ReLU)
        h = jnp.maximum(h * masks[i], 0.0)

    # --- global_mean_pool(x, batch=None): mean over nodes -> (1, F_pad)
    pooled = jnp.mean(h, axis=0, keepdims=True)
    # write a sublane-aligned (8, F_pad) tile; wrapper reads row 0
    o_ref[0] = jnp.broadcast_to(pooled, (8, f_pad))


# ------------------------------ host wrapper ------------------------------- #

def fused_classifier(eps, adj, x_pad, masks, w1, w2, bn):
    B, N, f_pad = x_pad.shape
    L, _, hid = w1.shape
    return pl.pallas_call(
        _classifier_kernel,
        out_shape=jax.ShapeDtypeStruct((B, 8, f_pad), jnp.float32),
        grid=(B,),
        in_specs=[
            pl.BlockSpec(memory_space=pltpu.MemorySpace.SMEM),        # eps (L,)
            pl.BlockSpec((1, N, N), lambda b: (b, 0, 0)),             # adj
            pl.BlockSpec((1, N, f_pad), lambda b: (b, 0, 0)),         # x (padded)
            pl.BlockSpec((1, L, N, f_pad), lambda b: (b, 0, 0, 0)),   # dropout
            pl.BlockSpec((L, f_pad, hid), lambda b: (0, 0, 0)),       # W1 (bf16)
            pl.BlockSpec((L, hid, f_pad), lambda b: (0, 0, 0)),       # W2 (bf16)
            pl.BlockSpec((L, 4, hid), lambda b: (0, 0, 0)),           # BN params
        ],
        out_specs=pl.BlockSpec((1, 8, f_pad), lambda b: (b, 0, 0)),
        compiler_params=pltpu.CompilerParams(
            dimension_semantics=("parallel",)),
    )(eps, adj, x_pad, masks, w1, w2, bn)


# ----------------------------- parameter init ------------------------------ #

def init_params(key, input_dim, hidden_dim, num_layers=7, num_classes=2):
    """Pack all GIN layers into stacked, zero-padded arrays (exact padding)."""
    half = hidden_dim // 2
    f_pad = max(input_dim, half, num_classes)   # common padded feature width

    in_dims = [input_dim] + [half] * (num_layers - 1)
    out_dims = [half] * (num_layers - 1) + [num_classes]

    w1 = jnp.zeros((num_layers, f_pad, hidden_dim), jnp.float32)
    w2 = jnp.zeros((num_layers, hidden_dim, f_pad), jnp.float32)
    for i in range(num_layers):
        key, k1, k2 = jax.random.split(key, 3)
        w1_i = (jax.random.normal(k1, (in_dims[i], hidden_dim), jnp.float32)
                / jnp.sqrt(jnp.float32(in_dims[i])))
        w2_i = (jax.random.normal(k2, (hidden_dim, out_dims[i]), jnp.float32)
                / jnp.sqrt(jnp.float32(hidden_dim)))
        w1 = w1.at[i, :in_dims[i], :].set(w1_i)
        w2 = w2.at[i, :, :out_dims[i]].set(w2_i)

    # packed BN params: rows [g1, b1, g2, b2]; unused/padded lanes stay zero
    bn = jnp.zeros((num_layers, 4, hidden_dim), jnp.float32)
    bn = bn.at[:, 0, :].set(1.0)           # gamma of BatchNorm1d(hidden)
    bn = bn.at[:, 2, :half].set(1.0)       # gamma of BatchNorm1d(hidden//2)

    return dict(
        w1=w1.astype(jnp.bfloat16), w2=w2.astype(jnp.bfloat16), bn=bn,
        eps=jnp.zeros((num_layers,), jnp.float32),   # GINConv(train_eps=True)
        f_pad=f_pad, num_classes=num_classes, num_layers=num_layers,
    )


# -------------------------------- forward ----------------------------------- #

def classifier_forward(x, edge_index, params, dropout_key, num_nodes):
    """x: (B, N, Fin); edge_index: (B, 2, E) (PyG row0=src, row1=dst)."""
    B = x.shape[0]
    f_pad, L = params["f_pad"], params["num_layers"]

    # dense adjacency: adj[i, j] = #edges j -> i, so (adj @ x)[i] = sum_{j->i} x_j
    def build_adj(ei):
        src, dst = ei[0], ei[1]
        return jnp.zeros((num_nodes, num_nodes), jnp.float32).at[dst, src].add(1.0)
    adj = jax.vmap(build_adj)(edge_index)                         # (B, N, N)

    # zero-pad input features to the common packed width (exact)
    x_pad = jnp.zeros((B, num_nodes, f_pad), jnp.float32).at[:, :, :x.shape[2]].set(x)

    # host-precomputed dropout keep/scale multipliers (0 or 1/(1-p))
    keep = jax.random.bernoulli(dropout_key, 1.0 - _DROPOUT_P,
                                (B, L, num_nodes, f_pad))
    masks = keep.astype(jnp.float32) * jnp.float32(_KEEP_SCALE)

    out = fused_classifier(params["eps"], adj, x_pad, masks,
                           params["w1"], params["w2"], params["bn"])
    return out[:, 0, :params["num_classes"]]                      # (B, 2)


# ---------------------------------- main ------------------------------------ #

if __name__ == "__main__":
    key = jax.random.PRNGKey(0)
    key, kx, kp, kd = jax.random.split(key, 4)

    batch_graphs, num_nodes, input_dim, hidden_dim = 2, 16, 8, 32
    params = init_params(kp, input_dim, hidden_dim)

    x = jax.random.normal(kx, (batch_graphs, num_nodes, input_dim), jnp.float32)

    # deterministic bidirectional ring graph (32 directed edges), shared structure
    nodes = jnp.arange(num_nodes, dtype=jnp.int32)
    src = jnp.concatenate([nodes, (nodes + 1) % num_nodes])
    dst = jnp.concatenate([(nodes + 1) % num_nodes, nodes])
    edge_index = jnp.broadcast_to(jnp.stack([src, dst])[None],
                                  (batch_graphs, 2, src.shape[0]))

    out = classifier_forward(x, edge_index, params, kd, num_nodes)
    out = jax.block_until_ready(out)
    assert out.shape == (batch_graphs, params["num_classes"])
    assert out.dtype == jnp.float32
    assert bool(jnp.all(jnp.isfinite(out)))
    print("KERNEL_OK")
</pallas_src>

<mosaic_0001>
module attributes {stable_mosaic.version = 11 : i64} {
  func.func @_classifier_kernel(%arg0: i32, %arg1: memref<7xf32, #tpu.memory_space<smem>>, %arg2: memref<1x16x16xf32, #tpu.memory_space<vmem>>, %arg3: memref<1x16x16xf32, #tpu.memory_space<vmem>>, %arg4: memref<1x7x16x16xf32, #tpu.memory_space<vmem>>, %arg5: memref<7x16x32xbf16, #tpu.memory_space<vmem>>, %arg6: memref<7x32x16xbf16, #tpu.memory_space<vmem>>, %arg7: memref<7x4x32xf32, #tpu.memory_space<vmem>>, %arg8: memref<1x8x16xf32, #tpu.memory_space<vmem>>) attributes {dimension_semantics = [#tpu.dimension_semantics<parallel>], iteration_bounds = array<i64: 2>, scalar_prefetch = 0 : i64, scratch_operands = 0 : i64, tpu.core_type = #tpu.core_type<tc>, window_params = [{transform_indices = @transform_0, window_bounds = array<i64: 7>}, {transform_indices = @transform_1, window_bounds = array<i64: 1, 16, 16>}, {transform_indices = @transform_2, window_bounds = array<i64: 1, 16, 16>}, {transform_indices = @transform_3, window_bounds = array<i64: 1, 7, 16, 16>}, {pipeline_mode = #tpu.pipeline_mode<synchronous>, transform_indices = @transform_4, window_bounds = array<i64: 7, 16, 32>}, {pipeline_mode = #tpu.pipeline_mode<synchronous>, transform_indices = @transform_5, window_bounds = array<i64: 7, 32, 16>}, {pipeline_mode = #tpu.pipeline_mode<synchronous>, transform_indices = @transform_6, window_bounds = array<i64: 7, 4, 32>}, {transform_indices = @transform_7, window_bounds = array<i64: 1, 8, 16>}]} {
    %c0 = arith.constant 0 : index
    %c0_0 = arith.constant 0 : index
    %c0_1 = arith.constant 0 : index
    %0 = vector.load %arg2[%c0, %c0_0, %c0_1] : memref<1x16x16xf32, #tpu.memory_space<vmem>>, vector<1x16x16xf32>
    %1 = vector.shape_cast %0 : vector<1x16x16xf32> to vector<16x16xf32>
    %c0_2 = arith.constant 0 : index
    %c0_3 = arith.constant 0 : index
    %c0_4 = arith.constant 0 : index
    %2 = vector.load %arg3[%c0_2, %c0_3, %c0_4] : memref<1x16x16xf32, #tpu.memory_space<vmem>>, vector<1x16x16xf32>
    %3 = vector.shape_cast %2 : vector<1x16x16xf32> to vector<16x16xf32>
    %c0_5 = arith.constant 0 : index
    %c0_6 = arith.constant 0 : index
    %c0_7 = arith.constant 0 : index
    %c0_8 = arith.constant 0 : index
    %4 = vector.load %arg4[%c0_5, %c0_6, %c0_7, %c0_8] : memref<1x7x16x16xf32, #tpu.memory_space<vmem>>, vector<1x7x16x16xf32>
    %5 = vector.shape_cast %4 : vector<1x7x16x16xf32> to vector<7x16x16xf32>
    %6 = tpu.iota {dimensions = array<i32: 0>} : vector<16x16xi32>
    %7 = tpu.iota {dimensions = array<i32: 1>} : vector<16x16xi32>
    %8 = arith.cmpi eq, %6, %7 : vector<16x16xi32>
    %9 = arith.extui %8 : vector<16x16xi1> to vector<16x16xi32>
    %10 = arith.sitofp %9 : vector<16x16xi32> to vector<16x16xf32>
    %c0_9 = arith.constant 0 : index
    %c0_10 = arith.constant 0 : index
    %c0_11 = arith.constant 0 : index
    %11 = vector.load %arg7[%c0_9, %c0_10, %c0_11] : memref<7x4x32xf32, #tpu.memory_space<vmem>>, vector<1x4x32xf32>
    %12 = vector.shape_cast %11 : vector<1x4x32xf32> to vector<4x32xf32>
    %c0_12 = arith.constant 0 : index
    %13 = memref.load %arg1[%c0_12] : memref<7xf32, #tpu.memory_space<smem>>
    %cst = arith.constant 1.000000e+00 : f32
    %14 = arith.addf %13, %cst : f32
    %15 = vector.broadcast %14 : f32 to vector<16x16xf32>
    %16 = arith.mulf %15, %10 : vector<16x16xf32>
    %17 = arith.addf %1, %16 : vector<16x16xf32>
    %18 = arith.truncf %17 : vector<16x16xf32> to vector<16x16xbf16>
    %19 = arith.truncf %3 : vector<16x16xf32> to vector<16x16xbf16>
    %cst_13 = arith.constant dense<0.000000e+00> : vector<16x16xf32>
    %20 = tpu.matmul %18, %19, %cst_13 {dimension_numbers = #tpu.dot_dimension_numbers<[1], [0], [0], [1], [0, 0, 1, 1], [], []>} : vector<16x16xbf16>, vector<16x16xbf16>, vector<16x16xf32> -> vector<16x16xf32>
    %21 = arith.truncf %20 : vector<16x16xf32> to vector<16x16xbf16>
    %c0_14 = arith.constant 0 : index
    %c0_15 = arith.constant 0 : index
    %c0_16 = arith.constant 0 : index
    %22 = vector.load %arg5[%c0_14, %c0_15, %c0_16] : memref<7x16x32xbf16, #tpu.memory_space<vmem>>, vector<1x16x32xbf16>
    %23 = vector.shape_cast %22 : vector<1x16x32xbf16> to vector<16x32xbf16>
    %cst_17 = arith.constant dense<0.000000e+00> : vector<16x32xf32>
    %24 = tpu.matmul %21, %23, %cst_17 {dimension_numbers = #tpu.dot_dimension_numbers<[1], [0], [0], [1], [0, 0, 1, 1], [], []>} : vector<16x16xbf16>, vector<16x32xbf16>, vector<16x32xf32> -> vector<16x32xf32>
    %cst_18 = arith.constant dense<0.000000e+00> : vector<32xf32>
    %25 = vector.multi_reduction <add>, %24, %cst_18 [0] : vector<16x32xf32> to vector<32xf32>
    %26 = vector.shape_cast %25 : vector<32xf32> to vector<1x32xf32>
    %cst_19 = arith.constant 1.600000e+01 : f32
    %27 = vector.broadcast %cst_19 : f32 to vector<1x32xf32>
    %28 = arith.divf %26, %27 : vector<1x32xf32>
    %29 = arith.mulf %24, %24 : vector<16x32xf32>
    %cst_20 = arith.constant dense<0.000000e+00> : vector<32xf32>
    %30 = vector.multi_reduction <add>, %29, %cst_20 [0] : vector<16x32xf32> to vector<32xf32>
    %31 = vector.shape_cast %30 : vector<32xf32> to vector<1x32xf32>
    %cst_21 = arith.constant 1.600000e+01 : f32
    %32 = vector.broadcast %cst_21 : f32 to vector<1x32xf32>
    %33 = arith.divf %31, %32 : vector<1x32xf32>
    %34 = arith.mulf %28, %28 : vector<1x32xf32>
    %35 = arith.subf %33, %34 : vector<1x32xf32>
    %cst_22 = arith.constant 0.000000e+00 : f32
    %36 = vector.broadcast %cst_22 : f32 to vector<1x32xf32>
    %37 = arith.maximumf %35, %36 : vector<1x32xf32>
    %38 = vector.extract_strided_slice %12 {offsets = [0, 0], sizes = [1, 32], strides = [1, 1]} : vector<4x32xf32> to vector<1x32xf32>
    %cst_23 = arith.constant 9.99999974E-6 : f32
    %39 = vector.broadcast %cst_23 : f32 to vector<1x32xf32>
    %40 = arith.addf %37, %39 : vector<1x32xf32>
    %41 = math.rsqrt %40 : vector<1x32xf32>
    %42 = arith.mulf %38, %41 : vector<1x32xf32>
    %43 = vector.extract_strided_slice %12 {offsets = [1, 0], sizes = [1, 32], strides = [1, 1]} : vector<4x32xf32> to vector<1x32xf32>
    %44 = arith.mulf %28, %42 : vector<1x32xf32>
    %45 = arith.subf %43, %44 : vector<1x32xf32>
    %46 = vector.broadcast %42 : vector<1x32xf32> to vector<16x32xf32>
    %47 = arith.mulf %24, %46 : vector<16x32xf32>
    %48 = vector.broadcast %45 : vector<1x32xf32> to vector<16x32xf32>
    %49 = arith.addf %47, %48 : vector<16x32xf32>
    %cst_24 = arith.constant 0.000000e+00 : f32
    %50 = vector.broadcast %cst_24 : f32 to vector<16x32xf32>
    %51 = arith.maximumf %49, %50 : vector<16x32xf32>
    %52 = arith.truncf %51 : vector<16x32xf32> to vector<16x32xbf16>
    %c0_25 = arith.constant 0 : index
    %c0_26 = arith.constant 0 : index
    %c0_27 = arith.constant 0 : index
    %53 = vector.load %arg6[%c0_25, %c0_26, %c0_27] : memref<7x32x16xbf16, #tpu.memory_space<vmem>>, vector<1x32x16xbf16>
    %54 = vector.shape_cast %53 : vector<1x32x16xbf16> to vector<32x16xbf16>
    %cst_28 = arith.constant dense<0.000000e+00> : vector<16x16xf32>
    %55 = tpu.matmul %52, %54, %cst_28 {dimension_numbers = #tpu.dot_dimension_numbers<[1], [0], [0], [1], [0, 0, 1, 1], [], []>} : vector<16x32xbf16>, vector<32x16xbf16>, vector<16x16xf32> -> vector<16x16xf32>
    %cst_29 = arith.constant dense<0.000000e+00> : vector<16xf32>
    %56 = vector.multi_reduction <add>, %55, %cst_29 [0] : vector<16x16xf32> to vector<16xf32>
    %57 = vector.shape_cast %56 : vector<16xf32> to vector<1x16xf32>
    %cst_30 = arith.constant 1.600000e+01 : f32
    %58 = vector.broadcast %cst_30 : f32 to vector<1x16xf32>
    %59 = arith.divf %57, %58 : vector<1x16xf32>
    %60 = arith.mulf %55, %55 : vector<16x16xf32>
    %cst_31 = arith.constant dense<0.000000e+00> : vector<16xf32>
    %61 = vector.multi_reduction <add>, %60, %cst_31 [0] : vector<16x16xf32> to vector<16xf32>
    %62 = vector.shape_cast %61 : vector<16xf32> to vector<1x16xf32>
    %cst_32 = arith.constant 1.600000e+01 : f32
    %63 = vector.broadcast %cst_32 : f32 to vector<1x16xf32>
    %64 = arith.divf %62, %63 : vector<1x16xf32>
    %65 = arith.mulf %59, %59 : vector<1x16xf32>
    %66 = arith.subf %64, %65 : vector<1x16xf32>
    %cst_33 = arith.constant 0.000000e+00 : f32
    %67 = vector.broadcast %cst_33 : f32 to vector<1x16xf32>
    %68 = arith.maximumf %66, %67 : vector<1x16xf32>
    %69 = vector.extract_strided_slice %12 {offsets = [2, 0], sizes = [1, 16], strides = [1, 1]} : vector<4x32xf32> to vector<1x16xf32>
    %cst_34 = arith.constant 9.99999974E-6 : f32
    %70 = vector.broadcast %cst_34 : f32 to vector<1x16xf32>
    %71 = arith.addf %68, %70 : vector<1x16xf32>
    %72 = math.rsqrt %71 : vector<1x16xf32>
    %73 = arith.mulf %69, %72 : vector<1x16xf32>
    %74 = vector.extract_strided_slice %12 {offsets = [3, 0], sizes = [1, 16], strides = [1, 1]} : vector<4x32xf32> to vector<1x16xf32>
    %75 = arith.mulf %59, %73 : vector<1x16xf32>
    %76 = arith.subf %74, %75 : vector<1x16xf32>
    %77 = vector.broadcast %73 : vector<1x16xf32> to vector<16x16xf32>
    %78 = arith.mulf %55, %77 : vector<16x16xf32>
    %79 = vector.broadcast %76 : vector<1x16xf32> to vector<16x16xf32>
    %80 = arith.addf %78, %79 : vector<16x16xf32>
    %81 = vector.extract_strided_slice %5 {offsets = [0, 0, 0], sizes = [1, 16, 16], strides = [1, 1, 1]} : vector<7x16x16xf32> to vector<1x16x16xf32>
    %82 = vector.shape_cast %81 : vector<1x16x16xf32> to vector<16x16xf32>
    %83 = arith.mulf %80, %82 : vector<16x16xf32>
    %cst_35 = arith.constant 0.000000e+00 : f32
    %84 = vector.broadcast %cst_35 : f32 to vector<16x16xf32>
    %85 = arith.maximumf %83, %84 : vector<16x16xf32>
    %c1 = arith.constant 1 : index
    %c0_36 = arith.constant 0 : index
    %c0_37 = arith.constant 0 : index
    %86 = vector.load %arg7[%c1, %c0_36, %c0_37] : memref<7x4x32xf32, #tpu.memory_space<vmem>>, vector<1x4x32xf32>
    %87 = vector.shape_cast %86 : vector<1x4x32xf32> to vector<4x32xf32>
    %c1_38 = arith.constant 1 : index
    %88 = memref.load %arg1[%c1_38] : memref<7xf32, #tpu.memory_space<smem>>
    %cst_39 = arith.constant 1.000000e+00 : f32
    %89 = arith.addf %88, %cst_39 : f32
    %90 = vector.broadcast %89 : f32 to vector<16x16xf32>
    %91 = arith.mulf %90, %10 : vector<16x16xf32>
    %92 = arith.addf %1, %91 : vector<16x16xf32>
    %93 = arith.truncf %92 : vector<16x16xf32> to vector<16x16xbf16>
    %94 = arith.truncf %85 : vector<16x16xf32> to vector<16x16xbf16>
    %cst_40 = arith.constant dense<0.000000e+00> : vector<16x16xf32>
    %95 = tpu.matmul %93, %94, %cst_40 {dimension_numbers = #tpu.dot_dimension_numbers<[1], [0], [0], [1], [0, 0, 1, 1], [], []>} : vector<16x16xbf16>, vector<16x16xbf16>, vector<16x16xf32> -> vector<16x16xf32>
    %96 = arith.truncf %95 : vector<16x16xf32> to vector<16x16xbf16>
    %c1_41 = arith.constant 1 : index
    %c0_42 = arith.constant 0 : index
    %c0_43 = arith.constant 0 : index
    %97 = vector.load %arg5[%c1_41, %c0_42, %c0_43] : memref<7x16x32xbf16, #tpu.memory_space<vmem>>, vector<1x16x32xbf16>
    %98 = vector.shape_cast %97 : vector<1x16x32xbf16> to vector<16x32xbf16>
    %cst_44 = arith.constant dense<0.000000e+00> : vector<16x32xf32>
    %99 = tpu.matmul %96, %98, %cst_44 {dimension_numbers = #tpu.dot_dimension_numbers<[1], [0], [0], [1], [0, 0, 1, 1], [], []>} : vector<16x16xbf16>, vector<16x32xbf16>, vector<16x32xf32> -> vector<16x32xf32>
    %cst_45 = arith.constant dense<0.000000e+00> : vector<32xf32>
    %100 = vector.multi_reduction <add>, %99, %cst_45 [0] : vector<16x32xf32> to vector<32xf32>
    %101 = vector.shape_cast %100 : vector<32xf32> to vector<1x32xf32>
    %cst_46 = arith.constant 1.600000e+01 : f32
    %102 = vector.broadcast %cst_46 : f32 to vector<1x32xf32>
    %103 = arith.divf %101, %102 : vector<1x32xf32>
    %104 = arith.mulf %99, %99 : vector<16x32xf32>
    %cst_47 = arith.constant dense<0.000000e+00> : vector<32xf32>
    %105 = vector.multi_reduction <add>, %104, %cst_47 [0] : vector<16x32xf32> to vector<32xf32>
    %106 = vector.shape_cast %105 : vector<32xf32> to vector<1x32xf32>
    %cst_48 = arith.constant 1.600000e+01 : f32
    %107 = vector.broadcast %cst_48 : f32 to vector<1x32xf32>
    %108 = arith.divf %106, %107 : vector<1x32xf32>
    %109 = arith.mulf %103, %103 : vector<1x32xf32>
    %110 = arith.subf %108, %109 : vector<1x32xf32>
    %cst_49 = arith.constant 0.000000e+00 : f32
    %111 = vector.broadcast %cst_49 : f32 to vector<1x32xf32>
    %112 = arith.maximumf %110, %111 : vector<1x32xf32>
    %113 = vector.extract_strided_slice %87 {offsets = [0, 0], sizes = [1, 32], strides = [1, 1]} : vector<4x32xf32> to vector<1x32xf32>
    %cst_50 = arith.constant 9.99999974E-6 : f32
    %114 = vector.broadcast %cst_50 : f32 to vector<1x32xf32>
    %115 = arith.addf %112, %114 : vector<1x32xf32>
    %116 = math.rsqrt %115 : vector<1x32xf32>
    %117 = arith.mulf %113, %116 : vector<1x32xf32>
    %118 = vector.extract_strided_slice %87 {offsets = [1, 0], sizes = [1, 32], strides = [1, 1]} : vector<4x32xf32> to vector<1x32xf32>
    %119 = arith.mulf %103, %117 : vector<1x32xf32>
    %120 = arith.subf %118, %119 : vector<1x32xf32>
    %121 = vector.broadcast %117 : vector<1x32xf32> to vector<16x32xf32>
    %122 = arith.mulf %99, %121 : vector<16x32xf32>
    %123 = vector.broadcast %120 : vector<1x32xf32> to vector<16x32xf32>
    %124 = arith.addf %122, %123 : vector<16x32xf32>
    %cst_51 = arith.constant 0.000000e+00 : f32
    %125 = vector.broadcast %cst_51 : f32 to vector<16x32xf32>
    %126 = arith.maximumf %124, %125 : vector<16x32xf32>
    %127 = arith.truncf %126 : vector<16x32xf32> to vector<16x32xbf16>
    %c1_52 = arith.constant 1 : index
    %c0_53 = arith.constant 0 : index
    %c0_54 = arith.constant 0 : index
    %128 = vector.load %arg6[%c1_52, %c0_53, %c0_54] : memref<7x32x16xbf16, #tpu.memory_space<vmem>>, vector<1x32x16xbf16>
    %129 = vector.shape_cast %128 : vector<1x32x16xbf16> to vector<32x16xbf16>
    %cst_55 = arith.constant dense<0.000000e+00> : vector<16x16xf32>
    %130 = tpu.matmul %127, %129, %cst_55 {dimension_numbers = #tpu.dot_dimension_numbers<[1], [0], [0], [1], [0, 0, 1, 1], [], []>} : vector<16x32xbf16>, vector<32x16xbf16>, vector<16x16xf32> -> vector<16x16xf32>
    %cst_56 = arith.constant dense<0.000000e+00> : vector<16xf32>
    %131 = vector.multi_reduction <add>, %130, %cst_56 [0] : vector<16x16xf32> to vector<16xf32>
    %132 = vector.shape_cast %131 : vector<16xf32> to vector<1x16xf32>
    %cst_57 = arith.constant 1.600000e+01 : f32
    %133 = vector.broadcast %cst_57 : f32 to vector<1x16xf32>
    %134 = arith.divf %132, %133 : vector<1x16xf32>
    %135 = arith.mulf %130, %130 : vector<16x16xf32>
    %cst_58 = arith.constant dense<0.000000e+00> : vector<16xf32>
    %136 = vector.multi_reduction <add>, %135, %cst_58 [0] : vector<16x16xf32> to vector<16xf32>
    %137 = vector.shape_cast %136 : vector<16xf32> to vector<1x16xf32>
    %cst_59 = arith.constant 1.600000e+01 : f32
    %138 = vector.broadcast %cst_59 : f32 to vector<1x16xf32>
    %139 = arith.divf %137, %138 : vector<1x16xf32>
    %140 = arith.mulf %134, %134 : vector<1x16xf32>
    %141 = arith.subf %139, %140 : vector<1x16xf32>
    %cst_60 = arith.constant 0.000000e+00 : f32
    %142 = vector.broadcast %cst_60 : f32 to vector<1x16xf32>
    %143 = arith.maximumf %141, %142 : vector<1x16xf32>
    %144 = vector.extract_strided_slice %87 {offsets = [2, 0], sizes = [1, 16], strides = [1, 1]} : vector<4x32xf32> to vector<1x16xf32>
    %cst_61 = arith.constant 9.99999974E-6 : f32
    %145 = vector.broadcast %cst_61 : f32 to vector<1x16xf32>
    %146 = arith.addf %143, %145 : vector<1x16xf32>
    %147 = math.rsqrt %146 : vector<1x16xf32>
    %148 = arith.mulf %144, %147 : vector<1x16xf32>
    %149 = vector.extract_strided_slice %87 {offsets = [3, 0], sizes = [1, 16], strides = [1, 1]} : vector<4x32xf32> to vector<1x16xf32>
    %150 = arith.mulf %134, %148 : vector<1x16xf32>
    %151 = arith.subf %149, %150 : vector<1x16xf32>
    %152 = vector.broadcast %148 : vector<1x16xf32> to vector<16x16xf32>
    %153 = arith.mulf %130, %152 : vector<16x16xf32>
    %154 = vector.broadcast %151 : vector<1x16xf32> to vector<16x16xf32>
    %155 = arith.addf %153, %154 : vector<16x16xf32>
    %156 = vector.extract_strided_slice %5 {offsets = [1, 0, 0], sizes = [1, 16, 16], strides = [1, 1, 1]} : vector<7x16x16xf32> to vector<1x16x16xf32>
    %157 = vector.shape_cast %156 : vector<1x16x16xf32> to vector<16x16xf32>
    %158 = arith.mulf %155, %157 : vector<16x16xf32>
    %cst_62 = arith.constant 0.000000e+00 : f32
    %159 = vector.broadcast %cst_62 : f32 to vector<16x16xf32>
    %160 = arith.maximumf %158, %159 : vector<16x16xf32>
    %c2 = arith.constant 2 : index
    %c0_63 = arith.constant 0 : index
    %c0_64 = arith.constant 0 : index
    %161 = vector.load %arg7[%c2, %c0_63, %c0_64] : memref<7x4x32xf32, #tpu.memory_space<vmem>>, vector<1x4x32xf32>
    %162 = vector.shape_cast %161 : vector<1x4x32xf32> to vector<4x32xf32>
    %c2_65 = arith.constant 2 : index
    %163 = memref.load %arg1[%c2_65] : memref<7xf32, #tpu.memory_space<smem>>
    %cst_66 = arith.constant 1.000000e+00 : f32
    %164 = arith.addf %163, %cst_66 : f32
    %165 = vector.broadcast %164 : f32 to vector<16x16xf32>
    %166 = arith.mulf %165, %10 : vector<16x16xf32>
    %167 = arith.addf %1, %166 : vector<16x16xf32>
    %168 = arith.truncf %167 : vector<16x16xf32> to vector<16x16xbf16>
    %169 = arith.truncf %160 : vector<16x16xf32> to vector<16x16xbf16>
    %cst_67 = arith.constant dense<0.000000e+00> : vector<16x16xf32>
    %170 = tpu.matmul %168, %169, %cst_67 {dimension_numbers = #tpu.dot_dimension_numbers<[1], [0], [0], [1], [0, 0, 1, 1], [], []>} : vector<16x16xbf16>, vector<16x16xbf16>, vector<16x16xf32> -> vector<16x16xf32>
    %171 = arith.truncf %170 : vector<16x16xf32> to vector<16x16xbf16>
    %c2_68 = arith.constant 2 : index
    %c0_69 = arith.constant 0 : index
    %c0_70 = arith.constant 0 : index
    %172 = vector.load %arg5[%c2_68, %c0_69, %c0_70] : memref<7x16x32xbf16, #tpu.memory_space<vmem>>, vector<1x16x32xbf16>
    %173 = vector.shape_cast %172 : vector<1x16x32xbf16> to vector<16x32xbf16>
    %cst_71 = arith.constant dense<0.000000e+00> : vector<16x32xf32>
    %174 = tpu.matmul %171, %173, %cst_71 {dimension_numbers = #tpu.dot_dimension_numbers<[1], [0], [0], [1], [0, 0, 1, 1], [], []>} : vector<16x16xbf16>, vector<16x32xbf16>, vector<16x32xf32> -> vector<16x32xf32>
    %cst_72 = arith.constant dense<0.000000e+00> : vector<32xf32>
    %175 = vector.multi_reduction <add>, %174, %cst_72 [0] : vector<16x32xf32> to vector<32xf32>
    %176 = vector.shape_cast %175 : vector<32xf32> to vector<1x32xf32>
    %cst_73 = arith.constant 1.600000e+01 : f32
    %177 = vector.broadcast %cst_73 : f32 to vector<1x32xf32>
    %178 = arith.divf %176, %177 : vector<1x32xf32>
    %179 = arith.mulf %174, %174 : vector<16x32xf32>
    %cst_74 = arith.constant dense<0.000000e+00> : vector<32xf32>
    %180 = vector.multi_reduction <add>, %179, %cst_74 [0] : vector<16x32xf32> to vector<32xf32>
    %181 = vector.shape_cast %180 : vector<32xf32> to vector<1x32xf32>
    %cst_75 = arith.constant 1.600000e+01 : f32
    %182 = vector.broadcast %cst_75 : f32 to vector<1x32xf32>
    %183 = arith.divf %181, %182 : vector<1x32xf32>
    %184 = arith.mulf %178, %178 : vector<1x32xf32>
    %185 = arith.subf %183, %184 : vector<1x32xf32>
    %cst_76 = arith.constant 0.000000e+00 : f32
    %186 = vector.broadcast %cst_76 : f32 to vector<1x32xf32>
    %187 = arith.maximumf %185, %186 : vector<1x32xf32>
    %188 = vector.extract_strided_slice %162 {offsets = [0, 0], sizes = [1, 32], strides = [1, 1]} : vector<4x32xf32> to vector<1x32xf32>
    %cst_77 = arith.constant 9.99999974E-6 : f32
    %189 = vector.broadcast %cst_77 : f32 to vector<1x32xf32>
    %190 = arith.addf %187, %189 : vector<1x32xf32>
    %191 = math.rsqrt %190 : vector<1x32xf32>
    %192 = arith.mulf %188, %191 : vector<1x32xf32>
    %193 = vector.extract_strided_slice %162 {offsets = [1, 0], sizes = [1, 32], strides = [1, 1]} : vector<4x32xf32> to vector<1x32xf32>
    %194 = arith.mulf %178, %192 : vector<1x32xf32>
    %195 = arith.subf %193, %194 : vector<1x32xf32>
    %196 = vector.broadcast %192 : vector<1x32xf32> to vector<16x32xf32>
    %197 = arith.mulf %174, %196 : vector<16x32xf32>
    %198 = vector.broadcast %195 : vector<1x32xf32> to vector<16x32xf32>
    %199 = arith.addf %197, %198 : vector<16x32xf32>
    %cst_78 = arith.constant 0.000000e+00 : f32
    %200 = vector.broadcast %cst_78 : f32 to vector<16x32xf32>
    %201 = arith.maximumf %199, %200 : vector<16x32xf32>
    %202 = arith.truncf %201 : vector<16x32xf32> to vector<16x32xbf16>
    %c2_79 = arith.constant 2 : index
    %c0_80 = arith.constant 0 : index
    %c0_81 = arith.constant 0 : index
    %203 = vector.load %arg6[%c2_79, %c0_80, %c0_81] : memref<7x32x16xbf16, #tpu.memory_space<vmem>>, vector<1x32x16xbf16>
    %204 = vector.shape_cast %203 : vector<1x32x16xbf16> to vector<32x16xbf16>
    %cst_82 = arith.constant dense<0.000000e+00> : vector<16x16xf32>
    %205 = tpu.matmul %202, %204, %cst_82 {dimension_numbers = #tpu.dot_dimension_numbers<[1], [0], [0], [1], [0, 0, 1, 1], [], []>} : vector<16x32xbf16>, vector<32x16xbf16>, vector<16x16xf32> -> vector<16x16xf32>
    %cst_83 = arith.constant dense<0.000000e+00> : vector<16xf32>
    %206 = vector.multi_reduction <add>, %205, %cst_83 [0] : vector<16x16xf32> to vector<16xf32>
    %207 = vector.shape_cast %206 : vector<16xf32> to vector<1x16xf32>
    %cst_84 = arith.constant 1.600000e+01 : f32
    %208 = vector.broadcast %cst_84 : f32 to vector<1x16xf32>
    %209 = arith.divf %207, %208 : vector<1x16xf32>
    %210 = arith.mulf %205, %205 : vector<16x16xf32>
    %cst_85 = arith.constant dense<0.000000e+00> : vector<16xf32>
    %211 = vector.multi_reduction <add>, %210, %cst_85 [0] : vector<16x16xf32> to vector<16xf32>
    %212 = vector.shape_cast %211 : vector<16xf32> to vector<1x16xf32>
    %cst_86 = arith.constant 1.600000e+01 : f32
    %213 = vector.broadcast %cst_86 : f32 to vector<1x16xf32>
    %214 = arith.divf %212, %213 : vector<1x16xf32>
    %215 = arith.mulf %209, %209 : vector<1x16xf32>
    %216 = arith.subf %214, %215 : vector<1x16xf32>
    %cst_87 = arith.constant 0.000000e+00 : f32
    %217 = vector.broadcast %cst_87 : f32 to vector<1x16xf32>
    %218 = arith.maximumf %216, %217 : vector<1x16xf32>
    %219 = vector.extract_strided_slice %162 {offsets = [2, 0], sizes = [1, 16], strides = [1, 1]} : vector<4x32xf32> to vector<1x16xf32>
    %cst_88 = arith.constant 9.99999974E-6 : f32
    %220 = vector.broadcast %cst_88 : f32 to vector<1x16xf32>
    %221 = arith.addf %218, %220 : vector<1x16xf32>
    %222 = math.rsqrt %221 : vector<1x16xf32>
    %223 = arith.mulf %219, %222 : vector<1x16xf32>
    %224 = vector.extract_strided_slice %162 {offsets = [3, 0], sizes = [1, 16], strides = [1, 1]} : vector<4x32xf32> to vector<1x16xf32>
    %225 = arith.mulf %209, %223 : vector<1x16xf32>
    %226 = arith.subf %224, %225 : vector<1x16xf32>
    %227 = vector.broadcast %223 : vector<1x16xf32> to vector<16x16xf32>
    %228 = arith.mulf %205, %227 : vector<16x16xf32>
    %229 = vector.broadcast %226 : vector<1x16xf32> to vector<16x16xf32>
    %230 = arith.addf %228, %229 : vector<16x16xf32>
    %231 = vector.extract_strided_slice %5 {offsets = [2, 0, 0], sizes = [1, 16, 16], strides = [1, 1, 1]} : vector<7x16x16xf32> to vector<1x16x16xf32>
    %232 = vector.shape_cast %231 : vector<1x16x16xf32> to vector<16x16xf32>
    %233 = arith.mulf %230, %232 : vector<16x16xf32>
    %cst_89 = arith.constant 0.000000e+00 : f32
    %234 = vector.broadcast %cst_89 : f32 to vector<16x16xf32>
    %235 = arith.maximumf %233, %234 : vector<16x16xf32>
    %c3 = arith.constant 3 : index
    %c0_90 = arith.constant 0 : index
    %c0_91 = arith.constant 0 : index
    %236 = vector.load %arg7[%c3, %c0_90, %c0_91] : memref<7x4x32xf32, #tpu.memory_space<vmem>>, vector<1x4x32xf32>
    %237 = vector.shape_cast %236 : vector<1x4x32xf32> to vector<4x32xf32>
    %c3_92 = arith.constant 3 : index
    %238 = memref.load %arg1[%c3_92] : memref<7xf32, #tpu.memory_space<smem>>
    %cst_93 = arith.constant 1.000000e+00 : f32
    %239 = arith.addf %238, %cst_93 : f32
    %240 = vector.broadcast %239 : f32 to vector<16x16xf32>
    %241 = arith.mulf %240, %10 : vector<16x16xf32>
    %242 = arith.addf %1, %241 : vector<16x16xf32>
    %243 = arith.truncf %242 : vector<16x16xf32> to vector<16x16xbf16>
    %244 = arith.truncf %235 : vector<16x16xf32> to vector<16x16xbf16>
    %cst_94 = arith.constant dense<0.000000e+00> : vector<16x16xf32>
    %245 = tpu.matmul %243, %244, %cst_94 {dimension_numbers = #tpu.dot_dimension_numbers<[1], [0], [0], [1], [0, 0, 1, 1], [], []>} : vector<16x16xbf16>, vector<16x16xbf16>, vector<16x16xf32> -> vector<16x16xf32>
    %246 = arith.truncf %245 : vector<16x16xf32> to vector<16x16xbf16>
    %c3_95 = arith.constant 3 : index
    %c0_96 = arith.constant 0 : index
    %c0_97 = arith.constant 0 : index
    %247 = vector.load %arg5[%c3_95, %c0_96, %c0_97] : memref<7x16x32xbf16, #tpu.memory_space<vmem>>, vector<1x16x32xbf16>
    %248 = vector.shape_cast %247 : vector<1x16x32xbf16> to vector<16x32xbf16>
    %cst_98 = arith.constant dense<0.000000e+00> : vector<16x32xf32>
    %249 = tpu.matmul %246, %248, %cst_98 {dimension_numbers = #tpu.dot_dimension_numbers<[1], [0], [0], [1], [0, 0, 1, 1], [], []>} : vector<16x16xbf16>, vector<16x32xbf16>, vector<16x32xf32> -> vector<16x32xf32>
    %cst_99 = arith.constant dense<0.000000e+00> : vector<32xf32>
    %250 = vector.multi_reduction <add>, %249, %cst_99 [0] : vector<16x32xf32> to vector<32xf32>
    %251 = vector.shape_cast %250 : vector<32xf32> to vector<1x32xf32>
    %cst_100 = arith.constant 1.600000e+01 : f32
    %252 = vector.broadcast %cst_100 : f32 to vector<1x32xf32>
    %253 = arith.divf %251, %252 : vector<1x32xf32>
    %254 = arith.mulf %249, %249 : vector<16x32xf32>
    %cst_101 = arith.constant dense<0.000000e+00> : vector<32xf32>
    %255 = vector.multi_reduction <add>, %254, %cst_101 [0] : vector<16x32xf32> to vector<32xf32>
    %256 = vector.shape_cast %255 : vector<32xf32> to vector<1x32xf32>
    %cst_102 = arith.constant 1.600000e+01 : f32
    %257 = vector.broadcast %cst_102 : f32 to vector<1x32xf32>
    %258 = arith.divf %256, %257 : vector<1x32xf32>
    %259 = arith.mulf %253, %253 : vector<1x32xf32>
    %260 = arith.subf %258, %259 : vector<1x32xf32>
    %cst_103 = arith.constant 0.000000e+00 : f32
    %261 = vector.broadcast %cst_103 : f32 to vector<1x32xf32>
    %262 = arith.maximumf %260, %261 : vector<1x32xf32>
    %263 = vector.extract_strided_slice %237 {offsets = [0, 0], sizes = [1, 32], strides = [1, 1]} : vector<4x32xf32> to vector<1x32xf32>
    %cst_104 = arith.constant 9.99999974E-6 : f32
    %264 = vector.broadcast %cst_104 : f32 to vector<1x32xf32>
    %265 = arith.addf %262, %264 : vector<1x32xf32>
    %266 = math.rsqrt %265 : vector<1x32xf32>
    %267 = arith.mulf %263, %266 : vector<1x32xf32>
    %268 = vector.extract_strided_slice %237 {offsets = [1, 0], sizes = [1, 32], strides = [1, 1]} : vector<4x32xf32> to vector<1x32xf32>
    %269 = arith.mulf %253, %267 : vector<1x32xf32>
    %270 = arith.subf %268, %269 : vector<1x32xf32>
    %271 = vector.broadcast %267 : vector<1x32xf32> to vector<16x32xf32>
    %272 = arith.mulf %249, %271 : vector<16x32xf32>
    %273 = vector.broadcast %270 : vector<1x32xf32> to vector<16x32xf32>
    %274 = arith.addf %272, %273 : vector<16x32xf32>
    %cst_105 = arith.constant 0.000000e+00 : f32
    %275 = vector.broadcast %cst_105 : f32 to vector<16x32xf32>
    %276 = arith.maximumf %274, %275 : vector<16x32xf32>
    %277 = arith.truncf %276 : vector<16x32xf32> to vector<16x32xbf16>
    %c3_106 = arith.constant 3 : index
    %c0_107 = arith.constant 0 : index
    %c0_108 = arith.constant 0 : index
    %278 = vector.load %arg6[%c3_106, %c0_107, %c0_108] : memref<7x32x16xbf16, #tpu.memory_space<vmem>>, vector<1x32x16xbf16>
    %279 = vector.shape_cast %278 : vector<1x32x16xbf16> to vector<32x16xbf16>
    %cst_109 = arith.constant dense<0.000000e+00> : vector<16x16xf32>
    %280 = tpu.matmul %277, %279, %cst_109 {dimension_numbers = #tpu.dot_dimension_numbers<[1], [0], [0], [1], [0, 0, 1, 1], [], []>} : vector<16x32xbf16>, vector<32x16xbf16>, vector<16x16xf32> -> vector<16x16xf32>
    %cst_110 = arith.constant dense<0.000000e+00> : vector<16xf32>
    %281 = vector.multi_reduction <add>, %280, %cst_110 [0] : vector<16x16xf32> to vector<16xf32>
    %282 = vector.shape_cast %281 : vector<16xf32> to vector<1x16xf32>
    %cst_111 = arith.constant 1.600000e+01 : f32
    %283 = vector.broadcast %cst_111 : f32 to vector<1x16xf32>
    %284 = arith.divf %282, %283 : vector<1x16xf32>
    %285 = arith.mulf %280, %280 : vector<16x16xf32>
    %cst_112 = arith.constant dense<0.000000e+00> : vector<16xf32>
    %286 = vector.multi_reduction <add>, %285, %cst_112 [0] : vector<16x16xf32> to vector<16xf32>
    %287 = vector.shape_cast %286 : vector<16xf32> to vector<1x16xf32>
    %cst_113 = arith.constant 1.600000e+01 : f32
    %288 = vector.broadcast %cst_113 : f32 to vector<1x16xf32>
    %289 = arith.divf %287, %288 : vector<1x16xf32>
    %290 = arith.mulf %284, %284 : vector<1x16xf32>
    %291 = arith.subf %289, %290 : vector<1x16xf32>
    %cst_114 = arith.constant 0.000000e+00 : f32
    %292 = vector.broadcast %cst_114 : f32 to vector<1x16xf32>
    %293 = arith.maximumf %291, %292 : vector<1x16xf32>
    %294 = vector.extract_strided_slice %237 {offsets = [2, 0], sizes = [1, 16], strides = [1, 1]} : vector<4x32xf32> to vector<1x16xf32>
    %cst_115 = arith.constant 9.99999974E-6 : f32
    %295 = vector.broadcast %cst_115 : f32 to vector<1x16xf32>
    %296 = arith.addf %293, %295 : vector<1x16xf32>
    %297 = math.rsqrt %296 : vector<1x16xf32>
    %298 = arith.mulf %294, %297 : vector<1x16xf32>
    %299 = vector.extract_strided_slice %237 {offsets = [3, 0], sizes = [1, 16], strides = [1, 1]} : vector<4x32xf32> to vector<1x16xf32>
    %300 = arith.mulf %284, %298 : vector<1x16xf32>
    %301 = arith.subf %299, %300 : vector<1x16xf32>
    %302 = vector.broadcast %298 : vector<1x16xf32> to vector<16x16xf32>
    %303 = arith.mulf %280, %302 : vector<16x16xf32>
    %304 = vector.broadcast %301 : vector<1x16xf32> to vector<16x16xf32>
    %305 = arith.addf %303, %304 : vector<16x16xf32>
    %306 = vector.extract_strided_slice %5 {offsets = [3, 0, 0], sizes = [1, 16, 16], strides = [1, 1, 1]} : vector<7x16x16xf32> to vector<1x16x16xf32>
    %307 = vector.shape_cast %306 : vector<1x16x16xf32> to vector<16x16xf32>
    %308 = arith.mulf %305, %307 : vector<16x16xf32>
    %cst_116 = arith.constant 0.000000e+00 : f32
    %309 = vector.broadcast %cst_116 : f32 to vector<16x16xf32>
    %310 = arith.maximumf %308, %309 : vector<16x16xf32>
    %c4 = arith.constant 4 : index
    %c0_117 = arith.constant 0 : index
    %c0_118 = arith.constant 0 : index
    %311 = vector.load %arg7[%c4, %c0_117, %c0_118] : memref<7x4x32xf32, #tpu.memory_space<vmem>>, vector<1x4x32xf32>
    %312 = vector.shape_cast %311 : vector<1x4x32xf32> to vector<4x32xf32>
    %c4_119 = arith.constant 4 : index
    %313 = memref.load %arg1[%c4_119] : memref<7xf32, #tpu.memory_space<smem>>
    %cst_120 = arith.constant 1.000000e+00 : f32
    %314 = arith.addf %313, %cst_120 : f32
    %315 = vector.broadcast %314 : f32 to vector<16x16xf32>
    %316 = arith.mulf %315, %10 : vector<16x16xf32>
    %317 = arith.addf %1, %316 : vector<16x16xf32>
    %318 = arith.truncf %317 : vector<16x16xf32> to vector<16x16xbf16>
    %319 = arith.truncf %310 : vector<16x16xf32> to vector<16x16xbf16>
    %cst_121 = arith.constant dense<0.000000e+00> : vector<16x16xf32>
    %320 = tpu.matmul %318, %319, %cst_121 {dimension_numbers = #tpu.dot_dimension_numbers<[1], [0], [0], [1], [0, 0, 1, 1], [], []>} : vector<16x16xbf16>, vector<16x16xbf16>, vector<16x16xf32> -> vector<16x16xf32>
    %321 = arith.truncf %320 : vector<16x16xf32> to vector<16x16xbf16>
    %c4_122 = arith.constant 4 : index
    %c0_123 = arith.constant 0 : index
    %c0_124 = arith.constant 0 : index
    %322 = vector.load %arg5[%c4_122, %c0_123, %c0_124] : memref<7x16x32xbf16, #tpu.memory_space<vmem>>, vector<1x16x32xbf16>
    %323 = vector.shape_cast %322 : vector<1x16x32xbf16> to vector<16x32xbf16>
    %cst_125 = arith.constant dense<0.000000e+00> : vector<16x32xf32>
    %324 = tpu.matmul %321, %323, %cst_125 {dimension_numbers = #tpu.dot_dimension_numbers<[1], [0], [0], [1], [0, 0, 1, 1], [], []>} : vector<16x16xbf16>, vector<16x32xbf16>, vector<16x32xf32> -> vector<16x32xf32>
    %cst_126 = arith.constant dense<0.000000e+00> : vector<32xf32>
    %325 = vector.multi_reduction <add>, %324, %cst_126 [0] : vector<16x32xf32> to vector<32xf32>
    %326 = vector.shape_cast %325 : vector<32xf32> to vector<1x32xf32>
    %cst_127 = arith.constant 1.600000e+01 : f32
    %327 = vector.broadcast %cst_127 : f32 to vector<1x32xf32>
    %328 = arith.divf %326, %327 : vector<1x32xf32>
    %329 = arith.mulf %324, %324 : vector<16x32xf32>
    %cst_128 = arith.constant dense<0.000000e+00> : vector<32xf32>
    %330 = vector.multi_reduction <add>, %329, %cst_128 [0] : vector<16x32xf32> to vector<32xf32>
    %331 = vector.shape_cast %330 : vector<32xf32> to vector<1x32xf32>
    %cst_129 = arith.constant 1.600000e+01 : f32
    %332 = vector.broadcast %cst_129 : f32 to vector<1x32xf32>
    %333 = arith.divf %331, %332 : vector<1x32xf32>
    %334 = arith.mulf %328, %328 : vector<1x32xf32>
    %335 = arith.subf %333, %334 : vector<1x32xf32>
    %cst_130 = arith.constant 0.000000e+00 : f32
    %336 = vector.broadcast %cst_130 : f32 to vector<1x32xf32>
    %337 = arith.maximumf %335, %336 : vector<1x32xf32>
    %338 = vector.extract_strided_slice %312 {offsets = [0, 0], sizes = [1, 32], strides = [1, 1]} : vector<4x32xf32> to vector<1x32xf32>
    %cst_131 = arith.constant 9.99999974E-6 : f32
    %339 = vector.broadcast %cst_131 : f32 to vector<1x32xf32>
    %340 = arith.addf %337, %339 : vector<1x32xf32>
    %341 = math.rsqrt %340 : vector<1x32xf32>
    %342 = arith.mulf %338, %341 : vector<1x32xf32>
    %343 = vector.extract_strided_slice %312 {offsets = [1, 0], sizes = [1, 32], strides = [1, 1]} : vector<4x32xf32> to vector<1x32xf32>
    %344 = arith.mulf %328, %342 : vector<1x32xf32>
    %345 = arith.subf %343, %344 : vector<1x32xf32>
    %346 = vector.broadcast %342 : vector<1x32xf32> to vector<16x32xf32>
    %347 = arith.mulf %324, %346 : vector<16x32xf32>
    %348 = vector.broadcast %345 : vector<1x32xf32> to vector<16x32xf32>
    %349 = arith.addf %347, %348 : vector<16x32xf32>
    %cst_132 = arith.constant 0.000000e+00 : f32
    %350 = vector.broadcast %cst_132 : f32 to vector<16x32xf32>
    %351 = arith.maximumf %349, %350 : vector<16x32xf32>
    %352 = arith.truncf %351 : vector<16x32xf32> to vector<16x32xbf16>
    %c4_133 = arith.constant 4 : index
    %c0_134 = arith.constant 0 : index
    %c0_135 = arith.constant 0 : index
    %353 = vector.load %arg6[%c4_133, %c0_134, %c0_135] : memref<7x32x16xbf16, #tpu.memory_space<vmem>>, vector<1x32x16xbf16>
    %354 = vector.shape_cast %353 : vector<1x32x16xbf16> to vector<32x16xbf16>
    %cst_136 = arith.constant dense<0.000000e+00> : vector<16x16xf32>
    %355 = tpu.matmul %352, %354, %cst_136 {dimension_numbers = #tpu.dot_dimension_numbers<[1], [0], [0], [1], [0, 0, 1, 1], [], []>} : vector<16x32xbf16>, vector<32x16xbf16>, vector<16x16xf32> -> vector<16x16xf32>
    %cst_137 = arith.constant dense<0.000000e+00> : vector<16xf32>
    %356 = vector.multi_reduction <add>, %355, %cst_137 [0] : vector<16x16xf32> to vector<16xf32>
    %357 = vector.shape_cast %356 : vector<16xf32> to vector<1x16xf32>
    %cst_138 = arith.constant 1.600000e+01 : f32
    %358 = vector.broadcast %cst_138 : f32 to vector<1x16xf32>
    %359 = arith.divf %357, %358 : vector<1x16xf32>
    %360 = arith.mulf %355, %355 : vector<16x16xf32>
    %cst_139 = arith.constant dense<0.000000e+00> : vector<16xf32>
    %361 = vector.multi_reduction <add>, %360, %cst_139 [0] : vector<16x16xf32> to vector<16xf32>
    %362 = vector.shape_cast %361 : vector<16xf32> to vector<1x16xf32>
    %cst_140 = arith.constant 1.600000e+01 : f32
    %363 = vector.broadcast %cst_140 : f32 to vector<1x16xf32>
    %364 = arith.divf %362, %363 : vector<1x16xf32>
    %365 = arith.mulf %359, %359 : vector<1x16xf32>
    %366 = arith.subf %364, %365 : vector<1x16xf32>
    %cst_141 = arith.constant 0.000000e+00 : f32
    %367 = vector.broadcast %cst_141 : f32 to vector<1x16xf32>
    %368 = arith.maximumf %366, %367 : vector<1x16xf32>
    %369 = vector.extract_strided_slice %312 {offsets = [2, 0], sizes = [1, 16], strides = [1, 1]} : vector<4x32xf32> to vector<1x16xf32>
    %cst_142 = arith.constant 9.99999974E-6 : f32
    %370 = vector.broadcast %cst_142 : f32 to vector<1x16xf32>
    %371 = arith.addf %368, %370 : vector<1x16xf32>
    %372 = math.rsqrt %371 : vector<1x16xf32>
    %373 = arith.mulf %369, %372 : vector<1x16xf32>
    %374 = vector.extract_strided_slice %312 {offsets = [3, 0], sizes = [1, 16], strides = [1, 1]} : vector<4x32xf32> to vector<1x16xf32>
    %375 = arith.mulf %359, %373 : vector<1x16xf32>
    %376 = arith.subf %374, %375 : vector<1x16xf32>
    %377 = vector.broadcast %373 : vector<1x16xf32> to vector<16x16xf32>
    %378 = arith.mulf %355, %377 : vector<16x16xf32>
    %379 = vector.broadcast %376 : vector<1x16xf32> to vector<16x16xf32>
    %380 = arith.addf %378, %379 : vector<16x16xf32>
    %381 = vector.extract_strided_slice %5 {offsets = [4, 0, 0], sizes = [1, 16, 16], strides = [1, 1, 1]} : vector<7x16x16xf32> to vector<1x16x16xf32>
    %382 = vector.shape_cast %381 : vector<1x16x16xf32> to vector<16x16xf32>
    %383 = arith.mulf %380, %382 : vector<16x16xf32>
    %cst_143 = arith.constant 0.000000e+00 : f32
    %384 = vector.broadcast %cst_143 : f32 to vector<16x16xf32>
    %385 = arith.maximumf %383, %384 : vector<16x16xf32>
    %c5 = arith.constant 5 : index
    %c0_144 = arith.constant 0 : index
    %c0_145 = arith.constant 0 : index
    %386 = vector.load %arg7[%c5, %c0_144, %c0_145] : memref<7x4x32xf32, #tpu.memory_space<vmem>>, vector<1x4x32xf32>
    %387 = vector.shape_cast %386 : vector<1x4x32xf32> to vector<4x32xf32>
    %c5_146 = arith.constant 5 : index
    %388 = memref.load %arg1[%c5_146] : memref<7xf32, #tpu.memory_space<smem>>
    %cst_147 = arith.constant 1.000000e+00 : f32
    %389 = arith.addf %388, %cst_147 : f32
    %390 = vector.broadcast %389 : f32 to vector<16x16xf32>
    %391 = arith.mulf %390, %10 : vector<16x16xf32>
    %392 = arith.addf %1, %391 : vector<16x16xf32>
    %393 = arith.truncf %392 : vector<16x16xf32> to vector<16x16xbf16>
    %394 = arith.truncf %385 : vector<16x16xf32> to vector<16x16xbf16>
    %cst_148 = arith.constant dense<0.000000e+00> : vector<16x16xf32>
    %395 = tpu.matmul %393, %394, %cst_148 {dimension_numbers = #tpu.dot_dimension_numbers<[1], [0], [0], [1], [0, 0, 1, 1], [], []>} : vector<16x16xbf16>, vector<16x16xbf16>, vector<16x16xf32> -> vector<16x16xf32>
    %396 = arith.truncf %395 : vector<16x16xf32> to vector<16x16xbf16>
    %c5_149 = arith.constant 5 : index
    %c0_150 = arith.constant 0 : index
    %c0_151 = arith.constant 0 : index
    %397 = vector.load %arg5[%c5_149, %c0_150, %c0_151] : memref<7x16x32xbf16, #tpu.memory_space<vmem>>, vector<1x16x32xbf16>
    %398 = vector.shape_cast %397 : vector<1x16x32xbf16> to vector<16x32xbf16>
    %cst_152 = arith.constant dense<0.000000e+00> : vector<16x32xf32>
    %399 = tpu.matmul %396, %398, %cst_152 {dimension_numbers = #tpu.dot_dimension_numbers<[1], [0], [0], [1], [0, 0, 1, 1], [], []>} : vector<16x16xbf16>, vector<16x32xbf16>, vector<16x32xf32> -> vector<16x32xf32>
    %cst_153 = arith.constant dense<0.000000e+00> : vector<32xf32>
    %400 = vector.multi_reduction <add>, %399, %cst_153 [0] : vector<16x32xf32> to vector<32xf32>
    %401 = vector.shape_cast %400 : vector<32xf32> to vector<1x32xf32>
    %cst_154 = arith.constant 1.600000e+01 : f32
    %402 = vector.broadcast %cst_154 : f32 to vector<1x32xf32>
    %403 = arith.divf %401, %402 : vector<1x32xf32>
    %404 = arith.mulf %399, %399 : vector<16x32xf32>
    %cst_155 = arith.constant dense<0.000000e+00> : vector<32xf32>
    %405 = vector.multi_reduction <add>, %404, %cst_155 [0] : vector<16x32xf32> to vector<32xf32>
    %406 = vector.shape_cast %405 : vector<32xf32> to vector<1x32xf32>
    %cst_156 = arith.constant 1.600000e+01 : f32
    %407 = vector.broadcast %cst_156 : f32 to vector<1x32xf32>
    %408 = arith.divf %406, %407 : vector<1x32xf32>
    %409 = arith.mulf %403, %403 : vector<1x32xf32>
    %410 = arith.subf %408, %409 : vector<1x32xf32>
    %cst_157 = arith.constant 0.000000e+00 : f32
    %411 = vector.broadcast %cst_157 : f32 to vector<1x32xf32>
    %412 = arith.maximumf %410, %411 : vector<1x32xf32>
    %413 = vector.extract_strided_slice %387 {offsets = [0, 0], sizes = [1, 32], strides = [1, 1]} : vector<4x32xf32> to vector<1x32xf32>
    %cst_158 = arith.constant 9.99999974E-6 : f32
    %414 = vector.broadcast %cst_158 : f32 to vector<1x32xf32>
    %415 = arith.addf %412, %414 : vector<1x32xf32>
    %416 = math.rsqrt %415 : vector<1x32xf32>
    %417 = arith.mulf %413, %416 : vector<1x32xf32>
    %418 = vector.extract_strided_slice %387 {offsets = [1, 0], sizes = [1, 32], strides = [1, 1]} : vector<4x32xf32> to vector<1x32xf32>
    %419 = arith.mulf %403, %417 : vector<1x32xf32>
    %420 = arith.subf %418, %419 : vector<1x32xf32>
    %421 = vector.broadcast %417 : vector<1x32xf32> to vector<16x32xf32>
    %422 = arith.mulf %399, %421 : vector<16x32xf32>
    %423 = vector.broadcast %420 : vector<1x32xf32> to vector<16x32xf32>
    %424 = arith.addf %422, %423 : vector<16x32xf32>
    %cst_159 = arith.constant 0.000000e+00 : f32
    %425 = vector.broadcast %cst_159 : f32 to vector<16x32xf32>
    %426 = arith.maximumf %424, %425 : vector<16x32xf32>
    %427 = arith.truncf %426 : vector<16x32xf32> to vector<16x32xbf16>
    %c5_160 = arith.constant 5 : index
    %c0_161 = arith.constant 0 : index
    %c0_162 = arith.constant 0 : index
    %428 = vector.load %arg6[%c5_160, %c0_161, %c0_162] : memref<7x32x16xbf16, #tpu.memory_space<vmem>>, vector<1x32x16xbf16>
    %429 = vector.shape_cast %428 : vector<1x32x16xbf16> to vector<32x16xbf16>
    %cst_163 = arith.constant dense<0.000000e+00> : vector<16x16xf32>
    %430 = tpu.matmul %427, %429, %cst_163 {dimension_numbers = #tpu.dot_dimension_numbers<[1], [0], [0], [1], [0, 0, 1, 1], [], []>} : vector<16x32xbf16>, vector<32x16xbf16>, vector<16x16xf32> -> vector<16x16xf32>
    %cst_164 = arith.constant dense<0.000000e+00> : vector<16xf32>
    %431 = vector.multi_reduction <add>, %430, %cst_164 [0] : vector<16x16xf32> to vector<16xf32>
    %432 = vector.shape_cast %431 : vector<16xf32> to vector<1x16xf32>
    %cst_165 = arith.constant 1.600000e+01 : f32
    %433 = vector.broadcast %cst_165 : f32 to vector<1x16xf32>
    %434 = arith.divf %432, %433 : vector<1x16xf32>
    %435 = arith.mulf %430, %430 : vector<16x16xf32>
    %cst_166 = arith.constant dense<0.000000e+00> : vector<16xf32>
    %436 = vector.multi_reduction <add>, %435, %cst_166 [0] : vector<16x16xf32> to vector<16xf32>
    %437 = vector.shape_cast %436 : vector<16xf32> to vector<1x16xf32>
    %cst_167 = arith.constant 1.600000e+01 : f32
    %438 = vector.broadcast %cst_167 : f32 to vector<1x16xf32>
    %439 = arith.divf %437, %438 : vector<1x16xf32>
    %440 = arith.mulf %434, %434 : vector<1x16xf32>
    %441 = arith.subf %439, %440 : vector<1x16xf32>
    %cst_168 = arith.constant 0.000000e+00 : f32
    %442 = vector.broadcast %cst_168 : f32 to vector<1x16xf32>
    %443 = arith.maximumf %441, %442 : vector<1x16xf32>
    %444 = vector.extract_strided_slice %387 {offsets = [2, 0], sizes = [1, 16], strides = [1, 1]} : vector<4x32xf32> to vector<1x16xf32>
    %cst_169 = arith.constant 9.99999974E-6 : f32
    %445 = vector.broadcast %cst_169 : f32 to vector<1x16xf32>
    %446 = arith.addf %443, %445 : vector<1x16xf32>
    %447 = math.rsqrt %446 : vector<1x16xf32>
    %448 = arith.mulf %444, %447 : vector<1x16xf32>
    %449 = vector.extract_strided_slice %387 {offsets = [3, 0], sizes = [1, 16], strides = [1, 1]} : vector<4x32xf32> to vector<1x16xf32>
    %450 = arith.mulf %434, %448 : vector<1x16xf32>
    %451 = arith.subf %449, %450 : vector<1x16xf32>
    %452 = vector.broadcast %448 : vector<1x16xf32> to vector<16x16xf32>
    %453 = arith.mulf %430, %452 : vector<16x16xf32>
    %454 = vector.broadcast %451 : vector<1x16xf32> to vector<16x16xf32>
    %455 = arith.addf %453, %454 : vector<16x16xf32>
    %456 = vector.extract_strided_slice %5 {offsets = [5, 0, 0], sizes = [1, 16, 16], strides = [1, 1, 1]} : vector<7x16x16xf32> to vector<1x16x16xf32>
    %457 = vector.shape_cast %456 : vector<1x16x16xf32> to vector<16x16xf32>
    %458 = arith.mulf %455, %457 : vector<16x16xf32>
    %cst_170 = arith.constant 0.000000e+00 : f32
    %459 = vector.broadcast %cst_170 : f32 to vector<16x16xf32>
    %460 = arith.maximumf %458, %459 : vector<16x16xf32>
    %c6 = arith.constant 6 : index
    %c0_171 = arith.constant 0 : index
    %c0_172 = arith.constant 0 : index
    %461 = vector.load %arg7[%c6, %c0_171, %c0_172] : memref<7x4x32xf32, #tpu.memory_space<vmem>>, vector<1x4x32xf32>
    %462 = vector.shape_cast %461 : vector<1x4x32xf32> to vector<4x32xf32>
    %c6_173 = arith.constant 6 : index
    %463 = memref.load %arg1[%c6_173] : memref<7xf32, #tpu.memory_space<smem>>
    %cst_174 = arith.constant 1.000000e+00 : f32
    %464 = arith.addf %463, %cst_174 : f32
    %465 = vector.broadcast %464 : f32 to vector<16x16xf32>
    %466 = arith.mulf %465, %10 : vector<16x16xf32>
    %467 = arith.addf %1, %466 : vector<16x16xf32>
    %468 = arith.truncf %467 : vector<16x16xf32> to vector<16x16xbf16>
    %469 = arith.truncf %460 : vector<16x16xf32> to vector<16x16xbf16>
    %cst_175 = arith.constant dense<0.000000e+00> : vector<16x16xf32>
    %470 = tpu.matmul %468, %469, %cst_175 {dimension_numbers = #tpu.dot_dimension_numbers<[1], [0], [0], [1], [0, 0, 1, 1], [], []>} : vector<16x16xbf16>, vector<16x16xbf16>, vector<16x16xf32> -> vector<16x16xf32>
    %471 = arith.truncf %470 : vector<16x16xf32> to vector<16x16xbf16>
    %c6_176 = arith.constant 6 : index
    %c0_177 = arith.constant 0 : index
    %c0_178 = arith.constant 0 : index
    %472 = vector.load %arg5[%c6_176, %c0_177, %c0_178] : memref<7x16x32xbf16, #tpu.memory_space<vmem>>, vector<1x16x32xbf16>
    %473 = vector.shape_cast %472 : vector<1x16x32xbf16> to vector<16x32xbf16>
    %cst_179 = arith.constant dense<0.000000e+00> : vector<16x32xf32>
    %474 = tpu.matmul %471, %473, %cst_179 {dimension_numbers = #tpu.dot_dimension_numbers<[1], [0], [0], [1], [0, 0, 1, 1], [], []>} : vector<16x16xbf16>, vector<16x32xbf16>, vector<16x32xf32> -> vector<16x32xf32>
    %cst_180 = arith.constant dense<0.000000e+00> : vector<32xf32>
    %475 = vector.multi_reduction <add>, %474, %cst_180 [0] : vector<16x32xf32> to vector<32xf32>
    %476 = vector.shape_cast %475 : vector<32xf32> to vector<1x32xf32>
    %cst_181 = arith.constant 1.600000e+01 : f32
    %477 = vector.broadcast %cst_181 : f32 to vector<1x32xf32>
    %478 = arith.divf %476, %477 : vector<1x32xf32>
    %479 = arith.mulf %474, %474 : vector<16x32xf32>
    %cst_182 = arith.constant dense<0.000000e+00> : vector<32xf32>
    %480 = vector.multi_reduction <add>, %479, %cst_182 [0] : vector<16x32xf32> to vector<32xf32>
    %481 = vector.shape_cast %480 : vector<32xf32> to vector<1x32xf32>
    %cst_183 = arith.constant 1.600000e+01 : f32
    %482 = vector.broadcast %cst_183 : f32 to vector<1x32xf32>
    %483 = arith.divf %481, %482 : vector<1x32xf32>
    %484 = arith.mulf %478, %478 : vector<1x32xf32>
    %485 = arith.subf %483, %484 : vector<1x32xf32>
    %cst_184 = arith.constant 0.000000e+00 : f32
    %486 = vector.broadcast %cst_184 : f32 to vector<1x32xf32>
    %487 = arith.maximumf %485, %486 : vector<1x32xf32>
    %488 = vector.extract_strided_slice %462 {offsets = [0, 0], sizes = [1, 32], strides = [1, 1]} : vector<4x32xf32> to vector<1x32xf32>
    %cst_185 = arith.constant 9.99999974E-6 : f32
    %489 = vector.broadcast %cst_185 : f32 to vector<1x32xf32>
    %490 = arith.addf %487, %489 : vector<1x32xf32>
    %491 = math.rsqrt %490 : vector<1x32xf32>
    %492 = arith.mulf %488, %491 : vector<1x32xf32>
    %493 = vector.extract_strided_slice %462 {offsets = [1, 0], sizes = [1, 32], strides = [1, 1]} : vector<4x32xf32> to vector<1x32xf32>
    %494 = arith.mulf %478, %492 : vector<1x32xf32>
    %495 = arith.subf %493, %494 : vector<1x32xf32>
    %496 = vector.broadcast %492 : vector<1x32xf32> to vector<16x32xf32>
    %497 = arith.mulf %474, %496 : vector<16x32xf32>
    %498 = vector.broadcast %495 : vector<1x32xf32> to vector<16x32xf32>
    %499 = arith.addf %497, %498 : vector<16x32xf32>
    %cst_186 = arith.constant 0.000000e+00 : f32
    %500 = vector.broadcast %cst_186 : f32 to vector<16x32xf32>
    %501 = arith.maximumf %499, %500 : vector<16x32xf32>
    %502 = arith.truncf %501 : vector<16x32xf32> to vector<16x32xbf16>
    %c6_187 = arith.constant 6 : index
    %c0_188 = arith.constant 0 : index
    %c0_189 = arith.constant 0 : index
    %503 = vector.load %arg6[%c6_187, %c0_188, %c0_189] : memref<7x32x16xbf16, #tpu.memory_space<vmem>>, vector<1x32x16xbf16>
    %504 = vector.shape_cast %503 : vector<1x32x16xbf16> to vector<32x16xbf16>
    %cst_190 = arith.constant dense<0.000000e+00> : vector<16x16xf32>
    %505 = tpu.matmul %502, %504, %cst_190 {dimension_numbers = #tpu.dot_dimension_numbers<[1], [0], [0], [1], [0, 0, 1, 1], [], []>} : vector<16x32xbf16>, vector<32x16xbf16>, vector<16x16xf32> -> vector<16x16xf32>
    %506 = vector.extract_strided_slice %5 {offsets = [6, 0, 0], sizes = [1, 16, 16], strides = [1, 1, 1]} : vector<7x16x16xf32> to vector<1x16x16xf32>
    %507 = vector.shape_cast %506 : vector<1x16x16xf32> to vector<16x16xf32>
    %508 = arith.mulf %505, %507 : vector<16x16xf32>
    %cst_191 = arith.constant 0.000000e+00 : f32
    %509 = vector.broadcast %cst_191 : f32 to vector<16x16xf32>
    %510 = arith.maximumf %508, %509 : vector<16x16xf32>
    %cst_192 = arith.constant dense<0.000000e+00> : vector<16xf32>
    %511 = vector.multi_reduction <add>, %510, %cst_192 [0] : vector<16x16xf32> to vector<16xf32>
    %512 = vector.shape_cast %511 : vector<16xf32> to vector<1x16xf32>
    %cst_193 = arith.constant 1.600000e+01 : f32
    %513 = vector.broadcast %cst_193 : f32 to vector<1x16xf32>
    %514 = arith.divf %512, %513 : vector<1x16xf32>
    %515 = vector.shape_cast %514 : vector<1x16xf32> to vector<1x16xf32>
    %516 = vector.broadcast %515 : vector<1x16xf32> to vector<8x16xf32>
    %c0_194 = arith.constant 0 : index
    %c0_195 = arith.constant 0 : index
    %c0_196 = arith.constant 0 : index
    %517 = vector.load %arg8[%c0_194, %c0_195, %c0_196] : memref<1x8x16xf32, #tpu.memory_space<vmem>>, vector<1x8x16xf32>
    %518 = vector.shape_cast %517 : vector<1x8x16xf32> to vector<8x16xf32>
    %519 = vector.shape_cast %516 : vector<8x16xf32> to vector<1x8x16xf32>
    tpu.vector_store %arg8[%c0_194, %c0_195, %c0_196], %519 {strides = array<i32>} : memref<1x8x16xf32, #tpu.memory_space<vmem>>, vector<1x8x16xf32>,
    return
  }
  func.func @transform_0(%arg0: i32) -> i32 {
    %c0_i32 = arith.constant 0 : i32
    %c0_i32_0 = arith.constant 0 : i32
    return %c0_i32 : i32
  }
  func.func @transform_1(%arg0: i32) -> (i32, i32, i32) {
    %c0_i32 = arith.constant 0 : i32
    %c0_i32_0 = arith.constant 0 : i32
    %c0_i32_1 = arith.constant 0 : i32
    return %arg0, %c0_i32, %c0_i32_0 : i32, i32, i32
  }
  func.func @transform_2(%arg0: i32) -> (i32, i32, i32) {
    %c0_i32 = arith.constant 0 : i32
    %c0_i32_0 = arith.constant 0 : i32
    %c0_i32_1 = arith.constant 0 : i32
    return %arg0, %c0_i32, %c0_i32_0 : i32, i32, i32
  }
  func.func @transform_3(%arg0: i32) -> (i32, i32, i32, i32) {
    %c0_i32 = arith.constant 0 : i32
    %c0_i32_0 = arith.constant 0 : i32
    %c0_i32_1 = arith.constant 0 : i32
    %c0_i32_2 = arith.constant 0 : i32
    return %arg0, %c0_i32, %c0_i32_0, %c0_i32_1 : i32, i32, i32, i32
  }
  func.func @transform_4(%arg0: i32) -> (i32, i32, i32) {
    %c0_i32 = arith.constant 0 : i32
    %c0_i32_0 = arith.constant 0 : i32
    %c0_i32_1 = arith.constant 0 : i32
    %c0_i32_2 = arith.constant 0 : i32
    return %c0_i32, %c0_i32_0, %c0_i32_1 : i32, i32, i32
  }
  func.func @transform_5(%arg0: i32) -> (i32, i32, i32) {
    %c0_i32 = arith.constant 0 : i32
    %c0_i32_0 = arith.constant 0 : i32
    %c0_i32_1 = arith.constant 0 : i32
    %c0_i32_2 = arith.constant 0 : i32
    return %c0_i32, %c0_i32_0, %c0_i32_1 : i32, i32, i32
  }
  func.func @transform_6(%arg0: i32) -> (i32, i32, i32) {
    %c0_i32 = arith.constant 0 : i32
    %c0_i32_0 = arith.constant 0 : i32
    %c0_i32_1 = arith.constant 0 : i32
    %c0_i32_2 = arith.constant 0 : i32
    return %c0_i32, %c0_i32_0, %c0_i32_1 : i32, i32, i32
  }
  func.func @transform_7(%arg0: i32) -> (i32, i32, i32) {
    %c0_i32 = arith.constant 0 : i32
    %c0_i32_0 = arith.constant 0 : i32
    %c0_i32_1 = arith.constant 0 : i32
    return %arg0, %c0_i32, %c0_i32_0 : i32, i32, i32
  }
}

</mosaic_0001>

<llo_original>
// kernel: tpu_custom_call.1
$region0: #{tpu_custom_call.1}
  #allocation0 [shape = 'u32[]', space=smem, size = 0x4, offset = 0x4, fixed_abs, tag = 'smem constant byte address 0x4 - core index']
  #allocation1 [shape = 'u32[144,128]{1,0:T(1,128)}', space=vmem, size = 0x12000, scoped, tag = 'internal scratch']
  %s0 = inlined_call_operand.vmem [shape: f32[7], index: 0, kind: input, shape index: {}]
  %s1 = inlined_call_operand.vmem [shape: f32[2,16,16], index: 1, kind: input, shape index: {}]
  %s2 = inlined_call_operand.vmem [shape: f32[2,16,16], index: 2, kind: input, shape index: {}]
  %s3 = inlined_call_operand.hbm [shape: f32[2,7,16,16], index: 3, kind: input, shape index: {}]
  %s4 = inlined_call_operand.vmem [shape: bf16[7,16,32], index: 4, kind: input, shape index: {}]
  %s5 = inlined_call_operand.vmem [shape: bf16[7,32,16], index: 5, kind: input, shape index: {}]
  %s6 = inlined_call_operand.vmem [shape: f32[7,4,32], index: 6, kind: input, shape index: {}]
  %s7 = inlined_call_operand.hbm [shape: f32[2,8,16], index: 7, kind: output, shape index: {}]
  %s8 = sld [smem:[#allocation0]]
  $region69: #{tpu_custom_call.1} parent=0
    _
  %s10 = ssub.s32 1, %s8
  %s11 = scalar_select 0, %s10, %s8
  $region1: #{tpu_custom_call.1} parent=0
    #allocation2 [shape = 'u8[512]{0}', space=smem, size = 0x200, scoped, tag = 'input window, operand 0, single buffered']
    #allocation3 [shape = 's32[2]{0}', space=sflag, size = 0x8, scoped, tag = 'scoped memory for tpu_custom_call.1']
    #allocation4 [shape = 's32[2]{0}', space=sflag, size = 0x8, scoped, tag = 'scoped memory for tpu_custom_call.1']
    #allocation5 [shape = 's32[2]{0}', space=sflag, size = 0x8, scoped, tag = 'scoped memory for tpu_custom_call.1']
    #allocation6 [shape = 'u8[114688]{0}', space=vmem, size = 0x1c000, scoped, tag = 'input window, operand 3']
    #allocation7 [shape = 'u8[8192]{0}', space=vmem, size = 0x2000, scoped, tag = 'output window, operand 0']
    %12 = vsyncpa [#allocation5], 0
    %13 = vsyncpa [#allocation3], 0
    %s14 = scalar_lea.sflag [#allocation3], 1
    %15 = vsyncpa %s14, 0
    %16 = vsyncpa [#allocation4], 0
    %s17 = scalar_lea.sflag [#allocation4], 1
    %18 = vsyncpa %s17, 0
    loop: start=0, step=1, limit=4
    $region2: #{tpu_custom_call.1} parent=1 // loop_pre_header
      _
    $region3: #{tpu_custom_call.1} parent=1 // loop_header
      %s20 = sphi 0, %s24
      %p21 = scmp.ge.s32.totalorder %s20, 4
      %s28 = sphi 0, %s28
      %s30 = sphi 0, %s28
      %s31 = sphi 0, %s30
      %s45 = sphi 0, %s31
      %s51 = sphi 0, %s53
      %s54 = sphi 0, %s51
      %s55 = sphi 0, %s54
      %s71 = sphi 0, %s55
      %s77 = sphi 0, %s79
      %s80 = sphi 0, %s77
      %s81 = sphi 0, %s80
      %s97 = sphi 0, %s81
      %s103 = sphi 0, %s105
      %s106 = sphi 0, %s103
      %s107 = sphi 0, %s106
      %s123 = sphi 0, %s107
      %s127 = sphi 0, %s127
      %s129 = sphi 0, %s127
      %s130 = sphi 0, %s129
      %s144 = sphi 0, %s130
      %s148 = sphi 0, %s148
      %s150 = sphi 0, %s148
      %s151 = sphi 0, %s150
      %s165 = sphi 0, %s151
      %s169 = sphi 0, %s169
      %s171 = sphi 0, %s169
      %s172 = sphi 0, %s171
      %s186 = sphi 0, %s172
      %s192 = sphi 0, %s194
      %s195 = sphi 0, %s192
      %s196 = sphi 0, %s195
      %s212 = sphi 0, %s196
    $region4: #{tpu_custom_call.1} parent=1 // loop_header_branch
      %23 = sbr.rel (%p21) target = $region8
    $region5: #{tpu_custom_call.1} parent=1 // loop_body
      %s25 = ssub.s32 %s20, 1
      %s26 = ssub.s32 %s20, 2
      %s27 = sadd.s32 %s20, 1
      %s29 = sadd.s32 %s28, 1
      %p32 = scmp.eq.s32.totalorder %s20, 1
      %p33 = scmp.ne.s32.totalorder %s28, %s30
      %p34 = scmp.eq.s32.totalorder %s20, 0
      %p35 = por %p33, %p34
      %p36 = scmp.ne.s32.totalorder %s28, %s30
      %p37 = scmp.eq.s32.totalorder %s25, 1
      %p38 = por %p36, %p37
      %p39 = scmp.ne.s32.totalorder %s30, %s31
      %p40 = scmp.eq.s32.totalorder %s25, 0
      %p41 = por %p39, %p40
      %p42 = scmp.ne.s32.totalorder %s30, %s31
      %p43 = scmp.eq.s32.totalorder %s26, 1
      %p44 = por %p42, %p43
      %p46 = scmp.ne.s32.totalorder %s31, %s45
      %p47 = scmp.eq.s32.totalorder %s26, 0
      %p48 = por %p46, %p47
      %s49 = ssub.s32 %s20, %s27
      %p50 = scmp.eq.s32.totalorder %s49, 0
      %s52 = sadd.s32 %s51, 1
      %s53 = scalar_select %p50, %s51, %s52
      %p56 = pneg %p50
      %p57 = scmp.eq.s32.totalorder %s20, 1
      %p58 = por %p56, %p57
      %p59 = scmp.ne.s32.totalorder %s51, %s54
      %p60 = scmp.eq.s32.totalorder %s20, 0
      %p61 = por %p59, %p60
      %p62 = scmp.ne.s32.totalorder %s51, %s54
      %p63 = scmp.eq.s32.totalorder %s25, 1
      %p64 = por %p62, %p63
      %p65 = scmp.ne.s32.totalorder %s54, %s55
      %p66 = scmp.eq.s32.totalorder %s25, 0
      %p67 = por %p65, %p66
      %p68 = scmp.ne.s32.totalorder %s54, %s55
      %p69 = scmp.eq.s32.totalorder %s26, 1
      %p70 = por %p68, %p69
      %p72 = scmp.ne.s32.totalorder %s55, %s71
      %p73 = scmp.eq.s32.totalorder %s26, 0
      %p74 = por %p72, %p73
      %s75 = ssub.s32 %s20, %s27
      %p76 = scmp.eq.s32.totalorder %s75, 0
      %s78 = sadd.s32 %s77, 1
      %s79 = scalar_select %p76, %s77, %s78
      %p82 = pneg %p76
      %p83 = scmp.eq.s32.totalorder %s20, 1
      %p84 = por %p82, %p83
      %p85 = scmp.ne.s32.totalorder %s77, %s80
      %p86 = scmp.eq.s32.totalorder %s20, 0
      %p87 = por %p85, %p86
      %p88 = scmp.ne.s32.totalorder %s77, %s80
      %p89 = scmp.eq.s32.totalorder %s25, 1
      %p90 = por %p88, %p89
      %p91 = scmp.ne.s32.totalorder %s80, %s81
      %p92 = scmp.eq.s32.totalorder %s25, 0
      %p93 = por %p91, %p92
      %p94 = scmp.ne.s32.totalorder %s80, %s81
      %p95 = scmp.eq.s32.totalorder %s26, 1
      %p96 = por %p94, %p95
      %p98 = scmp.ne.s32.totalorder %s81, %s97
      %p99 = scmp.eq.s32.totalorder %s26, 0
      %p100 = por %p98, %p99
      %s101 = ssub.s32 %s20, %s27
      %p102 = scmp.eq.s32.totalorder %s101, 0
      %s104 = sadd.s32 %s103, 1
      %s105 = scalar_select %p102, %s103, %s104
      %p108 = pneg %p102
      %p109 = scmp.eq.s32.totalorder %s20, 1
      %p110 = por %p108, %p109
      %p111 = scmp.ne.s32.totalorder %s103, %s106
      %p112 = scmp.eq.s32.totalorder %s20, 0
      %p113 = por %p111, %p112
      %p114 = scmp.ne.s32.totalorder %s103, %s106
      %p115 = scmp.eq.s32.totalorder %s25, 1
      %p116 = por %p114, %p115
      %p117 = scmp.ne.s32.totalorder %s106, %s107
      %p118 = scmp.eq.s32.totalorder %s25, 0
      %p119 = por %p117, %p118
      %p120 = scmp.ne.s32.totalorder %s106, %s107
      %p121 = scmp.eq.s32.totalorder %s26, 1
      %p122 = por %p120, %p121
      %p124 = scmp.ne.s32.totalorder %s107, %s123
      %p125 = scmp.eq.s32.totalorder %s26, 0
      %p126 = por %p124, %p125
      %s128 = sadd.s32 %s127, 1
      %p131 = scmp.eq.s32.totalorder %s20, 1
      %p132 = scmp.ne.s32.totalorder %s127, %s129
      %p133 = scmp.eq.s32.totalorder %s20, 0
      %p134 = por %p132, %p133
      %p135 = scmp.ne.s32.totalorder %s127, %s129
      %p136 = scmp.eq.s32.totalorder %s25, 1
      %p137 = por %p135, %p136
      %p138 = scmp.ne.s32.totalorder %s129, %s130
      %p139 = scmp.eq.s32.totalorder %s25, 0
      %p140 = por %p138, %p139
      %p141 = scmp.ne.s32.totalorder %s129, %s130
      %p142 = scmp.eq.s32.totalorder %s26, 1
      %p143 = por %p141, %p142
      %p145 = scmp.ne.s32.totalorder %s130, %s144
      %p146 = scmp.eq.s32.totalorder %s26, 0
      %p147 = por %p145, %p146
      %s149 = sadd.s32 %s148, 1
      %p152 = scmp.eq.s32.totalorder %s20, 1
      %p153 = scmp.ne.s32.totalorder %s148, %s150
      %p154 = scmp.eq.s32.totalorder %s20, 0
      %p155 = por %p153, %p154
      %p156 = scmp.ne.s32.totalorder %s148, %s150
      %p157 = scmp.eq.s32.totalorder %s25, 1
      %p158 = por %p156, %p157
      %p159 = scmp.ne.s32.totalorder %s150, %s151
      %p160 = scmp.eq.s32.totalorder %s25, 0
      %p161 = por %p159, %p160
      %p162 = scmp.ne.s32.totalorder %s150, %s151
      %p163 = scmp.eq.s32.totalorder %s26, 1
      %p164 = por %p162, %p163
      %p166 = scmp.ne.s32.totalorder %s151, %s165
      %p167 = scmp.eq.s32.totalorder %s26, 0
      %p168 = por %p166, %p167
      %s170 = sadd.s32 %s169, 1
      %p173 = scmp.eq.s32.totalorder %s20, 1
      %p174 = scmp.ne.s32.totalorder %s169, %s171
      %p175 = scmp.eq.s32.totalorder %s20, 0
      %p176 = por %p174, %p175
      %p177 = scmp.ne.s32.totalorder %s169, %s171
      %p178 = scmp.eq.s32.totalorder %s25, 1
      %p179 = por %p177, %p178
      %p180 = scmp.ne.s32.totalorder %s171, %s172
      %p181 = scmp.eq.s32.totalorder %s25, 0
      %p182 = por %p180, %p181
      %p183 = scmp.ne.s32.totalorder %s171, %s172
      %p184 = scmp.eq.s32.totalorder %s26, 1
      %p185 = por %p183, %p184
      %p187 = scmp.ne.s32.totalorder %s172, %s186
      %p188 = scmp.eq.s32.totalorder %s26, 0
      %p189 = por %p187, %p188
      %s190 = ssub.s32 %s20, %s27
      %p191 = scmp.eq.s32.totalorder %s190, 0
      %s193 = sadd.s32 %s192, 1
      %s194 = scalar_select %p191, %s192, %s193
      %p197 = pneg %p191
      %p198 = scmp.eq.s32.totalorder %s20, 1
      %p199 = por %p197, %p198
      %p200 = scmp.ne.s32.totalorder %s192, %s195
      %p201 = scmp.eq.s32.totalorder %s20, 0
      %p202 = por %p200, %p201
      %p203 = scmp.ne.s32.totalorder %s192, %s195
      %p204 = scmp.eq.s32.totalorder %s25, 1
      %p205 = por %p203, %p204
      %p206 = scmp.ne.s32.totalorder %s195, %s196
      %p207 = scmp.eq.s32.totalorder %s25, 0
      %p208 = por %p206, %p207
      %p209 = scmp.ne.s32.totalorder %s195, %s196
      %p210 = scmp.eq.s32.totalorder %s26, 1
      %p211 = por %p209, %p210
      %p213 = scmp.ne.s32.totalorder %s196, %s212
      %p214 = scmp.eq.s32.totalorder %s26, 0
      %p215 = por %p213, %p214
      %p216 = scmp.le.s32.totalorder 1, %s20
      %p217 = scmp.lt.s32.totalorder %s20, 3
      %p218 = pnand %p216, %p217
      %p219 = pneg %p218
      // Predicated region
      $region9: #{tpu_custom_call.1} parent=5 // pred_check
        _
      $region10: #{tpu_custom_call.1} parent=5 // pred_check_branch
        %221 = sbr.rel (%p218) target = $region12
      $region11: #{tpu_custom_call.1} parent=5 // pred_region
        %s222 = ssub.s32 %s20, 1
        // Predicated region
        $region13: #{tpu_custom_call.1} parent=11 // pred_check
          %p223 = pneg %p41
        $region14: #{tpu_custom_call.1} parent=11 // pred_check_branch
          %225 = sbr.rel (%p223) target = $region16
        $region15: #{tpu_custom_call.1} parent=11 // pred_region
          %s227 = ssub.s32 16, 16
          %228 = vsyncadd [#allocation5], %s227
          %s230 = sshll.u32 %s0, 4
          %s231 = int_to_ptr.vmem [resolvable:$true] %s230
          %233 = dma.vmem_to_smem %s231, 16, [#allocation2], [#allocation5]
        $region16: #{tpu_custom_call.1} parent=11 // pred_fallthru
          _
        // Predicated region
        $region17: #{tpu_custom_call.1} parent=11 // pred_check
          %p234 = pneg %p140
        $region18: #{tpu_custom_call.1} parent=11 // pred_check_branch
          %236 = sbr.rel (%p234) target = $region20
        $region19: #{tpu_custom_call.1} parent=11 // pred_region
          _
        $region20: #{tpu_custom_call.1} parent=11 // pred_fallthru
          _
        // Predicated region
        $region21: #{tpu_custom_call.1} parent=11 // pred_check
          %p237 = pneg %p161
        $region22: #{tpu_custom_call.1} parent=11 // pred_check_branch
          %239 = sbr.rel (%p237) target = $region24
        $region23: #{tpu_custom_call.1} parent=11 // pred_region
          _
        $region24: #{tpu_custom_call.1} parent=11 // pred_fallthru
          _
        // Predicated region
        $region25: #{tpu_custom_call.1} parent=11 // pred_check
          %p240 = pneg %p182
        $region26: #{tpu_custom_call.1} parent=11 // pred_check_branch
          %242 = sbr.rel (%p240) target = $region28
        $region27: #{tpu_custom_call.1} parent=11 // pred_region
          _
        $region28: #{tpu_custom_call.1} parent=11 // pred_fallthru
          _
      $region12: #{tpu_custom_call.1} parent=5 // pred_fallthru
        _
      %p243 = scmp.lt.s32.totalorder %s20, 2
      // Predicated region
      $region29: #{tpu_custom_call.1} parent=5 // pred_check
        %p244 = pneg %p243
      $region30: #{tpu_custom_call.1} parent=5 // pred_check_branch
        %246 = sbr.rel (%p244) target = $region32
      $region31: #{tpu_custom_call.1} parent=5 // pred_region
        // Predicated region
        $region33: #{tpu_custom_call.1} parent=31 // pred_check
          %p247 = pneg %p61
        $region34: #{tpu_custom_call.1} parent=31 // pred_check_branch
          %249 = sbr.rel (%p247) target = $region36
        $region35: #{tpu_custom_call.1} parent=31 // pred_region
          %p250 = scmp.lt.s32.totalorder %s20, 1
          %s251 = scalar_select %p250, %s20, 1
          %s252 = smul.addr %s251, 2
          %s253 = smul.addr %s252, 8
          %s254 = scalar_lea.vmem %s1, %s253
        $region36: #{tpu_custom_call.1} parent=31 // pred_fallthru
          _
        // Predicated region
        $region37: #{tpu_custom_call.1} parent=31 // pred_check
          %p255 = pneg %p87
        $region38: #{tpu_custom_call.1} parent=31 // pred_check_branch
          %257 = sbr.rel (%p255) target = $region40
        $region39: #{tpu_custom_call.1} parent=31 // pred_region
          %p258 = scmp.lt.s32.totalorder %s20, 1
          %s259 = scalar_select %p258, %s20, 1
          %s260 = smul.addr %s259, 2
          %s261 = smul.addr %s260, 8
          %s262 = scalar_lea.vmem %s2, %s261
        $region40: #{tpu_custom_call.1} parent=31 // pred_fallthru
          _
        // Predicated region
        $region41: #{tpu_custom_call.1} parent=31 // pred_check
          %p263 = pneg %p113
        $region42: #{tpu_custom_call.1} parent=31 // pred_check_branch
          %265 = sbr.rel (%p263) target = $region44
        $region43: #{tpu_custom_call.1} parent=31 // pred_region
          %s266 = sand.u32 %s103, 1
          %s267 = scalar_lea.sflag [#allocation3], %s266
          %s268 = sand.u32 %s103, 1
          %s269 = smul.addr %s268, 112
          %s270 = scalar_lea.vmem [#allocation6], %s269
          %s272 = ssub.s32 1792, 1792
          %273 = vsyncadd %s267, %s272
          %s274 = smul.addr %s20, 14
          %s275 = smul.addr %s274, 128
          %s276 = scalar_lea.hbm %s3, %s275
          %s277 = sshll.u32 %s270, 4
          %s278 = int_to_ptr.vmem [resolvable:$true] %s277
          %283 = dma.hbm_to_vmem [thread:$0]  %s276, 1792, %s278, %s267, 128, 128, 8
        $region44: #{tpu_custom_call.1} parent=31 // pred_fallthru
          _
      $region32: #{tpu_custom_call.1} parent=5 // pred_fallthru
        _
      %p284 = scmp.le.s32.totalorder 1, %s20
      %p285 = scmp.lt.s32.totalorder %s20, 3
      %p286 = pnand %p284, %p285
      %p287 = pneg %p286
      // Predicated region
      $region45: #{tpu_custom_call.1} parent=5 // pred_check
        _
      $region46: #{tpu_custom_call.1} parent=5 // pred_check_branch
        %289 = sbr.rel (%p286) target = $region48
      $region47: #{tpu_custom_call.1} parent=5 // pred_region
        %s290 = ssub.s32 %s20, 1
        // Predicated region
        $region49: #{tpu_custom_call.1} parent=47 // pred_check
          %p291 = pneg %p41
        $region50: #{tpu_custom_call.1} parent=47 // pred_check_branch
          %293 = sbr.rel (%p291) target = $region52
        $region51: #{tpu_custom_call.1} parent=47 // pred_region
          %294 = dma.done [#allocation5], 16
        $region52: #{tpu_custom_call.1} parent=47 // pred_fallthru
          _
        %s295 = sand.u32 %s106, 1
        %s296 = scalar_lea.sflag [#allocation3], %s295
        %s297 = sand.u32 %s106, 1
        %s298 = smul.addr %s297, 112
        %s299 = scalar_lea.vmem [#allocation6], %s298
        // Predicated region
        $region53: #{tpu_custom_call.1} parent=47 // pred_check
          %p300 = pneg %p119
        $region54: #{tpu_custom_call.1} parent=47 // pred_check_branch
          %302 = sbr.rel (%p300) target = $region56
        $region55: #{tpu_custom_call.1} parent=47 // pred_region
          %303 = dma.done %s296, 1792
        $region56: #{tpu_custom_call.1} parent=47 // pred_fallthru
          _
        %304 = sfence
        %p305 = pneg %p41
        %p306 = pneg %p38
        %p307 = scmp.lt.s32.totalorder %s25, 1
        %s308 = scalar_select %p307, %s25, 1
        %s309 = smul.addr %s308, 2
        %s310 = smul.addr %s309, 8
        %s311 = scalar_lea.vmem %s1, %s310
        %p312 = pneg %p67
        %p313 = pneg %p64
        %p314 = scmp.lt.s32.totalorder %s25, 1
        %s315 = scalar_select %p314, %s25, 1
        %s316 = smul.addr %s315, 2
        %s317 = smul.addr %s316, 8
        %s318 = scalar_lea.vmem %s2, %s317
        %p319 = pneg %p93
        %p320 = pneg %p90
        %s321 = sand.u32 %s106, 1
        %s322 = scalar_lea.sflag [#allocation3], %s321
        %s323 = sand.u32 %s106, 1
        %s324 = smul.addr %s323, 112
        %s325 = scalar_lea.vmem [#allocation6], %s324
        %p326 = pneg %p119
        %p327 = pneg %p116
        %p328 = pneg %p140
        %p329 = pneg %p137
        %p330 = pneg %p161
        %p331 = pneg %p158
        %p332 = pneg %p182
        %p333 = pneg %p179
        %p334 = pneg %p208
        %p335 = pneg %p205
        %s336 = sand.u32 %s195, 1
        %s337 = scalar_lea.sflag [#allocation4], %s336
        %s338 = sand.u32 %s195, 1
        %s339 = smul.addr %s338, 8
        %s340 = scalar_lea.vmem [#allocation7], %s339
        %p341 = scmp.lt.s32.totalorder %s25, 1
        %s342 = scalar_select %p341, %s25, 1
        %s343 = smul.addr %s342, 2
        %s344 = smul.addr %s343, 8
        %s345 = scalar_lea.vmem %s1, %s344
        %p346 = scmp.lt.s32.totalorder %s25, 1
        %s347 = scalar_select %p346, %s25, 1
        %s348 = smul.addr %s347, 2
        %s349 = smul.addr %s348, 8
        %s350 = scalar_lea.vmem %s2, %s349
        %v352 = vld [vmem:[%s345] sm:$0xff]
        %v353 = vld [vmem:[%s345 + $0x8] sm:$0xff]
        %v354 = vld [vmem:[%s350] sm:$0xff]
        %v355 = vld [vmem:[%s350 + $0x8] sm:$0xff]
        %v356 = vld [vmem:[%s299] sm:$0xff]
        %v357 = vld [vmem:[%s299 + $0x8] sm:$0xff]
        %v358 = vld [vmem:[%s299 + $0x10] sm:$0xff]
        %v359 = vld [vmem:[%s299 + $0x18] sm:$0xff]
        %v360 = vld [vmem:[%s299 + $0x20] sm:$0xff]
        %v361 = vld [vmem:[%s299 + $0x28] sm:$0xff]
        %v362 = vld [vmem:[%s299 + $0x30] sm:$0xff]
        %v363 = vld [vmem:[%s299 + $0x38] sm:$0xff]
        %v364 = vld [vmem:[%s299 + $0x40] sm:$0xff]
        %v365 = vld [vmem:[%s299 + $0x48] sm:$0xff]
        %v366 = vld [vmem:[%s299 + $0x50] sm:$0xff]
        %v367 = vld [vmem:[%s299 + $0x58] sm:$0xff]
        %v368 = vld [vmem:[%s299 + $0x60] sm:$0xff]
        %v369 = vld [vmem:[%s299 + $0x68] sm:$0xff]
        %v370 = vlaneseq
        %v371 = vshrl.u32 %v370, 7
        %v372 = vadd.s32 %v371, 8
        %v373 = vlaneseq
        %v374 = vand.u32 %v373, 127
        %vm375 = vcmp.eq.s32.totalorder %v371, %v374
        %vm376 = vcmp.eq.s32.totalorder %v372, %v374
        %v377 = vsel %vm375, 1, 0
        %v378 = vsel %vm376, 1, 0
        %v379 = vcvt.s32.f32 %v377
        %v380 = vcvt.s32.f32 %v378
        %v381 = vld [vmem:[%s6] sm:$0xf]
        %s382 = sld [smem:[#allocation2]]
        %s383 = sadd.f32 %s382, 1.0
        %v384 = vstv %s383
        %v385 = vmul.f32 %v384, %v379
        %v386 = vmul.f32 %v384, %v380
        %v387 = vadd.f32 %v352, %v385
        %v388 = vadd.f32 %v353, %v386
        %v389 = vpack.c.bf16 %v388, %v387
        %v390 = vpack.c.bf16 %v355, %v354
        %vm391 = vcmask 130048
        %v393 = vsel %vm391, %v389, 0
        %395 = vmatprep.subr.bf16.mxu0 0
        %396 = vmatpush1.bf16.msra.mxu0 %v390
        %397 = vmatprep.subr.bf16.mxu0 0
        %398 = vmatpush1.bf16.msra.mxu0 0
        %399 = vmatprep.subr.bf16.mxu0 0
        %400 = vmatpush1.bf16.msra.mxu0 0
        %401 = vmatprep.subr.bf16.mxu0 0
        %402 = vmatpush1.bf16.msra.mxu0 0
        %403 = vmatprep.subr.bf16.mxu0 0
        %404 = vmatpush1.bf16.msra.mxu0 0
        %405 = vmatprep.subr.bf16.mxu0 0
        %406 = vmatpush1.bf16.msra.mxu0 0
        %407 = vmatprep.subr.bf16.mxu0 0
        %408 = vmatpush1.bf16.msra.mxu0 0
        %409 = vmatprep.subr.bf16.mxu0 0
        %410 = vmatpush1.bf16.msra.mxu0 0
        %411 = vmatprep.subr.bf16.mxu0 0
        %412 = vmatpush1.bf16.msra.mxu0 0
        %413 = vmatprep.subr.bf16.mxu0 0
        %414 = vmatpush1.bf16.msra.mxu0 0
        %415 = vmatprep.subr.bf16.mxu0 0
        %416 = vmatpush1.bf16.msra.mxu0 0
        %417 = vmatprep.subr.bf16.mxu0 0
        %418 = vmatpush1.bf16.msra.mxu0 0
        %419 = vmatprep.subr.bf16.mxu0 0
        %420 = vmatpush1.bf16.msra.mxu0 0
        %421 = vmatprep.subr.bf16.mxu0 0
        %422 = vmatpush1.bf16.msra.mxu0 0
        %423 = vmatprep.subr.bf16.mxu0 0
        %424 = vmatpush1.bf16.msra.mxu0 0
        %425 = vmatprep.subr.bf16.mxu0 0
        %426 = vmatpush1.bf16.msra.mxu0 0
        %427 = vmatprep.mubr.bf16.mxu0 0
        %428 = vmatmul.mubr.bf16.gmra.mrb[0].mxu0 %v393
        %v429 = vpop.f32.mrb[0].mxu0
        %v430 = vadd.f32 0.0, %v429
        %v431 = vpop.f32.mrb[0].mxu0
        %v432 = vpop.f32.mrb[0].mxu0
        %v433 = vadd.f32 0.0, %v432
        %v434 = vpop.f32.mrb[0].mxu0
        %435 = vdwg.mxu0
        %v436 = vpack.c.bf16 %v433, %v430
        %v437 = vld [vmem:[%s4] sm:$0xf]
        %v438 = vld [vmem:[%s4 + $0x4] sm:$0xf]
        %v441 = vunpack.c.l.b16 %v437
        %v442 = vunpack.c.l.b16 %v438
        %v443 = vpack.c.b16 %v442, %v441
        %v446 = vsel %vm391, %v436, 0
        %448 = vmatprep.subr.bf16.mxu0 0
        %449 = vmatpush1.bf16.msra.mxu0 %v443
        %450 = vmatprep.subr.bf16.mxu0 0
        %451 = vmatpush1.bf16.msra.mxu0 0
        %452 = vmatprep.subr.bf16.mxu0 0
        %453 = vmatpush1.bf16.msra.mxu0 0
        %454 = vmatprep.subr.bf16.mxu0 0
        %455 = vmatpush1.bf16.msra.mxu0 0
        %456 = vmatprep.subr.bf16.mxu0 0
        %457 = vmatpush1.bf16.msra.mxu0 0
        %458 = vmatprep.subr.bf16.mxu0 0
        %459 = vmatpush1.bf16.msra.mxu0 0
        %460 = vmatprep.subr.bf16.mxu0 0
        %461 = vmatpush1.bf16.msra.mxu0 0
        %462 = vmatprep.subr.bf16.mxu0 0
        %463 = vmatpush1.bf16.msra.mxu0 0
        %464 = vmatprep.subr.bf16.mxu0 0
        %465 = vmatpush1.bf16.msra.mxu0 0
        %466 = vmatprep.subr.bf16.mxu0 0
        %467 = vmatpush1.bf16.msra.mxu0 0
        %468 = vmatprep.subr.bf16.mxu0 0
        %469 = vmatpush1.bf16.msra.mxu0 0
        %470 = vmatprep.subr.bf16.mxu0 0
        %471 = vmatpush1.bf16.msra.mxu0 0
        %472 = vmatprep.subr.bf16.mxu0 0
        %473 = vmatpush1.bf16.msra.mxu0 0
        %474 = vmatprep.subr.bf16.mxu0 0
        %475 = vmatpush1.bf16.msra.mxu0 0
        %476 = vmatprep.subr.bf16.mxu0 0
        %477 = vmatpush1.bf16.msra.mxu0 0
        %478 = vmatprep.subr.bf16.mxu0 0
        %479 = vmatpush1.bf16.msra.mxu0 0
        %480 = vmatprep.mubr.bf16.mxu0 0
        %481 = vmatmul.mubr.bf16.gmra.mrb[0].mxu0 %v446
        %v482 = vpop.f32.mrb[0].mxu0
        %v483 = vadd.f32 0.0, %v482
        %v484 = vpop.f32.mrb[0].mxu0
        %v485 = vpop.f32.mrb[0].mxu0
        %v486 = vadd.f32 0.0, %v485
        %v487 = vpop.f32.mrb[0].mxu0
        %488 = vdwg.mxu0
        %vm489 = vcmask 261120
        %v490 = vsel %vm489, %v483, 0.0
        %v491 = vsel %vm489, %v486, 0.0
        %v492 = vadd.f32 %v490, %v491
        %v493 = vrot.slane %v492, 4
        %v494 = vadd.f32 %v492, %v493
        %v495 = vrot.slane %v494, 2
        %v496 = vadd.f32 %v494, %v495
        %v497 = vrot.slane %v496, 1
        %v498 = vadd.f32 %v496, %v497
        %v499 = vrcp.pop 16.0
        %v500 = vmul.f32 %v498, %v499
        %v501 = vmul.f32 %v483, %v483
        %v502 = vmul.f32 %v486, %v486
        %v503 = vsel %vm489, %v501, 0.0
        %v504 = vsel %vm489, %v502, 0.0
        %v505 = vadd.f32 %v503, %v504
        %v506 = vrot.slane %v505, 4
        %v507 = vadd.f32 %v505, %v506
        %v508 = vrot.slane %v507, 2
        %v509 = vadd.f32 %v507, %v508
        %v510 = vrot.slane %v509, 1
        %v511 = vadd.f32 %v509, %v510
        %v512 = vmul.f32 %v511, %v499
        %v513 = vmul.f32 %v500, %v500
        %v514 = vsub.f32 %v512, %v513
        %v515 = vmax.f32 %v514, 0.0
        %v516 = vadd.f32 %v515, 1e-05
        %v517 = vrsqrt.pop %v516
        %v518 = vmul.f32 %v381, %v517
        %v519 = vmul.f32 %v500, %v518
        %v521 = vrot.slane %v519, 7
        %v523 = vsub.f32 %v381, %v521
        %v524 = vlaneseq
        %v525 = vshrl.u32 %v524, 7
        %v526 = vsub.s32 0, %v525
        %v527 = vrot.slane %v518, %v526
        %v528 = vmul.f32 %v483, %v527
        %v529 = vmul.f32 %v486, %v527
        %v530 = vlaneseq
        %v531 = vshrl.u32 %v530, 7
        %v532 = vsub.s32 1, %v531
        %v533 = vrot.slane %v523, %v532
        %v534 = vadd.f32 %v528, %v533
        %v535 = vadd.f32 %v529, %v533
        %v536 = vmax.f32 %v534, 0.0
        %v537 = vmax.f32 %v535, 0.0
        %v538 = vpack.c.bf16 %v537, %v536
        %v539 = vld [vmem:[%s5] sm:$0xf]
        %v540 = vld [vmem:[%s5 + $0x4] sm:$0xf]
        %v541 = vld [vmem:[%s5 + $0x8] sm:$0xf]
        %v542 = vld [vmem:[%s5 + $0xc] sm:$0xf]
        %v547 = vunpack.c.l.b16 %v539
        %v548 = vunpack.c.l.b16 %v540
        %v549 = vunpack.c.l.b16 %v541
        %v550 = vunpack.c.l.b16 %v542
        %v551 = vpack.c.b16 %v548, %v547
        %v552 = vpack.c.b16 %v550, %v549
        %v556 = vsel %vm489, %v538, 0
        %558 = vmatprep.subr.bf16.mxu0 0
        %559 = vmatpush1.bf16.msra.mxu0 %v551
        %560 = vmatprep.subr.bf16.mxu0 0
        %561 = vmatpush1.bf16.msra.mxu0 %v552
        %562 = vmatprep.subr.bf16.mxu0 0
        %563 = vmatpush1.bf16.msra.mxu0 0
        %564 = vmatprep.subr.bf16.mxu0 0
        %565 = vmatpush1.bf16.msra.mxu0 0
        %566 = vmatprep.subr.bf16.mxu0 0
        %567 = vmatpush1.bf16.msra.mxu0 0
        %568 = vmatprep.subr.bf16.mxu0 0
        %569 = vmatpush1.bf16.msra.mxu0 0
        %570 = vmatprep.subr.bf16.mxu0 0
        %571 = vmatpush1.bf16.msra.mxu0 0
        %572 = vmatprep.subr.bf16.mxu0 0
        %573 = vmatpush1.bf16.msra.mxu0 0
        %574 = vmatprep.subr.bf16.mxu0 0
        %575 = vmatpush1.bf16.msra.mxu0 0
        %576 = vmatprep.subr.bf16.mxu0 0
        %577 = vmatpush1.bf16.msra.mxu0 0
        %578 = vmatprep.subr.bf16.mxu0 0
        %579 = vmatpush1.bf16.msra.mxu0 0
        %580 = vmatprep.subr.bf16.mxu0 0
        %581 = vmatpush1.bf16.msra.mxu0 0
        %582 = vmatprep.subr.bf16.mxu0 0
        %583 = vmatpush1.bf16.msra.mxu0 0
        %584 = vmatprep.subr.bf16.mxu0 0
        %585 = vmatpush1.bf16.msra.mxu0 0
        %586 = vmatprep.subr.bf16.mxu0 0
        %587 = vmatpush1.bf16.msra.mxu0 0
        %588 = vmatprep.subr.bf16.mxu0 0
        %589 = vmatpush1.bf16.msra.mxu0 0
        %590 = vmatprep.mubr.bf16.mxu0 0
        %591 = vmatmul.mubr.bf16.gmra.mrb[0].mxu0 %v556
        %v592 = vpop.f32.mrb[0].mxu0
        %v593 = vadd.f32 0.0, %v592
        %v594 = vpop.f32.mrb[0].mxu0
        %v595 = vpop.f32.mrb[0].mxu0
        %v596 = vadd.f32 0.0, %v595
        %v597 = vpop.f32.mrb[0].mxu0
        %598 = vdwg.mxu0
        %v599 = vsel %vm391, %v593, 0.0
        %v600 = vsel %vm391, %v596, 0.0
        %v601 = vadd.f32 %v599, %v600
        %v602 = vrot.slane %v601, 4
        %v603 = vadd.f32 %v601, %v602
        %v604 = vrot.slane %v603, 2
        %v605 = vadd.f32 %v603, %v604
        %v606 = vrot.slane %v605, 1
        %v607 = vadd.f32 %v605, %v606
        %v608 = vmul.f32 %v607, %v499
        %v609 = vmul.f32 %v593, %v593
        %v610 = vmul.f32 %v596, %v596
        %v611 = vsel %vm391, %v609, 0.0
        %v612 = vsel %vm391, %v610, 0.0
        %v613 = vadd.f32 %v611, %v612
        %v614 = vrot.slane %v613, 4
        %v615 = vadd.f32 %v613, %v614
        %v616 = vrot.slane %v615, 2
        %v617 = vadd.f32 %v615, %v616
        %v618 = vrot.slane %v617, 1
        %v619 = vadd.f32 %v617, %v618
        %v620 = vmul.f32 %v619, %v499
        %v621 = vmul.f32 %v608, %v608
        %v622 = vsub.f32 %v620, %v621
        %v623 = vmax.f32 %v622, 0.0
        %v624 = vadd.f32 %v623, 1e-05
        %v625 = vrsqrt.pop %v624
        %v626 = vmul.f32 %v381, %v625
        %v627 = vmul.f32 %v608, %v626
        %v629 = vrot.slane %v627, 7
        %v631 = vsub.f32 %v381, %v629
        %v632 = vlaneseq
        %v633 = vshrl.u32 %v632, 7
        %v634 = vsub.s32 2, %v633
        %v635 = vrot.slane %v626, %v634
        %v636 = vmul.f32 %v593, %v635
        %v637 = vmul.f32 %v596, %v635
        %v638 = vlaneseq
        %v639 = vshrl.u32 %v638, 7
        %v640 = vsub.s32 3, %v639
        %v641 = vrot.slane %v631, %v640
        %v642 = vadd.f32 %v636, %v641
        %v643 = vadd.f32 %v637, %v641
        %v644 = vmul.f32 %v642, %v356
        %v645 = vmul.f32 %v643, %v357
        %v646 = vmax.f32 %v644, 0.0
        %v647 = vmax.f32 %v645, 0.0
        %s648 = scalar_lea.vmem %s6, 4
        %v649 = vld [vmem:[%s648] sm:$0xf]
        %s650 = sld [smem:[#allocation2 + $0x1]]
        %s651 = sadd.f32 %s650, 1.0
        %v652 = vstv %s651
        %v653 = vmul.f32 %v652, %v379
        %v654 = vmul.f32 %v652, %v380
        %v655 = vadd.f32 %v352, %v653
        %v656 = vadd.f32 %v353, %v654
        %v657 = vpack.c.bf16 %v656, %v655
        %v658 = vpack.c.bf16 %v647, %v646
        %v660 = vsel %vm391, %v657, 0
        %662 = vmatprep.subr.bf16.mxu0 0
        %663 = vmatpush1.bf16.msra.mxu0 %v658
        %664 = vmatprep.subr.bf16.mxu0 0
        %665 = vmatpush1.bf16.msra.mxu0 0
        %666 = vmatprep.subr.bf16.mxu0 0
        %667 = vmatpush1.bf16.msra.mxu0 0
        %668 = vmatprep.subr.bf16.mxu0 0
        %669 = vmatpush1.bf16.msra.mxu0 0
        %670 = vmatprep.subr.bf16.mxu0 0
        %671 = vmatpush1.bf16.msra.mxu0 0
        %672 = vmatprep.subr.bf16.mxu0 0
        %673 = vmatpush1.bf16.msra.mxu0 0
        %674 = vmatprep.subr.bf16.mxu0 0
        %675 = vmatpush1.bf16.msra.mxu0 0
        %676 = vmatprep.subr.bf16.mxu0 0
        %677 = vmatpush1.bf16.msra.mxu0 0
        %678 = vmatprep.subr.bf16.mxu0 0
        %679 = vmatpush1.bf16.msra.mxu0 0
        %680 = vmatprep.subr.bf16.mxu0 0
        %681 = vmatpush1.bf16.msra.mxu0 0
        %682 = vmatprep.subr.bf16.mxu0 0
        %683 = vmatpush1.bf16.msra.mxu0 0
        %684 = vmatprep.subr.bf16.mxu0 0
        %685 = vmatpush1.bf16.msra.mxu0 0
        %686 = vmatprep.subr.bf16.mxu0 0
        %687 = vmatpush1.bf16.msra.mxu0 0
        %688 = vmatprep.subr.bf16.mxu0 0
        %689 = vmatpush1.bf16.msra.mxu0 0
        %690 = vmatprep.subr.bf16.mxu0 0
        %691 = vmatpush1.bf16.msra.mxu0 0
        %692 = vmatprep.subr.bf16.mxu0 0
        %693 = vmatpush1.bf16.msra.mxu0 0
        %694 = vmatprep.mubr.bf16.mxu0 0
        %695 = vmatmul.mubr.bf16.gmra.mrb[0].mxu0 %v660
        %v696 = vpop.f32.mrb[0].mxu0
        %v697 = vadd.f32 0.0, %v696
        %v698 = vpop.f32.mrb[0].mxu0
        %v699 = vpop.f32.mrb[0].mxu0
        %v700 = vadd.f32 0.0, %v699
        %v701 = vpop.f32.mrb[0].mxu0
        %702 = vdwg.mxu0
        %v703 = vpack.c.bf16 %v700, %v697
        %s704 = scalar_lea.vmem %s4, 8
        %v705 = vld [vmem:[%s704] sm:$0xf]
        %v706 = vld [vmem:[%s704 + $0x4] sm:$0xf]
        %v709 = vunpack.c.l.b16 %v705
        %v710 = vunpack.c.l.b16 %v706
        %v711 = vpack.c.b16 %v710, %v709
        %v714 = vsel %vm391, %v703, 0
        %716 = vmatprep.subr.bf16.mxu0 0
        %717 = vmatpush1.bf16.msra.mxu0 %v711
        %718 = vmatprep.subr.bf16.mxu0 0
        %719 = vmatpush1.bf16.msra.mxu0 0
        %720 = vmatprep.subr.bf16.mxu0 0
        %721 = vmatpush1.bf16.msra.mxu0 0
        %722 = vmatprep.subr.bf16.mxu0 0
        %723 = vmatpush1.bf16.msra.mxu0 0
        %724 = vmatprep.subr.bf16.mxu0 0
        %725 = vmatpush1.bf16.msra.mxu0 0
        %726 = vmatprep.subr.bf16.mxu0 0
        %727 = vmatpush1.bf16.msra.mxu0 0
        %728 = vmatprep.subr.bf16.mxu0 0
        %729 = vmatpush1.bf16.msra.mxu0 0
        %730 = vmatprep.subr.bf16.mxu0 0
        %731 = vmatpush1.bf16.msra.mxu0 0
        %732 = vmatprep.subr.bf16.mxu0 0
        %733 = vmatpush1.bf16.msra.mxu0 0
        %734 = vmatprep.subr.bf16.mxu0 0
        %735 = vmatpush1.bf16.msra.mxu0 0
        %736 = vmatprep.subr.bf16.mxu0 0
        %737 = vmatpush1.bf16.msra.mxu0 0
        %738 = vmatprep.subr.bf16.mxu0 0
        %739 = vmatpush1.bf16.msra.mxu0 0
        %740 = vmatprep.subr.bf16.mxu0 0
        %741 = vmatpush1.bf16.msra.mxu0 0
        %742 = vmatprep.subr.bf16.mxu0 0
        %743 = vmatpush1.bf16.msra.mxu0 0
        %744 = vmatprep.subr.bf16.mxu0 0
        %745 = vmatpush1.bf16.msra.mxu0 0
        %746 = vmatprep.subr.bf16.mxu0 0
        %747 = vmatpush1.bf16.msra.mxu0 0
        %748 = vmatprep.mubr.bf16.mxu0 0
        %749 = vmatmul.mubr.bf16.gmra.mrb[0].mxu0 %v714
        %v750 = vpop.f32.mrb[0].mxu0
        %v751 = vadd.f32 0.0, %v750
        %v752 = vpop.f32.mrb[0].mxu0
        %v753 = vpop.f32.mrb[0].mxu0
        %v754 = vadd.f32 0.0, %v753
        %v755 = vpop.f32.mrb[0].mxu0
        %756 = vdwg.mxu0
        %v757 = vsel %vm489, %v751, 0.0
        %v758 = vsel %vm489, %v754, 0.0
        %v759 = vadd.f32 %v757, %v758
        %v760 = vrot.slane %v759, 4
        %v761 = vadd.f32 %v759, %v760
        %v762 = vrot.slane %v761, 2
        %v763 = vadd.f32 %v761, %v762
        %v764 = vrot.slane %v763, 1
        %v765 = vadd.f32 %v763, %v764
        %v766 = vmul.f32 %v765, %v499
        %v767 = vmul.f32 %v751, %v751
        %v768 = vmul.f32 %v754, %v754
        %v769 = vsel %vm489, %v767, 0.0
        %v770 = vsel %vm489, %v768, 0.0
        %v771 = vadd.f32 %v769, %v770
        %v772 = vrot.slane %v771, 4
        %v773 = vadd.f32 %v771, %v772
        %v774 = vrot.slane %v773, 2
        %v775 = vadd.f32 %v773, %v774
        %v776 = vrot.slane %v775, 1
        %v777 = vadd.f32 %v775, %v776
        %v778 = vmul.f32 %v777, %v499
        %v779 = vmul.f32 %v766, %v766
        %v780 = vsub.f32 %v778, %v779
        %v781 = vmax.f32 %v780, 0.0
        %v782 = vadd.f32 %v781, 1e-05
        %v783 = vrsqrt.pop %v782
        %v784 = vmul.f32 %v649, %v783
        %v785 = vmul.f32 %v766, %v784
        %v787 = vrot.slane %v785, 7
        %v789 = vsub.f32 %v649, %v787
        %v790 = vlaneseq
        %v791 = vshrl.u32 %v790, 7
        %v792 = vsub.s32 0, %v791
        %v793 = vrot.slane %v784, %v792
        %v794 = vmul.f32 %v751, %v793
        %v795 = vmul.f32 %v754, %v793
        %v796 = vlaneseq
        %v797 = vshrl.u32 %v796, 7
        %v798 = vsub.s32 1, %v797
        %v799 = vrot.slane %v789, %v798
        %v800 = vadd.f32 %v794, %v799
        %v801 = vadd.f32 %v795, %v799
        %v802 = vmax.f32 %v800, 0.0
        %v803 = vmax.f32 %v801, 0.0
        %v804 = vpack.c.bf16 %v803, %v802
        %s805 = scalar_lea.vmem %s5, 16
        %v806 = vld [vmem:[%s805] sm:$0xf]
        %v807 = vld [vmem:[%s805 + $0x4] sm:$0xf]
        %v808 = vld [vmem:[%s805 + $0x8] sm:$0xf]
        %v809 = vld [vmem:[%s805 + $0xc] sm:$0xf]
        %v814 = vunpack.c.l.b16 %v806
        %v815 = vunpack.c.l.b16 %v807
        %v816 = vunpack.c.l.b16 %v808
        %v817 = vunpack.c.l.b16 %v809
        %v818 = vpack.c.b16 %v815, %v814
        %v819 = vpack.c.b16 %v817, %v816
        %v823 = vsel %vm489, %v804, 0
        %825 = vmatprep.subr.bf16.mxu0 0
        %826 = vmatpush1.bf16.msra.mxu0 %v818
        %827 = vmatprep.subr.bf16.mxu0 0
        %828 = vmatpush1.bf16.msra.mxu0 %v819
        %829 = vmatprep.subr.bf16.mxu0 0
        %830 = vmatpush1.bf16.msra.mxu0 0
        %831 = vmatprep.subr.bf16.mxu0 0
        %832 = vmatpush1.bf16.msra.mxu0 0
        %833 = vmatprep.subr.bf16.mxu0 0
        %834 = vmatpush1.bf16.msra.mxu0 0
        %835 = vmatprep.subr.bf16.mxu0 0
        %836 = vmatpush1.bf16.msra.mxu0 0
        %837 = vmatprep.subr.bf16.mxu0 0
        %838 = vmatpush1.bf16.msra.mxu0 0
        %839 = vmatprep.subr.bf16.mxu0 0
        %840 = vmatpush1.bf16.msra.mxu0 0
        %841 = vmatprep.subr.bf16.mxu0 0
        %842 = vmatpush1.bf16.msra.mxu0 0
        %843 = vmatprep.subr.bf16.mxu0 0
        %844 = vmatpush1.bf16.msra.mxu0 0
        %845 = vmatprep.subr.bf16.mxu0 0
        %846 = vmatpush1.bf16.msra.mxu0 0
        %847 = vmatprep.subr.bf16.mxu0 0
        %848 = vmatpush1.bf16.msra.mxu0 0
        %849 = vmatprep.subr.bf16.mxu0 0
        %850 = vmatpush1.bf16.msra.mxu0 0
        %851 = vmatprep.subr.bf16.mxu0 0
        %852 = vmatpush1.bf16.msra.mxu0 0
        %853 = vmatprep.subr.bf16.mxu0 0
        %854 = vmatpush1.bf16.msra.mxu0 0
        %855 = vmatprep.subr.bf16.mxu0 0
        %856 = vmatpush1.bf16.msra.mxu0 0
        %857 = vmatprep.mubr.bf16.mxu0 0
        %858 = vmatmul.mubr.bf16.gmra.mrb[0].mxu0 %v823
        %v859 = vpop.f32.mrb[0].mxu0
        %v860 = vadd.f32 0.0, %v859
        %v861 = vpop.f32.mrb[0].mxu0
        %v862 = vpop.f32.mrb[0].mxu0
        %v863 = vadd.f32 0.0, %v862
        %v864 = vpop.f32.mrb[0].mxu0
        %865 = vdwg.mxu0
        %v866 = vsel %vm391, %v860, 0.0
        %v867 = vsel %vm391, %v863, 0.0
        %v868 = vadd.f32 %v866, %v867
        %v869 = vrot.slane %v868, 4
        %v870 = vadd.f32 %v868, %v869
        %v871 = vrot.slane %v870, 2
        %v872 = vadd.f32 %v870, %v871
        %v873 = vrot.slane %v872, 1
        %v874 = vadd.f32 %v872, %v873
        %v875 = vmul.f32 %v874, %v499
        %v876 = vmul.f32 %v860, %v860
        %v877 = vmul.f32 %v863, %v863
        %v878 = vsel %vm391, %v876, 0.0
        %v879 = vsel %vm391, %v877, 0.0
        %v880 = vadd.f32 %v878, %v879
        %v881 = vrot.slane %v880, 4
        %v882 = vadd.f32 %v880, %v881
        %v883 = vrot.slane %v882, 2
        %v884 = vadd.f32 %v882, %v883
        %v885 = vrot.slane %v884, 1
        %v886 = vadd.f32 %v884, %v885
        %v887 = vmul.f32 %v886, %v499
        %v888 = vmul.f32 %v875, %v875
        %v889 = vsub.f32 %v887, %v888
        %v890 = vmax.f32 %v889, 0.0
        %v891 = vadd.f32 %v890, 1e-05
        %v892 = vrsqrt.pop %v891
        %v893 = vmul.f32 %v649, %v892
        %v894 = vmul.f32 %v875, %v893
        %v896 = vrot.slane %v894, 7
        %v898 = vsub.f32 %v649, %v896
        %v899 = vlaneseq
        %v900 = vshrl.u32 %v899, 7
        %v901 = vsub.s32 2, %v900
        %v902 = vrot.slane %v893, %v901
        %v903 = vmul.f32 %v860, %v902
        %v904 = vmul.f32 %v863, %v902
        %v905 = vlaneseq
        %v906 = vshrl.u32 %v905, 7
        %v907 = vsub.s32 3, %v906
        %v908 = vrot.slane %v898, %v907
        %v909 = vadd.f32 %v903, %v908
        %v910 = vadd.f32 %v904, %v908
        %v911 = vmul.f32 %v909, %v358
        %v912 = vmul.f32 %v910, %v359
        %v913 = vmax.f32 %v911, 0.0
        %v914 = vmax.f32 %v912, 0.0
        %s915 = scalar_lea.vmem %s6, 8
        %v916 = vld [vmem:[%s915] sm:$0xf]
        %s917 = sld [smem:[#allocation2 + $0x2]]
        %s918 = sadd.f32 %s917, 1.0
        %v919 = vstv %s918
        %v920 = vmul.f32 %v919, %v379
        %v921 = vmul.f32 %v919, %v380
        %v922 = vadd.f32 %v352, %v920
        %v923 = vadd.f32 %v353, %v921
        %v924 = vpack.c.bf16 %v923, %v922
        %v925 = vpack.c.bf16 %v914, %v913
        %v927 = vsel %vm391, %v924, 0
        %929 = vmatprep.subr.bf16.mxu0 0
        %930 = vmatpush1.bf16.msra.mxu0 %v925
        %931 = vmatprep.subr.bf16.mxu0 0
        %932 = vmatpush1.bf16.msra.mxu0 0
        %933 = vmatprep.subr.bf16.mxu0 0
        %934 = vmatpush1.bf16.msra.mxu0 0
        %935 = vmatprep.subr.bf16.mxu0 0
        %936 = vmatpush1.bf16.msra.mxu0 0
        %937 = vmatprep.subr.bf16.mxu0 0
        %938 = vmatpush1.bf16.msra.mxu0 0
        %939 = vmatprep.subr.bf16.mxu0 0
        %940 = vmatpush1.bf16.msra.mxu0 0
        %941 = vmatprep.subr.bf16.mxu0 0
        %942 = vmatpush1.bf16.msra.mxu0 0
        %943 = vmatprep.subr.bf16.mxu0 0
        %944 = vmatpush1.bf16.msra.mxu0 0
        %945 = vmatprep.subr.bf16.mxu0 0
        %946 = vmatpush1.bf16.msra.mxu0 0
        %947 = vmatprep.subr.bf16.mxu0 0
        %948 = vmatpush1.bf16.msra.mxu0 0
        %949 = vmatprep.subr.bf16.mxu0 0
        %950 = vmatpush1.bf16.msra.mxu0 0
        %951 = vmatprep.subr.bf16.mxu0 0
        %952 = vmatpush1.bf16.msra.mxu0 0
        %953 = vmatprep.subr.bf16.mxu0 0
        %954 = vmatpush1.bf16.msra.mxu0 0
        %955 = vmatprep.subr.bf16.mxu0 0
        %956 = vmatpush1.bf16.msra.mxu0 0
        %957 = vmatprep.subr.bf16.mxu0 0
        %958 = vmatpush1.bf16.msra.mxu0 0
        %959 = vmatprep.subr.bf16.mxu0 0
        %960 = vmatpush1.bf16.msra.mxu0 0
        %961 = vmatprep.mubr.bf16.mxu0 0
        %962 = vmatmul.mubr.bf16.gmra.mrb[0].mxu0 %v927
        %v963 = vpop.f32.mrb[0].mxu0
        %v964 = vadd.f32 0.0, %v963
        %v965 = vpop.f32.mrb[0].mxu0
        %v966 = vpop.f32.mrb[0].mxu0
        %v967 = vadd.f32 0.0, %v966
        %v968 = vpop.f32.mrb[0].mxu0
        %969 = vdwg.mxu0
        %v970 = vpack.c.bf16 %v967, %v964
        %s971 = scalar_lea.vmem %s4, 16
        %v972 = vld [vmem:[%s971] sm:$0xf]
        %v973 = vld [vmem:[%s971 + $0x4] sm:$0xf]
        %v976 = vunpack.c.l.b16 %v972
        %v977 = vunpack.c.l.b16 %v973
        %v978 = vpack.c.b16 %v977, %v976
        %v981 = vsel %vm391, %v970, 0
        %983 = vmatprep.subr.bf16.mxu0 0
        %984 = vmatpush1.bf16.msra.mxu0 %v978
        %985 = vmatprep.subr.bf16.mxu0 0
        %986 = vmatpush1.bf16.msra.mxu0 0
        %987 = vmatprep.subr.bf16.mxu0 0
        %988 = vmatpush1.bf16.msra.mxu0 0
        %989 = vmatprep.subr.bf16.mxu0 0
        %990 = vmatpush1.bf16.msra.mxu0 0
        %991 = vmatprep.subr.bf16.mxu0 0
        %992 = vmatpush1.bf16.msra.mxu0 0
        %993 = vmatprep.subr.bf16.mxu0 0
        %994 = vmatpush1.bf16.msra.mxu0 0
        %995 = vmatprep.subr.bf16.mxu0 0
        %996 = vmatpush1.bf16.msra.mxu0 0
        %997 = vmatprep.subr.bf16.mxu0 0
        %998 = vmatpush1.bf16.msra.mxu0 0
        %999 = vmatprep.subr.bf16.mxu0 0
        %1000 = vmatpush1.bf16.msra.mxu0 0
        %1001 = vmatprep.subr.bf16.mxu0 0
        %1002 = vmatpush1.bf16.msra.mxu0 0
        %1003 = vmatprep.subr.bf16.mxu0 0
        %1004 = vmatpush1.bf16.msra.mxu0 0
        %1005 = vmatprep.subr.bf16.mxu0 0
        %1006 = vmatpush1.bf16.msra.mxu0 0
        %1007 = vmatprep.subr.bf16.mxu0 0
        %1008 = vmatpush1.bf16.msra.mxu0 0
        %1009 = vmatprep.subr.bf16.mxu0 0
        %1010 = vmatpush1.bf16.msra.mxu0 0
        %1011 = vmatprep.subr.bf16.mxu0 0
        %1012 = vmatpush1.bf16.msra.mxu0 0
        %1013 = vmatprep.subr.bf16.mxu0 0
        %1014 = vmatpush1.bf16.msra.mxu0 0
        %1015 = vmatprep.mubr.bf16.mxu0 0
        %1016 = vmatmul.mubr.bf16.gmra.mrb[0].mxu0 %v981
        %v1017 = vpop.f32.mrb[0].mxu0
        %v1018 = vadd.f32 0.0, %v1017
        %v1019 = vpop.f32.mrb[0].mxu0
        %v1020 = vpop.f32.mrb[0].mxu0
        %v1021 = vadd.f32 0.0, %v1020
        %v1022 = vpop.f32.mrb[0].mxu0
        %1023 = vdwg.mxu0
        %v1024 = vsel %vm489, %v1018, 0.0
        %v1025 = vsel %vm489, %v1021, 0.0
        %v1026 = vadd.f32 %v1024, %v1025
        %v1027 = vrot.slane %v1026, 4
        %v1028 = vadd.f32 %v1026, %v1027
        %v1029 = vrot.slane %v1028, 2
        %v1030 = vadd.f32 %v1028, %v1029
        %v1031 = vrot.slane %v1030, 1
        %v1032 = vadd.f32 %v1030, %v1031
        %v1033 = vmul.f32 %v1032, %v499
        %v1034 = vmul.f32 %v1018, %v1018
        %v1035 = vmul.f32 %v1021, %v1021
        %v1036 = vsel %vm489, %v1034, 0.0
        %v1037 = vsel %vm489, %v1035, 0.0
        %v1038 = vadd.f32 %v1036, %v1037
        %v1039 = vrot.slane %v1038, 4
        %v1040 = vadd.f32 %v1038, %v1039
        %v1041 = vrot.slane %v1040, 2
        %v1042 = vadd.f32 %v1040, %v1041
        %v1043 = vrot.slane %v1042, 1
        %v1044 = vadd.f32 %v1042, %v1043
        %v1045 = vmul.f32 %v1044, %v499
        %v1046 = vmul.f32 %v1033, %v1033
        %v1047 = vsub.f32 %v1045, %v1046
        %v1048 = vmax.f32 %v1047, 0.0
        %v1049 = vadd.f32 %v1048, 1e-05
        %v1050 = vrsqrt.pop %v1049
        %v1051 = vmul.f32 %v916, %v1050
        %v1052 = vmul.f32 %v1033, %v1051
        %v1054 = vrot.slane %v1052, 7
        %v1056 = vsub.f32 %v916, %v1054
        %v1057 = vlaneseq
        %v1058 = vshrl.u32 %v1057, 7
        %v1059 = vsub.s32 0, %v1058
        %v1060 = vrot.slane %v1051, %v1059
        %v1061 = vmul.f32 %v1018, %v1060
        %v1062 = vmul.f32 %v1021, %v1060
        %v1063 = vlaneseq
        %v1064 = vshrl.u32 %v1063, 7
        %v1065 = vsub.s32 1, %v1064
        %v1066 = vrot.slane %v1056, %v1065
        %v1067 = vadd.f32 %v1061, %v1066
        %v1068 = vadd.f32 %v1062, %v1066
        %v1069 = vmax.f32 %v1067, 0.0
        %v1070 = vmax.f32 %v1068, 0.0
        %v1071 = vpack.c.bf16 %v1070, %v1069
        %s1072 = scalar_lea.vmem %s5, 32
        %v1073 = vld [vmem:[%s1072] sm:$0xf]
        %v1074 = vld [vmem:[%s1072 + $0x4] sm:$0xf]
        %v1075 = vld [vmem:[%s1072 + $0x8] sm:$0xf]
        %v1076 = vld [vmem:[%s1072 + $0xc] sm:$0xf]
        %v1081 = vunpack.c.l.b16 %v1073
        %v1082 = vunpack.c.l.b16 %v1074
        %v1083 = vunpack.c.l.b16 %v1075
        %v1084 = vunpack.c.l.b16 %v1076
        %v1085 = vpack.c.b16 %v1082, %v1081
        %v1086 = vpack.c.b16 %v1084, %v1083
        %v1090 = vsel %vm489, %v1071, 0
        %1092 = vmatprep.subr.bf16.mxu0 0
        %1093 = vmatpush1.bf16.msra.mxu0 %v1085
        %1094 = vmatprep.subr.bf16.mxu0 0
        %1095 = vmatpush1.bf16.msra.mxu0 %v1086
        %1096 = vmatprep.subr.bf16.mxu0 0
        %1097 = vmatpush1.bf16.msra.mxu0 0
        %1098 = vmatprep.subr.bf16.mxu0 0
        %1099 = vmatpush1.bf16.msra.mxu0 0
        %1100 = vmatprep.subr.bf16.mxu0 0
        %1101 = vmatpush1.bf16.msra.mxu0 0
        %1102 = vmatprep.subr.bf16.mxu0 0
        %1103 = vmatpush1.bf16.msra.mxu0 0
        %1104 = vmatprep.subr.bf16.mxu0 0
        %1105 = vmatpush1.bf16.msra.mxu0 0
        %1106 = vmatprep.subr.bf16.mxu0 0
        %1107 = vmatpush1.bf16.msra.mxu0 0
        %1108 = vmatprep.subr.bf16.mxu0 0
        %1109 = vmatpush1.bf16.msra.mxu0 0
        %1110 = vmatprep.subr.bf16.mxu0 0
        %1111 = vmatpush1.bf16.msra.mxu0 0
        %1112 = vmatprep.subr.bf16.mxu0 0
        %1113 = vmatpush1.bf16.msra.mxu0 0
        %1114 = vmatprep.subr.bf16.mxu0 0
        %1115 = vmatpush1.bf16.msra.mxu0 0
        %1116 = vmatprep.subr.bf16.mxu0 0
        %1117 = vmatpush1.bf16.msra.mxu0 0
        %1118 = vmatprep.subr.bf16.mxu0 0
        %1119 = vmatpush1.bf16.msra.mxu0 0
        %1120 = vmatprep.subr.bf16.mxu0 0
        %1121 = vmatpush1.bf16.msra.mxu0 0
        %1122 = vmatprep.subr.bf16.mxu0 0
        %1123 = vmatpush1.bf16.msra.mxu0 0
        %1124 = vmatprep.mubr.bf16.mxu0 0
        %1125 = vmatmul.mubr.bf16.gmra.mrb[0].mxu0 %v1090
        %v1126 = vpop.f32.mrb[0].mxu0
        %v1127 = vadd.f32 0.0, %v1126
        %v1128 = vpop.f32.mrb[0].mxu0
        %v1129 = vpop.f32.mrb[0].mxu0
        %v1130 = vadd.f32 0.0, %v1129
        %v1131 = vpop.f32.mrb[0].mxu0
        %1132 = vdwg.mxu0
        %v1133 = vsel %vm391, %v1127, 0.0
        %v1134 = vsel %vm391, %v1130, 0.0
        %v1135 = vadd.f32 %v1133, %v1134
        %v1136 = vrot.slane %v1135, 4
        %v1137 = vadd.f32 %v1135, %v1136
        %v1138 = vrot.slane %v1137, 2
        %v1139 = vadd.f32 %v1137, %v1138
        %v1140 = vrot.slane %v1139, 1
        %v1141 = vadd.f32 %v1139, %v1140
        %v1142 = vmul.f32 %v1141, %v499
        %v1143 = vmul.f32 %v1127, %v1127
        %v1144 = vmul.f32 %v1130, %v1130
        %v1145 = vsel %vm391, %v1143, 0.0
        %v1146 = vsel %vm391, %v1144, 0.0
        %v1147 = vadd.f32 %v1145, %v1146
        %v1148 = vrot.slane %v1147, 4
        %v1149 = vadd.f32 %v1147, %v1148
        %v1150 = vrot.slane %v1149, 2
        %v1151 = vadd.f32 %v1149, %v1150
        %v1152 = vrot.slane %v1151, 1
        %v1153 = vadd.f32 %v1151, %v1152
        %v1154 = vmul.f32 %v1153, %v499
        %v1155 = vmul.f32 %v1142, %v1142
        %v1156 = vsub.f32 %v1154, %v1155
        %v1157 = vmax.f32 %v1156, 0.0
        %v1158 = vadd.f32 %v1157, 1e-05
        %v1159 = vrsqrt.pop %v1158
        %v1160 = vmul.f32 %v916, %v1159
        %v1161 = vmul.f32 %v1142, %v1160
        %v1163 = vrot.slane %v1161, 7
        %v1165 = vsub.f32 %v916, %v1163
        %v1166 = vlaneseq
        %v1167 = vshrl.u32 %v1166, 7
        %v1168 = vsub.s32 2, %v1167
        %v1169 = vrot.slane %v1160, %v1168
        %v1170 = vmul.f32 %v1127, %v1169
        %v1171 = vmul.f32 %v1130, %v1169
        %v1172 = vlaneseq
        %v1173 = vshrl.u32 %v1172, 7
        %v1174 = vsub.s32 3, %v1173
        %v1175 = vrot.slane %v1165, %v1174
        %v1176 = vadd.f32 %v1170, %v1175
        %v1177 = vadd.f32 %v1171, %v1175
        %v1178 = vmul.f32 %v1176, %v360
        %v1179 = vmul.f32 %v1177, %v361
        %v1180 = vmax.f32 %v1178, 0.0
        %v1181 = vmax.f32 %v1179, 0.0
        %s1182 = scalar_lea.vmem %s6, 12
        %v1183 = vld [vmem:[%s1182] sm:$0xf]
        %s1184 = sld [smem:[#allocation2 + $0x3]]
        %s1185 = sadd.f32 %s1184, 1.0
        %v1186 = vstv %s1185
        %v1187 = vmul.f32 %v1186, %v379
        %v1188 = vmul.f32 %v1186, %v380
        %v1189 = vadd.f32 %v352, %v1187
        %v1190 = vadd.f32 %v353, %v1188
        %v1191 = vpack.c.bf16 %v1190, %v1189
        %v1192 = vpack.c.bf16 %v1181, %v1180
        %v1194 = vsel %vm391, %v1191, 0
        %1196 = vmatprep.subr.bf16.mxu0 0
        %1197 = vmatpush1.bf16.msra.mxu0 %v1192
        %1198 = vmatprep.subr.bf16.mxu0 0
        %1199 = vmatpush1.bf16.msra.mxu0 0
        %1200 = vmatprep.subr.bf16.mxu0 0
        %1201 = vmatpush1.bf16.msra.mxu0 0
        %1202 = vmatprep.subr.bf16.mxu0 0
        %1203 = vmatpush1.bf16.msra.mxu0 0
        %1204 = vmatprep.subr.bf16.mxu0 0
        %1205 = vmatpush1.bf16.msra.mxu0 0
        %1206 = vmatprep.subr.bf16.mxu0 0
        %1207 = vmatpush1.bf16.msra.mxu0 0
        %1208 = vmatprep.subr.bf16.mxu0 0
        %1209 = vmatpush1.bf16.msra.mxu0 0
        %1210 = vmatprep.subr.bf16.mxu0 0
        %1211 = vmatpush1.bf16.msra.mxu0 0
        %1212 = vmatprep.subr.bf16.mxu0 0
        %1213 = vmatpush1.bf16.msra.mxu0 0
        %1214 = vmatprep.subr.bf16.mxu0 0
        %1215 = vmatpush1.bf16.msra.mxu0 0
        %1216 = vmatprep.subr.bf16.mxu0 0
        %1217 = vmatpush1.bf16.msra.mxu0 0
        %1218 = vmatprep.subr.bf16.mxu0 0
        %1219 = vmatpush1.bf16.msra.mxu0 0
        %1220 = vmatprep.subr.bf16.mxu0 0
        %1221 = vmatpush1.bf16.msra.mxu0 0
        %1222 = vmatprep.subr.bf16.mxu0 0
        %1223 = vmatpush1.bf16.msra.mxu0 0
        %1224 = vmatprep.subr.bf16.mxu0 0
        %1225 = vmatpush1.bf16.msra.mxu0 0
        %1226 = vmatprep.subr.bf16.mxu0 0
        %1227 = vmatpush1.bf16.msra.mxu0 0
        %1228 = vmatprep.mubr.bf16.mxu0 0
        %1229 = vmatmul.mubr.bf16.gmra.mrb[0].mxu0 %v1194
        %v1230 = vpop.f32.mrb[0].mxu0
        %v1231 = vadd.f32 0.0, %v1230
        %v1232 = vpop.f32.mrb[0].mxu0
        %v1233 = vpop.f32.mrb[0].mxu0
        %v1234 = vadd.f32 0.0, %v1233
        %v1235 = vpop.f32.mrb[0].mxu0
        %1236 = vdwg.mxu0
        %v1237 = vpack.c.bf16 %v1234, %v1231
        %s1238 = scalar_lea.vmem %s4, 24
        %v1239 = vld [vmem:[%s1238] sm:$0xf]
        %v1240 = vld [vmem:[%s1238 + $0x4] sm:$0xf]
        %v1243 = vunpack.c.l.b16 %v1239
        %v1244 = vunpack.c.l.b16 %v1240
        %v1245 = vpack.c.b16 %v1244, %v1243
        %v1248 = vsel %vm391, %v1237, 0
        %1250 = vmatprep.subr.bf16.mxu0 0
        %1251 = vmatpush1.bf16.msra.mxu0 %v1245
        %1252 = vmatprep.subr.bf16.mxu0 0
        %1253 = vmatpush1.bf16.msra.mxu0 0
        %1254 = vmatprep.subr.bf16.mxu0 0
        %1255 = vmatpush1.bf16.msra.mxu0 0
        %1256 = vmatprep.subr.bf16.mxu0 0
        %1257 = vmatpush1.bf16.msra.mxu0 0
        %1258 = vmatprep.subr.bf16.mxu0 0
        %1259 = vmatpush1.bf16.msra.mxu0 0
        %1260 = vmatprep.subr.bf16.mxu0 0
        %1261 = vmatpush1.bf16.msra.mxu0 0
        %1262 = vmatprep.subr.bf16.mxu0 0
        %1263 = vmatpush1.bf16.msra.mxu0 0
        %1264 = vmatprep.subr.bf16.mxu0 0
        %1265 = vmatpush1.bf16.msra.mxu0 0
        %1266 = vmatprep.subr.bf16.mxu0 0
        %1267 = vmatpush1.bf16.msra.mxu0 0
        %1268 = vmatprep.subr.bf16.mxu0 0
        %1269 = vmatpush1.bf16.msra.mxu0 0
        %1270 = vmatprep.subr.bf16.mxu0 0
        %1271 = vmatpush1.bf16.msra.mxu0 0
        %1272 = vmatprep.subr.bf16.mxu0 0
        %1273 = vmatpush1.bf16.msra.mxu0 0
        %1274 = vmatprep.subr.bf16.mxu0 0
        %1275 = vmatpush1.bf16.msra.mxu0 0
        %1276 = vmatprep.subr.bf16.mxu0 0
        %1277 = vmatpush1.bf16.msra.mxu0 0
        %1278 = vmatprep.subr.bf16.mxu0 0
        %1279 = vmatpush1.bf16.msra.mxu0 0
        %1280 = vmatprep.subr.bf16.mxu0 0
        %1281 = vmatpush1.bf16.msra.mxu0 0
        %1282 = vmatprep.mubr.bf16.mxu0 0
        %1283 = vmatmul.mubr.bf16.gmra.mrb[0].mxu0 %v1248
        %v1284 = vpop.f32.mrb[0].mxu0
        %v1285 = vadd.f32 0.0, %v1284
        %v1286 = vpop.f32.mrb[0].mxu0
        %v1287 = vpop.f32.mrb[0].mxu0
        %v1288 = vadd.f32 0.0, %v1287
        %v1289 = vpop.f32.mrb[0].mxu0
        %1290 = vdwg.mxu0
        %v1291 = vsel %vm489, %v1285, 0.0
        %v1292 = vsel %vm489, %v1288, 0.0
        %v1293 = vadd.f32 %v1291, %v1292
        %v1294 = vrot.slane %v1293, 4
        %v1295 = vadd.f32 %v1293, %v1294
        %v1296 = vrot.slane %v1295, 2
        %v1297 = vadd.f32 %v1295, %v1296
        %v1298 = vrot.slane %v1297, 1
        %v1299 = vadd.f32 %v1297, %v1298
        %v1300 = vmul.f32 %v1299, %v499
        %v1301 = vmul.f32 %v1285, %v1285
        %v1302 = vmul.f32 %v1288, %v1288
        %v1303 = vsel %vm489, %v1301, 0.0
        %v1304 = vsel %vm489, %v1302, 0.0
        %v1305 = vadd.f32 %v1303, %v1304
        %v1306 = vrot.slane %v1305, 4
        %v1307 = vadd.f32 %v1305, %v1306
        %v1308 = vrot.slane %v1307, 2
        %v1309 = vadd.f32 %v1307, %v1308
        %v1310 = vrot.slane %v1309, 1
        %v1311 = vadd.f32 %v1309, %v1310
        %v1312 = vmul.f32 %v1311, %v499
        %v1313 = vmul.f32 %v1300, %v1300
        %v1314 = vsub.f32 %v1312, %v1313
        %v1315 = vmax.f32 %v1314, 0.0
        %v1316 = vadd.f32 %v1315, 1e-05
        %v1317 = vrsqrt.pop %v1316
        %v1318 = vmul.f32 %v1183, %v1317
        %v1319 = vmul.f32 %v1300, %v1318
        %v1321 = vrot.slane %v1319, 7
        %v1323 = vsub.f32 %v1183, %v1321
        %v1324 = vlaneseq
        %v1325 = vshrl.u32 %v1324, 7
        %v1326 = vsub.s32 0, %v1325
        %v1327 = vrot.slane %v1318, %v1326
        %v1328 = vmul.f32 %v1285, %v1327
        %v1329 = vmul.f32 %v1288, %v1327
        %v1330 = vlaneseq
        %v1331 = vshrl.u32 %v1330, 7
        %v1332 = vsub.s32 1, %v1331
        %v1333 = vrot.slane %v1323, %v1332
        %v1334 = vadd.f32 %v1328, %v1333
        %v1335 = vadd.f32 %v1329, %v1333
        %v1336 = vmax.f32 %v1334, 0.0
        %v1337 = vmax.f32 %v1335, 0.0
        %v1338 = vpack.c.bf16 %v1337, %v1336
        %s1339 = scalar_lea.vmem %s5, 48
        %v1340 = vld [vmem:[%s1339] sm:$0xf]
        %v1341 = vld [vmem:[%s1339 + $0x4] sm:$0xf]
        %v1342 = vld [vmem:[%s1339 + $0x8] sm:$0xf]
        %v1343 = vld [vmem:[%s1339 + $0xc] sm:$0xf]
        %v1348 = vunpack.c.l.b16 %v1340
        %v1349 = vunpack.c.l.b16 %v1341
        %v1350 = vunpack.c.l.b16 %v1342
        %v1351 = vunpack.c.l.b16 %v1343
        %v1352 = vpack.c.b16 %v1349, %v1348
        %v1353 = vpack.c.b16 %v1351, %v1350
        %v1357 = vsel %vm489, %v1338, 0
        %1359 = vmatprep.subr.bf16.mxu0 0
        %1360 = vmatpush1.bf16.msra.mxu0 %v1352
        %1361 = vmatprep.subr.bf16.mxu0 0
        %1362 = vmatpush1.bf16.msra.mxu0 %v1353
        %1363 = vmatprep.subr.bf16.mxu0 0
        %1364 = vmatpush1.bf16.msra.mxu0 0
        %1365 = vmatprep.subr.bf16.mxu0 0
        %1366 = vmatpush1.bf16.msra.mxu0 0
        %1367 = vmatprep.subr.bf16.mxu0 0
        %1368 = vmatpush1.bf16.msra.mxu0 0
        %1369 = vmatprep.subr.bf16.mxu0 0
        %1370 = vmatpush1.bf16.msra.mxu0 0
        %1371 = vmatprep.subr.bf16.mxu0 0
        %1372 = vmatpush1.bf16.msra.mxu0 0
        %1373 = vmatprep.subr.bf16.mxu0 0
        %1374 = vmatpush1.bf16.msra.mxu0 0
        %1375 = vmatprep.subr.bf16.mxu0 0
        %1376 = vmatpush1.bf16.msra.mxu0 0
        %1377 = vmatprep.subr.bf16.mxu0 0
        %1378 = vmatpush1.bf16.msra.mxu0 0
        %1379 = vmatprep.subr.bf16.mxu0 0
        %1380 = vmatpush1.bf16.msra.mxu0 0
        %1381 = vmatprep.subr.bf16.mxu0 0
        %1382 = vmatpush1.bf16.msra.mxu0 0
        %1383 = vmatprep.subr.bf16.mxu0 0
        %1384 = vmatpush1.bf16.msra.mxu0 0
        %1385 = vmatprep.subr.bf16.mxu0 0
        %1386 = vmatpush1.bf16.msra.mxu0 0
        %1387 = vmatprep.subr.bf16.mxu0 0
        %1388 = vmatpush1.bf16.msra.mxu0 0
        %1389 = vmatprep.subr.bf16.mxu0 0
        %1390 = vmatpush1.bf16.msra.mxu0 0
        %1391 = vmatprep.mubr.bf16.mxu0 0
        %1392 = vmatmul.mubr.bf16.gmra.mrb[0].mxu0 %v1357
        %v1393 = vpop.f32.mrb[0].mxu0
        %v1394 = vadd.f32 0.0, %v1393
        %v1395 = vpop.f32.mrb[0].mxu0
        %v1396 = vpop.f32.mrb[0].mxu0
        %v1397 = vadd.f32 0.0, %v1396
        %v1398 = vpop.f32.mrb[0].mxu0
        %1399 = vdwg.mxu0
        %v1400 = vsel %vm391, %v1394, 0.0
        %v1401 = vsel %vm391, %v1397, 0.0
        %v1402 = vadd.f32 %v1400, %v1401
        %v1403 = vrot.slane %v1402, 4
        %v1404 = vadd.f32 %v1402, %v1403
        %v1405 = vrot.slane %v1404, 2
        %v1406 = vadd.f32 %v1404, %v1405
        %v1407 = vrot.slane %v1406, 1
        %v1408 = vadd.f32 %v1406, %v1407
        %v1409 = vmul.f32 %v1408, %v499
        %v1410 = vmul.f32 %v1394, %v1394
        %v1411 = vmul.f32 %v1397, %v1397
        %v1412 = vsel %vm391, %v1410, 0.0
        %v1413 = vsel %vm391, %v1411, 0.0
        %v1414 = vadd.f32 %v1412, %v1413
        %v1415 = vrot.slane %v1414, 4
        %v1416 = vadd.f32 %v1414, %v1415
        %v1417 = vrot.slane %v1416, 2
        %v1418 = vadd.f32 %v1416, %v1417
        %v1419 = vrot.slane %v1418, 1
        %v1420 = vadd.f32 %v1418, %v1419
        %v1421 = vmul.f32 %v1420, %v499
        %v1422 = vmul.f32 %v1409, %v1409
        %v1423 = vsub.f32 %v1421, %v1422
        %v1424 = vmax.f32 %v1423, 0.0
        %v1425 = vadd.f32 %v1424, 1e-05
        %v1426 = vrsqrt.pop %v1425
        %v1427 = vmul.f32 %v1183, %v1426
        %v1428 = vmul.f32 %v1409, %v1427
        %v1430 = vrot.slane %v1428, 7
        %v1432 = vsub.f32 %v1183, %v1430
        %v1433 = vlaneseq
        %v1434 = vshrl.u32 %v1433, 7
        %v1435 = vsub.s32 2, %v1434
        %v1436 = vrot.slane %v1427, %v1435
        %v1437 = vmul.f32 %v1394, %v1436
        %v1438 = vmul.f32 %v1397, %v1436
        %v1439 = vlaneseq
        %v1440 = vshrl.u32 %v1439, 7
        %v1441 = vsub.s32 3, %v1440
        %v1442 = vrot.slane %v1432, %v1441
        %v1443 = vadd.f32 %v1437, %v1442
        %v1444 = vadd.f32 %v1438, %v1442
        %v1445 = vmul.f32 %v1443, %v362
        %v1446 = vmul.f32 %v1444, %v363
        %v1447 = vmax.f32 %v1445, 0.0
        %v1448 = vmax.f32 %v1446, 0.0
        %s1449 = scalar_lea.vmem %s6, 16
        %v1450 = vld [vmem:[%s1449] sm:$0xf]
        %s1451 = sld [smem:[#allocation2 + $0x4]]
        %s1452 = sadd.f32 %s1451, 1.0
        %v1453 = vstv %s1452
        %v1454 = vmul.f32 %v1453, %v379
        %v1455 = vmul.f32 %v1453, %v380
        %v1456 = vadd.f32 %v352, %v1454
        %v1457 = vadd.f32 %v353, %v1455
        %v1458 = vpack.c.bf16 %v1457, %v1456
        %v1459 = vpack.c.bf16 %v1448, %v1447
        %v1461 = vsel %vm391, %v1458, 0
        %1463 = vmatprep.subr.bf16.mxu0 0
        %1464 = vmatpush1.bf16.msra.mxu0 %v1459
        %1465 = vmatprep.subr.bf16.mxu0 0
        %1466 = vmatpush1.bf16.msra.mxu0 0
        %1467 = vmatprep.subr.bf16.mxu0 0
        %1468 = vmatpush1.bf16.msra.mxu0 0
        %1469 = vmatprep.subr.bf16.mxu0 0
        %1470 = vmatpush1.bf16.msra.mxu0 0
        %1471 = vmatprep.subr.bf16.mxu0 0
        %1472 = vmatpush1.bf16.msra.mxu0 0
        %1473 = vmatprep.subr.bf16.mxu0 0
        %1474 = vmatpush1.bf16.msra.mxu0 0
        %1475 = vmatprep.subr.bf16.mxu0 0
        %1476 = vmatpush1.bf16.msra.mxu0 0
        %1477 = vmatprep.subr.bf16.mxu0 0
        %1478 = vmatpush1.bf16.msra.mxu0 0
        %1479 = vmatprep.subr.bf16.mxu0 0
        %1480 = vmatpush1.bf16.msra.mxu0 0
        %1481 = vmatprep.subr.bf16.mxu0 0
        %1482 = vmatpush1.bf16.msra.mxu0 0
        %1483 = vmatprep.subr.bf16.mxu0 0
        %1484 = vmatpush1.bf16.msra.mxu0 0
        %1485 = vmatprep.subr.bf16.mxu0 0
        %1486 = vmatpush1.bf16.msra.mxu0 0
        %1487 = vmatprep.subr.bf16.mxu0 0
        %1488 = vmatpush1.bf16.msra.mxu0 0
        %1489 = vmatprep.subr.bf16.mxu0 0
        %1490 = vmatpush1.bf16.msra.mxu0 0
        %1491 = vmatprep.subr.bf16.mxu0 0
        %1492 = vmatpush1.bf16.msra.mxu0 0
        %1493 = vmatprep.subr.bf16.mxu0 0
        %1494 = vmatpush1.bf16.msra.mxu0 0
        %1495 = vmatprep.mubr.bf16.mxu0 0
        %1496 = vmatmul.mubr.bf16.gmra.mrb[0].mxu0 %v1461
        %v1497 = vpop.f32.mrb[0].mxu0
        %v1498 = vadd.f32 0.0, %v1497
        %v1499 = vpop.f32.mrb[0].mxu0
        %v1500 = vpop.f32.mrb[0].mxu0
        %v1501 = vadd.f32 0.0, %v1500
        %v1502 = vpop.f32.mrb[0].mxu0
        %1503 = vdwg.mxu0
        %v1504 = vpack.c.bf16 %v1501, %v1498
        %s1505 = scalar_lea.vmem %s4, 32
        %v1506 = vld [vmem:[%s1505] sm:$0xf]
        %v1507 = vld [vmem:[%s1505 + $0x4] sm:$0xf]
        %v1510 = vunpack.c.l.b16 %v1506
        %v1511 = vunpack.c.l.b16 %v1507
        %v1512 = vpack.c.b16 %v1511, %v1510
        %v1515 = vsel %vm391, %v1504, 0
        %1517 = vmatprep.subr.bf16.mxu0 0
        %1518 = vmatpush1.bf16.msra.mxu0 %v1512
        %1519 = vmatprep.subr.bf16.mxu0 0
        %1520 = vmatpush1.bf16.msra.mxu0 0
        %1521 = vmatprep.subr.bf16.mxu0 0
        %1522 = vmatpush1.bf16.msra.mxu0 0
        %1523 = vmatprep.subr.bf16.mxu0 0
        %1524 = vmatpush1.bf16.msra.mxu0 0
        %1525 = vmatprep.subr.bf16.mxu0 0
        %1526 = vmatpush1.bf16.msra.mxu0 0
        %1527 = vmatprep.subr.bf16.mxu0 0
        %1528 = vmatpush1.bf16.msra.mxu0 0
        %1529 = vmatprep.subr.bf16.mxu0 0
        %1530 = vmatpush1.bf16.msra.mxu0 0
        %1531 = vmatprep.subr.bf16.mxu0 0
        %1532 = vmatpush1.bf16.msra.mxu0 0
        %1533 = vmatprep.subr.bf16.mxu0 0
        %1534 = vmatpush1.bf16.msra.mxu0 0
        %1535 = vmatprep.subr.bf16.mxu0 0
        %1536 = vmatpush1.bf16.msra.mxu0 0
        %1537 = vmatprep.subr.bf16.mxu0 0
        %1538 = vmatpush1.bf16.msra.mxu0 0
        %1539 = vmatprep.subr.bf16.mxu0 0
        %1540 = vmatpush1.bf16.msra.mxu0 0
        %1541 = vmatprep.subr.bf16.mxu0 0
        %1542 = vmatpush1.bf16.msra.mxu0 0
        %1543 = vmatprep.subr.bf16.mxu0 0
        %1544 = vmatpush1.bf16.msra.mxu0 0
        %1545 = vmatprep.subr.bf16.mxu0 0
        %1546 = vmatpush1.bf16.msra.mxu0 0
        %1547 = vmatprep.subr.bf16.mxu0 0
        %1548 = vmatpush1.bf16.msra.mxu0 0
        %1549 = vmatprep.mubr.bf16.mxu0 0
        %1550 = vmatmul.mubr.bf16.gmra.mrb[0].mxu0 %v1515
        %v1551 = vpop.f32.mrb[0].mxu0
        %v1552 = vadd.f32 0.0, %v1551
        %v1553 = vpop.f32.mrb[0].mxu0
        %v1554 = vpop.f32.mrb[0].mxu0
        %v1555 = vadd.f32 0.0, %v1554
        %v1556 = vpop.f32.mrb[0].mxu0
        %1557 = vdwg.mxu0
        %v1558 = vsel %vm489, %v1552, 0.0
        %v1559 = vsel %vm489, %v1555, 0.0
        %v1560 = vadd.f32 %v1558, %v1559
        %v1561 = vrot.slane %v1560, 4
        %v1562 = vadd.f32 %v1560, %v1561
        %v1563 = vrot.slane %v1562, 2
        %v1564 = vadd.f32 %v1562, %v1563
        %v1565 = vrot.slane %v1564, 1
        %v1566 = vadd.f32 %v1564, %v1565
        %v1567 = vmul.f32 %v1566, %v499
        %v1568 = vmul.f32 %v1552, %v1552
        %v1569 = vmul.f32 %v1555, %v1555
        %v1570 = vsel %vm489, %v1568, 0.0
        %v1571 = vsel %vm489, %v1569, 0.0
        %v1572 = vadd.f32 %v1570, %v1571
        %v1573 = vrot.slane %v1572, 4
        %v1574 = vadd.f32 %v1572, %v1573
        %v1575 = vrot.slane %v1574, 2
        %v1576 = vadd.f32 %v1574, %v1575
        %v1577 = vrot.slane %v1576, 1
        %v1578 = vadd.f32 %v1576, %v1577
        %v1579 = vmul.f32 %v1578, %v499
        %v1580 = vmul.f32 %v1567, %v1567
        %v1581 = vsub.f32 %v1579, %v1580
        %v1582 = vmax.f32 %v1581, 0.0
        %v1583 = vadd.f32 %v1582, 1e-05
        %v1584 = vrsqrt.pop %v1583
        %v1585 = vmul.f32 %v1450, %v1584
        %v1586 = vmul.f32 %v1567, %v1585
        %v1588 = vrot.slane %v1586, 7
        %v1590 = vsub.f32 %v1450, %v1588
        %v1591 = vlaneseq
        %v1592 = vshrl.u32 %v1591, 7
        %v1593 = vsub.s32 0, %v1592
        %v1594 = vrot.slane %v1585, %v1593
        %v1595 = vmul.f32 %v1552, %v1594
        %v1596 = vmul.f32 %v1555, %v1594
        %v1597 = vlaneseq
        %v1598 = vshrl.u32 %v1597, 7
        %v1599 = vsub.s32 1, %v1598
        %v1600 = vrot.slane %v1590, %v1599
        %v1601 = vadd.f32 %v1595, %v1600
        %v1602 = vadd.f32 %v1596, %v1600
        %v1603 = vmax.f32 %v1601, 0.0
        %v1604 = vmax.f32 %v1602, 0.0
        %v1605 = vpack.c.bf16 %v1604, %v1603
        %s1606 = scalar_lea.vmem %s5, 64
        %v1607 = vld [vmem:[%s1606] sm:$0xf]
        %v1608 = vld [vmem:[%s1606 + $0x4] sm:$0xf]
        %v1609 = vld [vmem:[%s1606 + $0x8] sm:$0xf]
        %v1610 = vld [vmem:[%s1606 + $0xc] sm:$0xf]
        %v1615 = vunpack.c.l.b16 %v1607
        %v1616 = vunpack.c.l.b16 %v1608
        %v1617 = vunpack.c.l.b16 %v1609
        %v1618 = vunpack.c.l.b16 %v1610
        %v1619 = vpack.c.b16 %v1616, %v1615
        %v1620 = vpack.c.b16 %v1618, %v1617
        %v1624 = vsel %vm489, %v1605, 0
        %1626 = vmatprep.subr.bf16.mxu0 0
        %1627 = vmatpush1.bf16.msra.mxu0 %v1619
        %1628 = vmatprep.subr.bf16.mxu0 0
        %1629 = vmatpush1.bf16.msra.mxu0 %v1620
        %1630 = vmatprep.subr.bf16.mxu0 0
        %1631 = vmatpush1.bf16.msra.mxu0 0
        %1632 = vmatprep.subr.bf16.mxu0 0
        %1633 = vmatpush1.bf16.msra.mxu0 0
        %1634 = vmatprep.subr.bf16.mxu0 0
        %1635 = vmatpush1.bf16.msra.mxu0 0
        %1636 = vmatprep.subr.bf16.mxu0 0
        %1637 = vmatpush1.bf16.msra.mxu0 0
        %1638 = vmatprep.subr.bf16.mxu0 0
        %1639 = vmatpush1.bf16.msra.mxu0 0
        %1640 = vmatprep.subr.bf16.mxu0 0
        %1641 = vmatpush1.bf16.msra.mxu0 0
        %1642 = vmatprep.subr.bf16.mxu0 0
        %1643 = vmatpush1.bf16.msra.mxu0 0
        %1644 = vmatprep.subr.bf16.mxu0 0
        %1645 = vmatpush1.bf16.msra.mxu0 0
        %1646 = vmatprep.subr.bf16.mxu0 0
        %1647 = vmatpush1.bf16.msra.mxu0 0
        %1648 = vmatprep.subr.bf16.mxu0 0
        %1649 = vmatpush1.bf16.msra.mxu0 0
        %1650 = vmatprep.subr.bf16.mxu0 0
        %1651 = vmatpush1.bf16.msra.mxu0 0
        %1652 = vmatprep.subr.bf16.mxu0 0
        %1653 = vmatpush1.bf16.msra.mxu0 0
        %1654 = vmatprep.subr.bf16.mxu0 0
        %1655 = vmatpush1.bf16.msra.mxu0 0
        %1656 = vmatprep.subr.bf16.mxu0 0
        %1657 = vmatpush1.bf16.msra.mxu0 0
        %1658 = vmatprep.mubr.bf16.mxu0 0
        %1659 = vmatmul.mubr.bf16.gmra.mrb[0].mxu0 %v1624
        %v1660 = vpop.f32.mrb[0].mxu0
        %v1661 = vadd.f32 0.0, %v1660
        %v1662 = vpop.f32.mrb[0].mxu0
        %v1663 = vpop.f32.mrb[0].mxu0
        %v1664 = vadd.f32 0.0, %v1663
        %v1665 = vpop.f32.mrb[0].mxu0
        %1666 = vdwg.mxu0
        %v1667 = vsel %vm391, %v1661, 0.0
        %v1668 = vsel %vm391, %v1664, 0.0
        %v1669 = vadd.f32 %v1667, %v1668
        %v1670 = vrot.slane %v1669, 4
        %v1671 = vadd.f32 %v1669, %v1670
        %v1672 = vrot.slane %v1671, 2
        %v1673 = vadd.f32 %v1671, %v1672
        %v1674 = vrot.slane %v1673, 1
        %v1675 = vadd.f32 %v1673, %v1674
        %v1676 = vmul.f32 %v1675, %v499
        %v1677 = vmul.f32 %v1661, %v1661
        %v1678 = vmul.f32 %v1664, %v1664
        %v1679 = vsel %vm391, %v1677, 0.0
        %v1680 = vsel %vm391, %v1678, 0.0
        %v1681 = vadd.f32 %v1679, %v1680
        %v1682 = vrot.slane %v1681, 4
        %v1683 = vadd.f32 %v1681, %v1682
        %v1684 = vrot.slane %v1683, 2
        %v1685 = vadd.f32 %v1683, %v1684
        %v1686 = vrot.slane %v1685, 1
        %v1687 = vadd.f32 %v1685, %v1686
        %v1688 = vmul.f32 %v1687, %v499
        %v1689 = vmul.f32 %v1676, %v1676
        %v1690 = vsub.f32 %v1688, %v1689
        %v1691 = vmax.f32 %v1690, 0.0
        %v1692 = vadd.f32 %v1691, 1e-05
        %v1693 = vrsqrt.pop %v1692
        %v1694 = vmul.f32 %v1450, %v1693
        %v1695 = vmul.f32 %v1676, %v1694
        %v1697 = vrot.slane %v1695, 7
        %v1699 = vsub.f32 %v1450, %v1697
        %v1700 = vlaneseq
        %v1701 = vshrl.u32 %v1700, 7
        %v1702 = vsub.s32 2, %v1701
        %v1703 = vrot.slane %v1694, %v1702
        %v1704 = vmul.f32 %v1661, %v1703
        %v1705 = vmul.f32 %v1664, %v1703
        %v1706 = vlaneseq
        %v1707 = vshrl.u32 %v1706, 7
        %v1708 = vsub.s32 3, %v1707
        %v1709 = vrot.slane %v1699, %v1708
        %v1710 = vadd.f32 %v1704, %v1709
        %v1711 = vadd.f32 %v1705, %v1709
        %v1712 = vmul.f32 %v1710, %v364
        %v1713 = vmul.f32 %v1711, %v365
        %v1714 = vmax.f32 %v1712, 0.0
        %v1715 = vmax.f32 %v1713, 0.0
        %s1716 = scalar_lea.vmem %s6, 20
        %v1717 = vld [vmem:[%s1716] sm:$0xf]
        %s1718 = sld [smem:[#allocation2 + $0x5]]
        %s1719 = sadd.f32 %s1718, 1.0
        %v1720 = vstv %s1719
        %v1721 = vmul.f32 %v1720, %v379
        %v1722 = vmul.f32 %v1720, %v380
        %v1723 = vadd.f32 %v352, %v1721
        %v1724 = vadd.f32 %v353, %v1722
        %v1725 = vpack.c.bf16 %v1724, %v1723
        %v1726 = vpack.c.bf16 %v1715, %v1714
        %v1728 = vsel %vm391, %v1725, 0
        %1730 = vmatprep.subr.bf16.mxu0 0
        %1731 = vmatpush1.bf16.msra.mxu0 %v1726
        %1732 = vmatprep.subr.bf16.mxu0 0
        %1733 = vmatpush1.bf16.msra.mxu0 0
        %1734 = vmatprep.subr.bf16.mxu0 0
        %1735 = vmatpush1.bf16.msra.mxu0 0
        %1736 = vmatprep.subr.bf16.mxu0 0
        %1737 = vmatpush1.bf16.msra.mxu0 0
        %1738 = vmatprep.subr.bf16.mxu0 0
        %1739 = vmatpush1.bf16.msra.mxu0 0
        %1740 = vmatprep.subr.bf16.mxu0 0
        %1741 = vmatpush1.bf16.msra.mxu0 0
        %1742 = vmatprep.subr.bf16.mxu0 0
        %1743 = vmatpush1.bf16.msra.mxu0 0
        %1744 = vmatprep.subr.bf16.mxu0 0
        %1745 = vmatpush1.bf16.msra.mxu0 0
        %1746 = vmatprep.subr.bf16.mxu0 0
        %1747 = vmatpush1.bf16.msra.mxu0 0
        %1748 = vmatprep.subr.bf16.mxu0 0
        %1749 = vmatpush1.bf16.msra.mxu0 0
        %1750 = vmatprep.subr.bf16.mxu0 0
        %1751 = vmatpush1.bf16.msra.mxu0 0
        %1752 = vmatprep.subr.bf16.mxu0 0
        %1753 = vmatpush1.bf16.msra.mxu0 0
        %1754 = vmatprep.subr.bf16.mxu0 0
        %1755 = vmatpush1.bf16.msra.mxu0 0
        %1756 = vmatprep.subr.bf16.mxu0 0
        %1757 = vmatpush1.bf16.msra.mxu0 0
        %1758 = vmatprep.subr.bf16.mxu0 0
        %1759 = vmatpush1.bf16.msra.mxu0 0
        %1760 = vmatprep.subr.bf16.mxu0 0
        %1761 = vmatpush1.bf16.msra.mxu0 0
        %1762 = vmatprep.mubr.bf16.mxu0 0
        %1763 = vmatmul.mubr.bf16.gmra.mrb[0].mxu0 %v1728
        %v1764 = vpop.f32.mrb[0].mxu0
        %v1765 = vadd.f32 0.0, %v1764
        %v1766 = vpop.f32.mrb[0].mxu0
        %v1767 = vpop.f32.mrb[0].mxu0
        %v1768 = vadd.f32 0.0, %v1767
        %v1769 = vpop.f32.mrb[0].mxu0
        %1770 = vdwg.mxu0
        %v1771 = vpack.c.bf16 %v1768, %v1765
        %s1772 = scalar_lea.vmem %s4, 40
        %v1773 = vld [vmem:[%s1772] sm:$0xf]
        %v1774 = vld [vmem:[%s1772 + $0x4] sm:$0xf]
        %v1777 = vunpack.c.l.b16 %v1773
        %v1778 = vunpack.c.l.b16 %v1774
        %v1779 = vpack.c.b16 %v1778, %v1777
        %v1782 = vsel %vm391, %v1771, 0
        %1784 = vmatprep.subr.bf16.mxu0 0
        %1785 = vmatpush1.bf16.msra.mxu0 %v1779
        %1786 = vmatprep.subr.bf16.mxu0 0
        %1787 = vmatpush1.bf16.msra.mxu0 0
        %1788 = vmatprep.subr.bf16.mxu0 0
        %1789 = vmatpush1.bf16.msra.mxu0 0
        %1790 = vmatprep.subr.bf16.mxu0 0
        %1791 = vmatpush1.bf16.msra.mxu0 0
        %1792 = vmatprep.subr.bf16.mxu0 0
        %1793 = vmatpush1.bf16.msra.mxu0 0
        %1794 = vmatprep.subr.bf16.mxu0 0
        %1795 = vmatpush1.bf16.msra.mxu0 0
        %1796 = vmatprep.subr.bf16.mxu0 0
        %1797 = vmatpush1.bf16.msra.mxu0 0
        %1798 = vmatprep.subr.bf16.mxu0 0
        %1799 = vmatpush1.bf16.msra.mxu0 0
        %1800 = vmatprep.subr.bf16.mxu0 0
        %1801 = vmatpush1.bf16.msra.mxu0 0
        %1802 = vmatprep.subr.bf16.mxu0 0
        %1803 = vmatpush1.bf16.msra.mxu0 0
        %1804 = vmatprep.subr.bf16.mxu0 0
        %1805 = vmatpush1.bf16.msra.mxu0 0
        %1806 = vmatprep.subr.bf16.mxu0 0
        %1807 = vmatpush1.bf16.msra.mxu0 0
        %1808 = vmatprep.subr.bf16.mxu0 0
        %1809 = vmatpush1.bf16.msra.mxu0 0
        %1810 = vmatprep.subr.bf16.mxu0 0
        %1811 = vmatpush1.bf16.msra.mxu0 0
        %1812 = vmatprep.subr.bf16.mxu0 0
        %1813 = vmatpush1.bf16.msra.mxu0 0
        %1814 = vmatprep.subr.bf16.mxu0 0
        %1815 = vmatpush1.bf16.msra.mxu0 0
        %1816 = vmatprep.mubr.bf16.mxu0 0
        %1817 = vmatmul.mubr.bf16.gmra.mrb[0].mxu0 %v1782
        %v1818 = vpop.f32.mrb[0].mxu0
        %v1819 = vadd.f32 0.0, %v1818
        %v1820 = vpop.f32.mrb[0].mxu0
        %v1821 = vpop.f32.mrb[0].mxu0
        %v1822 = vadd.f32 0.0, %v1821
        %v1823 = vpop.f32.mrb[0].mxu0
        %1824 = vdwg.mxu0
        %v1825 = vsel %vm489, %v1819, 0.0
        %v1826 = vsel %vm489, %v1822, 0.0
        %v1827 = vadd.f32 %v1825, %v1826
        %v1828 = vrot.slane %v1827, 4
        %v1829 = vadd.f32 %v1827, %v1828
        %v1830 = vrot.slane %v1829, 2
        %v1831 = vadd.f32 %v1829, %v1830
        %v1832 = vrot.slane %v1831, 1
        %v1833 = vadd.f32 %v1831, %v1832
        %v1834 = vmul.f32 %v1833, %v499
        %v1835 = vmul.f32 %v1819, %v1819
        %v1836 = vmul.f32 %v1822, %v1822
        %v1837 = vsel %vm489, %v1835, 0.0
        %v1838 = vsel %vm489, %v1836, 0.0
        %v1839 = vadd.f32 %v1837, %v1838
        %v1840 = vrot.slane %v1839, 4
        %v1841 = vadd.f32 %v1839, %v1840
        %v1842 = vrot.slane %v1841, 2
        %v1843 = vadd.f32 %v1841, %v1842
        %v1844 = vrot.slane %v1843, 1
        %v1845 = vadd.f32 %v1843, %v1844
        %v1846 = vmul.f32 %v1845, %v499
        %v1847 = vmul.f32 %v1834, %v1834
        %v1848 = vsub.f32 %v1846, %v1847
        %v1849 = vmax.f32 %v1848, 0.0
        %v1850 = vadd.f32 %v1849, 1e-05
        %v1851 = vrsqrt.pop %v1850
        %v1852 = vmul.f32 %v1717, %v1851
        %v1853 = vmul.f32 %v1834, %v1852
        %v1855 = vrot.slane %v1853, 7
        %v1857 = vsub.f32 %v1717, %v1855
        %v1858 = vlaneseq
        %v1859 = vshrl.u32 %v1858, 7
        %v1860 = vsub.s32 0, %v1859
        %v1861 = vrot.slane %v1852, %v1860
        %v1862 = vmul.f32 %v1819, %v1861
        %v1863 = vmul.f32 %v1822, %v1861
        %v1864 = vlaneseq
        %v1865 = vshrl.u32 %v1864, 7
        %v1866 = vsub.s32 1, %v1865
        %v1867 = vrot.slane %v1857, %v1866
        %v1868 = vadd.f32 %v1862, %v1867
        %v1869 = vadd.f32 %v1863, %v1867
        %v1870 = vmax.f32 %v1868, 0.0
        %v1871 = vmax.f32 %v1869, 0.0
        %v1872 = vpack.c.bf16 %v1871, %v1870
        %s1873 = scalar_lea.vmem %s5, 80
        %v1874 = vld [vmem:[%s1873] sm:$0xf]
        %v1875 = vld [vmem:[%s1873 + $0x4] sm:$0xf]
        %v1876 = vld [vmem:[%s1873 + $0x8] sm:$0xf]
        %v1877 = vld [vmem:[%s1873 + $0xc] sm:$0xf]
        %v1882 = vunpack.c.l.b16 %v1874
        %v1883 = vunpack.c.l.b16 %v1875
        %v1884 = vunpack.c.l.b16 %v1876
        %v1885 = vunpack.c.l.b16 %v1877
        %v1886 = vpack.c.b16 %v1883, %v1882
        %v1887 = vpack.c.b16 %v1885, %v1884
        %v1891 = vsel %vm489, %v1872, 0
        %1893 = vmatprep.subr.bf16.mxu0 0
        %1894 = vmatpush1.bf16.msra.mxu0 %v1886
        %1895 = vmatprep.subr.bf16.mxu0 0
        %1896 = vmatpush1.bf16.msra.mxu0 %v1887
        %1897 = vmatprep.subr.bf16.mxu0 0
        %1898 = vmatpush1.bf16.msra.mxu0 0
        %1899 = vmatprep.subr.bf16.mxu0 0
        %1900 = vmatpush1.bf16.msra.mxu0 0
        %1901 = vmatprep.subr.bf16.mxu0 0
        %1902 = vmatpush1.bf16.msra.mxu0 0
        %1903 = vmatprep.subr.bf16.mxu0 0
        %1904 = vmatpush1.bf16.msra.mxu0 0
        %1905 = vmatprep.subr.bf16.mxu0 0
        %1906 = vmatpush1.bf16.msra.mxu0 0
        %1907 = vmatprep.subr.bf16.mxu0 0
        %1908 = vmatpush1.bf16.msra.mxu0 0
        %1909 = vmatprep.subr.bf16.mxu0 0
        %1910 = vmatpush1.bf16.msra.mxu0 0
        %1911 = vmatprep.subr.bf16.mxu0 0
        %1912 = vmatpush1.bf16.msra.mxu0 0
        %1913 = vmatprep.subr.bf16.mxu0 0
        %1914 = vmatpush1.bf16.msra.mxu0 0
        %1915 = vmatprep.subr.bf16.mxu0 0
        %1916 = vmatpush1.bf16.msra.mxu0 0
        %1917 = vmatprep.subr.bf16.mxu0 0
        %1918 = vmatpush1.bf16.msra.mxu0 0
        %1919 = vmatprep.subr.bf16.mxu0 0
        %1920 = vmatpush1.bf16.msra.mxu0 0
        %1921 = vmatprep.subr.bf16.mxu0 0
        %1922 = vmatpush1.bf16.msra.mxu0 0
        %1923 = vmatprep.subr.bf16.mxu0 0
        %1924 = vmatpush1.bf16.msra.mxu0 0
        %1925 = vmatprep.mubr.bf16.mxu0 0
        %1926 = vmatmul.mubr.bf16.gmra.mrb[0].mxu0 %v1891
        %v1927 = vpop.f32.mrb[0].mxu0
        %v1928 = vadd.f32 0.0, %v1927
        %v1929 = vpop.f32.mrb[0].mxu0
        %v1930 = vpop.f32.mrb[0].mxu0
        %v1931 = vadd.f32 0.0, %v1930
        %v1932 = vpop.f32.mrb[0].mxu0
        %1933 = vdwg.mxu0
        %v1934 = vsel %vm391, %v1928, 0.0
        %v1935 = vsel %vm391, %v1931, 0.0
        %v1936 = vadd.f32 %v1934, %v1935
        %v1937 = vrot.slane %v1936, 4
        %v1938 = vadd.f32 %v1936, %v1937
        %v1939 = vrot.slane %v1938, 2
        %v1940 = vadd.f32 %v1938, %v1939
        %v1941 = vrot.slane %v1940, 1
        %v1942 = vadd.f32 %v1940, %v1941
        %v1943 = vmul.f32 %v1942, %v499
        %v1944 = vmul.f32 %v1928, %v1928
        %v1945 = vmul.f32 %v1931, %v1931
        %v1946 = vsel %vm391, %v1944, 0.0
        %v1947 = vsel %vm391, %v1945, 0.0
        %v1948 = vadd.f32 %v1946, %v1947
        %v1949 = vrot.slane %v1948, 4
        %v1950 = vadd.f32 %v1948, %v1949
        %v1951 = vrot.slane %v1950, 2
        %v1952 = vadd.f32 %v1950, %v1951
        %v1953 = vrot.slane %v1952, 1
        %v1954 = vadd.f32 %v1952, %v1953
        %v1955 = vmul.f32 %v1954, %v499
        %v1956 = vmul.f32 %v1943, %v1943
        %v1957 = vsub.f32 %v1955, %v1956
        %v1958 = vmax.f32 %v1957, 0.0
        %v1959 = vadd.f32 %v1958, 1e-05
        %v1960 = vrsqrt.pop %v1959
        %v1961 = vmul.f32 %v1717, %v1960
        %v1962 = vmul.f32 %v1943, %v1961
        %v1964 = vrot.slane %v1962, 7
        %v1966 = vsub.f32 %v1717, %v1964
        %v1967 = vlaneseq
        %v1968 = vshrl.u32 %v1967, 7
        %v1969 = vsub.s32 2, %v1968
        %v1970 = vrot.slane %v1961, %v1969
        %v1971 = vmul.f32 %v1928, %v1970
        %v1972 = vmul.f32 %v1931, %v1970
        %v1973 = vlaneseq
        %v1974 = vshrl.u32 %v1973, 7
        %v1975 = vsub.s32 3, %v1974
        %v1976 = vrot.slane %v1966, %v1975
        %v1977 = vadd.f32 %v1971, %v1976
        %v1978 = vadd.f32 %v1972, %v1976
        %v1979 = vmul.f32 %v1977, %v366
        %v1980 = vmul.f32 %v1978, %v367
        %v1981 = vmax.f32 %v1979, 0.0
        %v1982 = vmax.f32 %v1980, 0.0
        %s1983 = scalar_lea.vmem %s6, 24
        %v1984 = vld [vmem:[%s1983] sm:$0xf]
        %s1985 = sld [smem:[#allocation2 + $0x6]]
        %s1986 = sadd.f32 %s1985, 1.0
        %v1987 = vstv %s1986
        %v1988 = vmul.f32 %v1987, %v379
        %v1989 = vmul.f32 %v1987, %v380
        %v1990 = vadd.f32 %v352, %v1988
        %v1991 = vadd.f32 %v353, %v1989
        %v1992 = vpack.c.bf16 %v1991, %v1990
        %v1993 = vpack.c.bf16 %v1982, %v1981
        %v1995 = vsel %vm391, %v1992, 0
        %1997 = vmatprep.subr.bf16.mxu0 0
        %1998 = vmatpush1.bf16.msra.mxu0 %v1993
        %1999 = vmatprep.subr.bf16.mxu0 0
        %2000 = vmatpush1.bf16.msra.mxu0 0
        %2001 = vmatprep.subr.bf16.mxu0 0
        %2002 = vmatpush1.bf16.msra.mxu0 0
        %2003 = vmatprep.subr.bf16.mxu0 0
        %2004 = vmatpush1.bf16.msra.mxu0 0
        %2005 = vmatprep.subr.bf16.mxu0 0
        %2006 = vmatpush1.bf16.msra.mxu0 0
        %2007 = vmatprep.subr.bf16.mxu0 0
        %2008 = vmatpush1.bf16.msra.mxu0 0
        %2009 = vmatprep.subr.bf16.mxu0 0
        %2010 = vmatpush1.bf16.msra.mxu0 0
        %2011 = vmatprep.subr.bf16.mxu0 0
        %2012 = vmatpush1.bf16.msra.mxu0 0
        %2013 = vmatprep.subr.bf16.mxu0 0
        %2014 = vmatpush1.bf16.msra.mxu0 0
        %2015 = vmatprep.subr.bf16.mxu0 0
        %2016 = vmatpush1.bf16.msra.mxu0 0
        %2017 = vmatprep.subr.bf16.mxu0 0
        %2018 = vmatpush1.bf16.msra.mxu0 0
        %2019 = vmatprep.subr.bf16.mxu0 0
        %2020 = vmatpush1.bf16.msra.mxu0 0
        %2021 = vmatprep.subr.bf16.mxu0 0
        %2022 = vmatpush1.bf16.msra.mxu0 0
        %2023 = vmatprep.subr.bf16.mxu0 0
        %2024 = vmatpush1.bf16.msra.mxu0 0
        %2025 = vmatprep.subr.bf16.mxu0 0
        %2026 = vmatpush1.bf16.msra.mxu0 0
        %2027 = vmatprep.subr.bf16.mxu0 0
        %2028 = vmatpush1.bf16.msra.mxu0 0
        %2029 = vmatprep.mubr.bf16.mxu0 0
        %2030 = vmatmul.mubr.bf16.gmra.mrb[0].mxu0 %v1995
        %v2031 = vpop.f32.mrb[0].mxu0
        %v2032 = vadd.f32 0.0, %v2031
        %v2033 = vpop.f32.mrb[0].mxu0
        %v2034 = vpop.f32.mrb[0].mxu0
        %v2035 = vadd.f32 0.0, %v2034
        %v2036 = vpop.f32.mrb[0].mxu0
        %2037 = vdwg.mxu0
        %v2038 = vpack.c.bf16 %v2035, %v2032
        %s2039 = scalar_lea.vmem %s4, 48
        %v2040 = vld [vmem:[%s2039] sm:$0xf]
        %v2041 = vld [vmem:[%s2039 + $0x4] sm:$0xf]
        %v2044 = vunpack.c.l.b16 %v2040
        %v2045 = vunpack.c.l.b16 %v2041
        %v2046 = vpack.c.b16 %v2045, %v2044
        %v2049 = vsel %vm391, %v2038, 0
        %2051 = vmatprep.subr.bf16.mxu0 0
        %2052 = vmatpush1.bf16.msra.mxu0 %v2046
        %2053 = vmatprep.subr.bf16.mxu0 0
        %2054 = vmatpush1.bf16.msra.mxu0 0
        %2055 = vmatprep.subr.bf16.mxu0 0
        %2056 = vmatpush1.bf16.msra.mxu0 0
        %2057 = vmatprep.subr.bf16.mxu0 0
        %2058 = vmatpush1.bf16.msra.mxu0 0
        %2059 = vmatprep.subr.bf16.mxu0 0
        %2060 = vmatpush1.bf16.msra.mxu0 0
        %2061 = vmatprep.subr.bf16.mxu0 0
        %2062 = vmatpush1.bf16.msra.mxu0 0
        %2063 = vmatprep.subr.bf16.mxu0 0
        %2064 = vmatpush1.bf16.msra.mxu0 0
        %2065 = vmatprep.subr.bf16.mxu0 0
        %2066 = vmatpush1.bf16.msra.mxu0 0
        %2067 = vmatprep.subr.bf16.mxu0 0
        %2068 = vmatpush1.bf16.msra.mxu0 0
        %2069 = vmatprep.subr.bf16.mxu0 0
        %2070 = vmatpush1.bf16.msra.mxu0 0
        %2071 = vmatprep.subr.bf16.mxu0 0
        %2072 = vmatpush1.bf16.msra.mxu0 0
        %2073 = vmatprep.subr.bf16.mxu0 0
        %2074 = vmatpush1.bf16.msra.mxu0 0
        %2075 = vmatprep.subr.bf16.mxu0 0
        %2076 = vmatpush1.bf16.msra.mxu0 0
        %2077 = vmatprep.subr.bf16.mxu0 0
        %2078 = vmatpush1.bf16.msra.mxu0 0
        %2079 = vmatprep.subr.bf16.mxu0 0
        %2080 = vmatpush1.bf16.msra.mxu0 0
        %2081 = vmatprep.subr.bf16.mxu0 0
        %2082 = vmatpush1.bf16.msra.mxu0 0
        %2083 = vmatprep.mubr.bf16.mxu0 0
        %2084 = vmatmul.mubr.bf16.gmra.mrb[0].mxu0 %v2049
        %v2085 = vpop.f32.mrb[0].mxu0
        %v2086 = vadd.f32 0.0, %v2085
        %v2087 = vpop.f32.mrb[0].mxu0
        %v2088 = vpop.f32.mrb[0].mxu0
        %v2089 = vadd.f32 0.0, %v2088
        %v2090 = vpop.f32.mrb[0].mxu0
        %2091 = vdwg.mxu0
        %v2092 = vsel %vm489, %v2086, 0.0
        %v2093 = vsel %vm489, %v2089, 0.0
        %v2094 = vadd.f32 %v2092, %v2093
        %v2095 = vrot.slane %v2094, 4
        %v2096 = vadd.f32 %v2094, %v2095
        %v2097 = vrot.slane %v2096, 2
        %v2098 = vadd.f32 %v2096, %v2097
        %v2099 = vrot.slane %v2098, 1
        %v2100 = vadd.f32 %v2098, %v2099
        %v2101 = vmul.f32 %v2100, %v499
        %v2102 = vmul.f32 %v2086, %v2086
        %v2103 = vmul.f32 %v2089, %v2089
        %v2104 = vsel %vm489, %v2102, 0.0
        %v2105 = vsel %vm489, %v2103, 0.0
        %v2106 = vadd.f32 %v2104, %v2105
        %v2107 = vrot.slane %v2106, 4
        %v2108 = vadd.f32 %v2106, %v2107
        %v2109 = vrot.slane %v2108, 2
        %v2110 = vadd.f32 %v2108, %v2109
        %v2111 = vrot.slane %v2110, 1
        %v2112 = vadd.f32 %v2110, %v2111
        %v2113 = vmul.f32 %v2112, %v499
        %v2114 = vmul.f32 %v2101, %v2101
        %v2115 = vsub.f32 %v2113, %v2114
        %v2116 = vmax.f32 %v2115, 0.0
        %v2117 = vadd.f32 %v2116, 1e-05
        %v2118 = vrsqrt.pop %v2117
        %v2119 = vmul.f32 %v1984, %v2118
        %v2120 = vmul.f32 %v2101, %v2119
        %v2122 = vrot.slane %v2120, 7
        %v2124 = vsub.f32 %v1984, %v2122
        %v2125 = vlaneseq
        %v2126 = vshrl.u32 %v2125, 7
        %v2127 = vsub.s32 0, %v2126
        %v2128 = vrot.slane %v2119, %v2127
        %v2129 = vmul.f32 %v2086, %v2128
        %v2130 = vmul.f32 %v2089, %v2128
        %v2131 = vlaneseq
        %v2132 = vshrl.u32 %v2131, 7
        %v2133 = vsub.s32 1, %v2132
        %v2134 = vrot.slane %v2124, %v2133
        %v2135 = vadd.f32 %v2129, %v2134
        %v2136 = vadd.f32 %v2130, %v2134
        %v2137 = vmax.f32 %v2135, 0.0
        %v2138 = vmax.f32 %v2136, 0.0
        %v2139 = vpack.c.bf16 %v2138, %v2137
        %s2140 = scalar_lea.vmem %s5, 96
        %v2141 = vld [vmem:[%s2140] sm:$0xf]
        %v2142 = vld [vmem:[%s2140 + $0x4] sm:$0xf]
        %v2143 = vld [vmem:[%s2140 + $0x8] sm:$0xf]
        %v2144 = vld [vmem:[%s2140 + $0xc] sm:$0xf]
        %v2149 = vunpack.c.l.b16 %v2141
        %v2150 = vunpack.c.l.b16 %v2142
        %v2151 = vunpack.c.l.b16 %v2143
        %v2152 = vunpack.c.l.b16 %v2144
        %v2153 = vpack.c.b16 %v2150, %v2149
        %v2154 = vpack.c.b16 %v2152, %v2151
        %v2158 = vsel %vm489, %v2139, 0
        %2160 = vmatprep.subr.bf16.mxu0 0
        %2161 = vmatpush1.bf16.msra.mxu0 %v2153
        %2162 = vmatprep.subr.bf16.mxu0 0
        %2163 = vmatpush1.bf16.msra.mxu0 %v2154
        %2164 = vmatprep.subr.bf16.mxu0 0
        %2165 = vmatpush1.bf16.msra.mxu0 0
        %2166 = vmatprep.subr.bf16.mxu0 0
        %2167 = vmatpush1.bf16.msra.mxu0 0
        %2168 = vmatprep.subr.bf16.mxu0 0
        %2169 = vmatpush1.bf16.msra.mxu0 0
        %2170 = vmatprep.subr.bf16.mxu0 0
        %2171 = vmatpush1.bf16.msra.mxu0 0
        %2172 = vmatprep.subr.bf16.mxu0 0
        %2173 = vmatpush1.bf16.msra.mxu0 0
        %2174 = vmatprep.subr.bf16.mxu0 0
        %2175 = vmatpush1.bf16.msra.mxu0 0
        %2176 = vmatprep.subr.bf16.mxu0 0
        %2177 = vmatpush1.bf16.msra.mxu0 0
        %2178 = vmatprep.subr.bf16.mxu0 0
        %2179 = vmatpush1.bf16.msra.mxu0 0
        %2180 = vmatprep.subr.bf16.mxu0 0
        %2181 = vmatpush1.bf16.msra.mxu0 0
        %2182 = vmatprep.subr.bf16.mxu0 0
        %2183 = vmatpush1.bf16.msra.mxu0 0
        %2184 = vmatprep.subr.bf16.mxu0 0
        %2185 = vmatpush1.bf16.msra.mxu0 0
        %2186 = vmatprep.subr.bf16.mxu0 0
        %2187 = vmatpush1.bf16.msra.mxu0 0
        %2188 = vmatprep.subr.bf16.mxu0 0
        %2189 = vmatpush1.bf16.msra.mxu0 0
        %2190 = vmatprep.subr.bf16.mxu0 0
        %2191 = vmatpush1.bf16.msra.mxu0 0
        %2192 = vmatprep.mubr.bf16.mxu0 0
        %2193 = vmatmul.mubr.bf16.gmra.mrb[0].mxu0 %v2158
        %v2194 = vpop.f32.mrb[0].mxu0
        %v2195 = vadd.f32 0.0, %v2194
        %v2196 = vpop.f32.mrb[0].mxu0
        %v2197 = vpop.f32.mrb[0].mxu0
        %v2198 = vadd.f32 0.0, %v2197
        %v2199 = vpop.f32.mrb[0].mxu0
        %2200 = vdwg.mxu0
        %v2201 = vmul.f32 %v2195, %v368
        %v2202 = vmul.f32 %v2198, %v369
        %v2203 = vmax.f32 %v2201, 0.0
        %v2204 = vmax.f32 %v2202, 0.0
        %v2205 = vsel %vm391, %v2203, 0.0
        %v2206 = vsel %vm391, %v2204, 0.0
        %v2207 = vadd.f32 %v2205, %v2206
        %v2208 = vrot.slane %v2207, 4
        %v2209 = vadd.f32 %v2207, %v2208
        %v2210 = vrot.slane %v2209, 2
        %v2211 = vadd.f32 %v2209, %v2210
        %v2212 = vrot.slane %v2211, 1
        %v2213 = vadd.f32 %v2211, %v2212
        %v2214 = vmul.f32 %v2213, %v499
        %2215 = vst.msk [vmem:[%s340] sm:$0xff] %vm391, %v2214
        %s2216 = sand.u32 %s195, 1
        %s2217 = scalar_lea.sflag [#allocation4], %s2216
        %s2218 = sand.u32 %s195, 1
        %s2219 = smul.addr %s2218, 8
        %s2220 = scalar_lea.vmem [#allocation7], %s2219
        // Predicated region
        $region57: #{tpu_custom_call.1} parent=47 // pred_check
          %p2221 = pneg %p205
        $region58: #{tpu_custom_call.1} parent=47 // pred_check_branch
          %2223 = sbr.rel (%p2221) target = $region60
        $region59: #{tpu_custom_call.1} parent=47 // pred_region
          %s2225 = ssub.s32 128, 128
          %2226 = vsyncadd %s2217, %s2225
          %s2227 = smul.addr %s25, 128
          %s2228 = scalar_lea.hbm %s7, %s2227
          %s2230 = sshll.u32 %s2220, 4
          %s2231 = int_to_ptr.vmem [resolvable:$true] %s2230
          %2233 = dma.vmem_to_hbm [thread:$0]  %s2231, 128, %s2228, %s2217
        $region60: #{tpu_custom_call.1} parent=47 // pred_fallthru
          _
      $region48: #{tpu_custom_call.1} parent=5 // pred_fallthru
        _
      %p2234 = scmp.le.s32.totalorder 2, %s20
      // Predicated region
      $region61: #{tpu_custom_call.1} parent=5 // pred_check
        %p2235 = pneg %p2234
      $region62: #{tpu_custom_call.1} parent=5 // pred_check_branch
        %2237 = sbr.rel (%p2235) target = $region64
      $region63: #{tpu_custom_call.1} parent=5 // pred_region
        %s2238 = ssub.s32 %s20, 2
        // Predicated region
        $region65: #{tpu_custom_call.1} parent=63 // pred_check
          %p2239 = pneg %p211
        $region66: #{tpu_custom_call.1} parent=63 // pred_check_branch
          %2241 = sbr.rel (%p2239) target = $region68
        $region67: #{tpu_custom_call.1} parent=63 // pred_region
          %s2242 = sand.u32 %s196, 1
          %s2243 = scalar_lea.sflag [#allocation4], %s2242
          %s2244 = sand.u32 %s196, 1
          %s2245 = smul.addr %s2244, 8
          %s2246 = scalar_lea.vmem [#allocation7], %s2245
          %2247 = dma.done %s2243, 128
        $region68: #{tpu_custom_call.1} parent=63 // pred_fallthru
          _
      $region64: #{tpu_custom_call.1} parent=5 // pred_fallthru
        _
    $region6: #{tpu_custom_call.1} parent=1 // loop_footer
      %s24 = sadd.s32 1, %s20
    $region7: #{tpu_custom_call.1} parent=1 // loop_footer_branch
      %19 = sbr.rel target = $region3
    $region8: #{tpu_custom_call.1} parent=1 // loop_exit
      _
    %2248 = vsyncpa [#allocation3], 1
    %s2249 = scalar_lea.sflag [#allocation3], 1
    %2250 = vsyncpa %s2249, 1
    %2251 = vsyncpa [#allocation4], 1
    %s2252 = scalar_lea.sflag [#allocation4], 1
    %2253 = vsyncpa %s2252, 1
    %2254 = vsyncpa [#allocation5], 1
    %s2255 = scalar_lea.sflag [#allocation5], 1
    %2256 = vsyncpa %s2255, 1

</llo_original>
